<compile_context>
chip_gen: v6e
topology: v6e:2x2x1
jax: 0.10.0
libtpu: 0.0.40
codegen_flags: <defaults>
</compile_context>

<pallas_src>
import math
import jax
import jax.numpy as jnp
from jax.experimental import pallas as pl
from jax.experimental.pallas import tpu as pltpu

# ---- small, module-consistent shapes ----------------------------------------
B, L, H, NH, FF, C = 2, 8, 32, 2, 64, 3   # batch, seq, d_model, heads, ffn, labels
HD = H // NH
BL = B * L
NUM_LAYERS = 2
VOCAB = 64
PAD_ID, EOS_ID, BOS_ID = 1, 2, 0
LN_EPS = 1e-5
NEG_INF = -1e9
LANES = 128
C_PAD = LANES          # lane-dense padded logits width; real logits are [:, :C]
OUT_ROWS = 8           # full (8, 128) output tile; real logits are [:B, :]
POOL_ROWS = 3 * OUT_ROWS


# ---- static parameter-slab layout (row offsets, all 8-aligned) ---------------
def _build_param_layout():
    layout = {}
    off = 0

    def add(name, rows, cols):
        nonlocal off
        layout[name] = (off, rows, cols)
        off += ((rows + 7) // 8) * 8          # keep every entry 8-row aligned

    add("ln_emb_w", 1, H); add("ln_emb_b", 1, H)
    for l in range(NUM_LAYERS):
        for hh in range(NH):
            add(f"qw_{l}_{hh}", H, HD); add(f"kw_{l}_{hh}", H, HD); add(f"vw_{l}_{hh}", H, HD)
            add(f"qb_{l}_{hh}", 1, HD); add(f"kb_{l}_{hh}", 1, HD); add(f"vb_{l}_{hh}", 1, HD)
            add(f"ow_{l}_{hh}", HD, H)
        add(f"ob_{l}", 1, H)
        add(f"ln1w_{l}", 1, H); add(f"ln1b_{l}", 1, H)
        add(f"f1w_{l}", H, FF); add(f"f1b_{l}", 1, FF)
        add(f"f2w_{l}", FF, H); add(f"f2b_{l}", 1, H)
        add(f"ln2w_{l}", 1, H); add(f"ln2b_{l}", 1, H)
    add("lin_w_txt", H, H); add("lin_w_topic", H, H)   # Linear(2H->H) split into its two H-row halves
    add("lin_b", 1, H)
    add("out_w", H, C_PAD); add("out_b", 1, C_PAD)
    return layout, off


PARAM_LAYOUT, PARAM_ROWS = _build_param_layout()       # PARAM_ROWS == 976

# ---- dynamic (per-call) slab layout ------------------------------------------
DYN_X_OFF = 0                  # (BL, H)   token+pos embeddings, batch flattened on sublanes
DYN_BIAS_OFF = BL              # (BL, BL)  block-diag + key-padding additive bias
DYN_POOL_OFF = 2 * BL          # (POOL_ROWS, BL) pre-scaled pooling matrix
DYN_ROWS = 2 * BL + POOL_ROWS  # 56 rows


# ---- in-kernel helpers -------------------------------------------------------
def _gelu(x):
    # TODO(synk): tanh-approximate GELU (nn.GELU default is exact erf; ~1e-3 rel diff)
    return 0.5 * x * (1.0 + jnp.tanh(0.7978845608028654 * (x + 0.044715 * x * x * x)))


def _layernorm(x, w, b):
    m = jnp.mean(x, axis=-1, keepdims=True)
    v = jnp.mean((x - m) ** 2, axis=-1, keepdims=True)
    return (x - m) * jax.lax.rsqrt(v + LN_EPS) * w + b


# ---- the single fused kernel -------------------------------------------------
def fused_forward_kernel(flag_ref, dyn_ref, par_ref, o_ref):
    def P(name):  # static slice into the packed parameter slab (free)
        off, rows, cols = PARAM_LAYOUT[name]
        return par_ref[off:off + rows, :cols]

    x = dyn_ref[DYN_X_OFF:DYN_X_OFF + BL, :H]                       # (BL, H)
    bias = dyn_ref[DYN_BIAS_OFF:DYN_BIAS_OFF + BL, :BL]             # (BL, BL)
    pools = dyn_ref[DYN_POOL_OFF:DYN_POOL_OFF + POOL_ROWS, :BL]     # (24, BL), pre-scaled

    h = _layernorm(x, P("ln_emb_w"), P("ln_emb_b"))

    for l in range(NUM_LAYERS):                  # static unroll (NUM_LAYERS == 2)
        attn = jnp.zeros((BL, H), jnp.float32)
        for hh in range(NH):                     # static head loop, no lane slicing/concat
            q = jnp.dot(h, P(f"qw_{l}_{hh}"), preferred_element_type=jnp.float32) + P(f"qb_{l}_{hh}")
            k = jnp.dot(h, P(f"kw_{l}_{hh}"), preferred_element_type=jnp.float32) + P(f"kb_{l}_{hh}")
            v = jnp.dot(h, P(f"vw_{l}_{hh}"), preferred_element_type=jnp.float32) + P(f"vb_{l}_{hh}")
            # scores: q @ k^T via dot_general (1/sqrt(HD) already folded into qw/qb)
            s = jax.lax.dot_general(q, k, (((1,), (1,)), ((), ())),
                                    preferred_element_type=jnp.float32) + bias
            s = s - jnp.max(s, axis=-1, keepdims=True)
            p = jnp.exp(s)
            p = p / jnp.sum(p, axis=-1, keepdims=True)              # exact softmax denom
            ctx = jnp.dot(p, v, preferred_element_type=jnp.float32)  # (BL, HD)
            attn = attn + jnp.dot(ctx, P(f"ow_{l}_{hh}"), preferred_element_type=jnp.float32)
        attn = attn + P(f"ob_{l}")
        h = _layernorm(h + attn, P(f"ln1w_{l}"), P(f"ln1b_{l}"))

        f = _gelu(jnp.dot(h, P(f"f1w_{l}"), preferred_element_type=jnp.float32) + P(f"f1b_{l}"))
        f = jnp.dot(f, P(f"f2w_{l}"), preferred_element_type=jnp.float32) + P(f"f2b_{l}")
        h = _layernorm(h + f, P(f"ln2w_{l}"), P(f"ln2b_{l}"))

    # ---- classifier head ------------------------------------------------------
    # pools rows are already scaled by 1/denominator, so this matmul yields means.
    # Row groups (8-aligned): [0:8) txt, [8:16) topic, [16:24) fallback; only the
    # first B rows of each group are non-zero, the rest are harmless padding.
    means = jnp.dot(pools, h, preferred_element_type=jnp.float32)   # (24, H)
    txt_mean = means[0:OUT_ROWS]
    topic_mean = means[OUT_ROWS:2 * OUT_ROWS]
    fb_mean = means[2 * OUT_ROWS:3 * OUT_ROWS]

    out_w = P("out_w")
    out_b = P("out_b")

    @pl.when(flag_ref[0] != 0)
    def _():
        # 3-eos-per-batch path: GELU(Linear(cat(txt_mean, topic_mean))) -> out proj
        lin = _gelu(jnp.dot(txt_mean, P("lin_w_txt"), preferred_element_type=jnp.float32)
                    + jnp.dot(topic_mean, P("lin_w_topic"), preferred_element_type=jnp.float32)
                    + P("lin_b"))
        o_ref[...] = jnp.dot(lin, out_w, preferred_element_type=jnp.float32) + out_b

    @pl.when(flag_ref[0] == 0)
    def _():
        # fallback path: sum over all positions / attn-mask count, out proj only
        o_ref[...] = jnp.dot(fb_mean, out_w, preferred_element_type=jnp.float32) + out_b


# ---- pallas_call wrapper -------------------------------------------------------
def run_fused(flag, dyn_slab, param_slab):
    vmem = pltpu.MemorySpace.VMEM
    smem = pltpu.MemorySpace.SMEM
    return pl.pallas_call(
        fused_forward_kernel,
        out_shape=jax.ShapeDtypeStruct((OUT_ROWS, C_PAD), jnp.float32),
        in_specs=[pl.BlockSpec(memory_space=smem),    # flag scalar
                  pl.BlockSpec(memory_space=vmem),    # dynamic slab (x | bias | pools)
                  pl.BlockSpec(memory_space=vmem)],   # packed parameter slab
        out_specs=pl.BlockSpec(memory_space=vmem),
    )(flag, dyn_slab, param_slab)


# ---- parameter construction (deterministic, synthetic) -------------------------
def init_params(key):
    def nrm(k, shape, scale=0.02):
        return (scale * jax.random.normal(k, shape)).astype(jnp.float32)

    keys = iter(jax.random.split(key, 128))
    params = {}
    emb = nrm(next(keys), (VOCAB, H))
    params["embed"] = emb.at[PAD_ID].set(0.0)          # nn.Embedding padding_idx
    params["pos"] = nrm(next(keys), (L + 2, H))        # learned pos-emb, offset 2

    entries = {}
    entries["ln_emb_w"] = jnp.ones((1, H), jnp.float32)
    entries["ln_emb_b"] = jnp.zeros((1, H), jnp.float32)
    scale = 1.0 / math.sqrt(HD)
    for l in range(NUM_LAYERS):
        qw = nrm(next(keys), (H, H)); kw = nrm(next(keys), (H, H)); vw = nrm(next(keys), (H, H))
        ow = nrm(next(keys), (H, H))
        qb = jnp.zeros((H,), jnp.float32); kb = jnp.zeros((H,), jnp.float32); vb = jnp.zeros((H,), jnp.float32)
        for hh in range(NH):
            lo, hi = hh * HD, (hh + 1) * HD
            entries[f"qw_{l}_{hh}"] = qw[:, lo:hi] * scale          # 1/sqrt(HD) folded into Q
            entries[f"kw_{l}_{hh}"] = kw[:, lo:hi]
            entries[f"vw_{l}_{hh}"] = vw[:, lo:hi]
            entries[f"qb_{l}_{hh}"] = (qb[lo:hi] * scale).reshape(1, HD)
            entries[f"kb_{l}_{hh}"] = kb[lo:hi].reshape(1, HD)
            entries[f"vb_{l}_{hh}"] = vb[lo:hi].reshape(1, HD)
            entries[f"ow_{l}_{hh}"] = ow[lo:hi, :]                  # (HD, H) per-head out proj
        entries[f"ob_{l}"] = jnp.zeros((1, H), jnp.float32)
        entries[f"ln1w_{l}"] = jnp.ones((1, H), jnp.float32)
        entries[f"ln1b_{l}"] = jnp.zeros((1, H), jnp.float32)
        entries[f"f1w_{l}"] = nrm(next(keys), (H, FF))
        entries[f"f1b_{l}"] = jnp.zeros((1, FF), jnp.float32)
        entries[f"f2w_{l}"] = nrm(next(keys), (FF, H))
        entries[f"f2b_{l}"] = jnp.zeros((1, H), jnp.float32)
        entries[f"ln2w_{l}"] = jnp.ones((1, H), jnp.float32)
        entries[f"ln2b_{l}"] = jnp.zeros((1, H), jnp.float32)

    lin_w = nrm(next(keys), (2 * H, H))                 # Linear(2H -> H), input-major
    entries["lin_w_txt"] = lin_w[:H]
    entries["lin_w_topic"] = lin_w[H:]
    entries["lin_b"] = jnp.zeros((1, H), jnp.float32)
    out_core = nrm(next(keys), (H, C))                  # Linear(H -> num_labels)
    entries["out_w"] = jnp.zeros((H, C_PAD), jnp.float32).at[:, :C].set(out_core)
    entries["out_b"] = jnp.zeros((1, C_PAD), jnp.float32)

    slab = jnp.zeros((PARAM_ROWS, LANES), jnp.float32)
    for name, arr in entries.items():
        off, rows, cols = PARAM_LAYOUT[name]
        assert arr.shape == (rows, cols), (name, arr.shape, (rows, cols))
        slab = slab.at[off:off + rows, :cols].set(arr)
    params["slab"] = slab
    return params


# ---- full forward (mirrors bart_classifier.forward; fully jittable) -------------
def bart_classifier_forward(input_ids, attention_mask, params):
    att_f = attention_mask.astype(jnp.float32)

    # embeddings (gathers kept as plain-JAX glue), flattened to (BL, H)
    emb = params["embed"][input_ids]
    pos = params["pos"][jnp.arange(L) + 2]                          # offset=2 learned pos-emb
    x = (emb + pos[None, :, :]).reshape(BL, H)

    # block-diagonal + key-padding additive attention bias for the flattened batch
    batch_of = jnp.arange(BL) // L
    same_b = (batch_of[:, None] == batch_of[None, :]).astype(jnp.float32)
    key_ok = att_f.reshape(BL)
    bias_full = (1.0 - same_b * key_ok[None, :]) * NEG_INF          # (BL, BL)

    # eos-based text/topic split; flag is the GLOBAL eos count check (like the reference)
    is_eos = (input_ids == EOS_ID)
    flag = (jnp.sum(is_eos) == 3 * B).astype(jnp.int32).reshape(1)

    idx = jnp.arange(L)
    b_eos = jnp.argmax(is_eos, axis=1)                              # first eos per row
    e_eos = L - 1 - jnp.argmax(is_eos[:, ::-1], axis=1)             # last eos per row
    # att[begin:] = 0 ; att[0] = 0
    txt_vec = att_f * (idx[None, :] < b_eos[:, None]) * (idx[None, :] != 0)
    # att2[:begin+2] = 0 ; att2[end] = 0
    topic_vec = att_f * (idx[None, :] >= (b_eos[:, None] + 2)) * (idx[None, :] != e_eos[:, None])
    txt_l = jnp.sum(txt_vec, axis=1, keepdims=True) + 1.0           # reference: txt_l += 1
    topic_l = jnp.sum(topic_vec, axis=1, keepdims=True)
    att_sum = jnp.sum(att_f, axis=1, keepdims=True)                 # fallback denominator

    # pre-scaled block-diagonal pooling matrix over the flattened (BL, H) hidden states
    eyeB = jnp.eye(B, dtype=jnp.float32)

    def pool(m):                                                    # (B, L) -> (B, BL)
        return (eyeB[:, :, None] * m[None, :, :]).reshape(B, BL)

    pools = jnp.zeros((POOL_ROWS, BL), jnp.float32)
    pools = pools.at[0:B].set(pool(txt_vec / txt_l))
    pools = pools.at[OUT_ROWS:OUT_ROWS + B].set(pool(topic_vec / topic_l))
    # fallback matches the reference: sum over ALL positions, divide by attn-mask count
    pools = pools.at[2 * OUT_ROWS:2 * OUT_ROWS + B].set(pool(jnp.ones((B, L), jnp.float32) / att_sum))

    # dynamic slab: one lane-dense VMEM input for all per-call activations
    dyn = jnp.zeros((DYN_ROWS, LANES), jnp.float32)
    dyn = dyn.at[DYN_X_OFF:DYN_X_OFF + BL, :H].set(x)
    dyn = dyn.at[DYN_BIAS_OFF:DYN_BIAS_OFF + BL, :BL].set(bias_full)
    dyn = dyn.at[DYN_POOL_OFF:DYN_POOL_OFF + POOL_ROWS, :BL].set(pools)

    logits_pad = run_fused(flag, dyn, params["slab"])
    return logits_pad[:B, :C]


# ---- demo -----------------------------------------------------------------------
if __name__ == "__main__":
    key = jax.random.PRNGKey(0)
    params = init_params(key)

    # BART pair format with exactly 3 eos tokens per row: <s> A </s> </s> B </s> <pad>...
    input_ids = jnp.array(
        [[BOS_ID, 5, 6, EOS_ID, EOS_ID, 7, EOS_ID, PAD_ID],
         [BOS_ID, 8, EOS_ID, EOS_ID, 9, 10, EOS_ID, PAD_ID]], dtype=jnp.int32)
    attention_mask = jnp.array(
        [[1, 1, 1, 1, 1, 1, 1, 0],
         [1, 1, 1, 1, 1, 1, 1, 0]], dtype=jnp.int32)

    fwd = jax.jit(bart_classifier_forward)
    logits = jax.block_until_ready(fwd(input_ids, attention_mask, params))
    assert logits.shape == (B, C) and logits.dtype == jnp.float32
    assert bool(jnp.all(jnp.isfinite(logits)))
    print("KERNEL_OK")
</pallas_src>

<mosaic_0001>
module attributes {stable_mosaic.version = 11 : i64} {
  func.func @fused_forward_kernel(%arg0: memref<1xi32, #tpu.memory_space<smem>>, %arg1: memref<56x128xf32, #tpu.memory_space<vmem>>, %arg2: memref<976x128xf32, #tpu.memory_space<vmem>>, %arg3: memref<8x128xf32, #tpu.memory_space<vmem>>) attributes {dimension_semantics = [], scalar_prefetch = 0 : i64, scratch_operands = 0 : i64, tpu.core_type = #tpu.core_type<tc>} {
    %c0 = arith.constant 0 : index
    %c0_0 = arith.constant 0 : index
    %0 = vector.load %arg1[%c0, %c0_0] : memref<56x128xf32, #tpu.memory_space<vmem>>, vector<16x32xf32>
    %c16 = arith.constant 16 : index
    %c0_1 = arith.constant 0 : index
    %1 = vector.load %arg1[%c16, %c0_1] : memref<56x128xf32, #tpu.memory_space<vmem>>, vector<16x16xf32>
    %c32 = arith.constant 32 : index
    %c0_2 = arith.constant 0 : index
    %2 = vector.load %arg1[%c32, %c0_2] : memref<56x128xf32, #tpu.memory_space<vmem>>, vector<24x16xf32>
    %c0_3 = arith.constant 0 : index
    %c0_4 = arith.constant 0 : index
    %3 = vector.load %arg2[%c0_3, %c0_4] : memref<976x128xf32, #tpu.memory_space<vmem>>, vector<1x32xf32>
    %c8 = arith.constant 8 : index
    %c0_5 = arith.constant 0 : index
    %4 = vector.load %arg2[%c8, %c0_5] : memref<976x128xf32, #tpu.memory_space<vmem>>, vector<1x32xf32>
    %cst = arith.constant dense<0.000000e+00> : vector<16xf32>
    %5 = vector.multi_reduction <add>, %0, %cst [1] : vector<16x32xf32> to vector<16xf32>
    %6 = vector.shape_cast %5 : vector<16xf32> to vector<16x1xf32>
    %cst_6 = arith.constant 3.200000e+01 : f32
    %7 = vector.broadcast %cst_6 : f32 to vector<16x1xf32>
    %8 = arith.divf %6, %7 : vector<16x1xf32>
    %9 = vector.broadcast %8 : vector<16x1xf32> to vector<16x32xf32>
    %10 = arith.subf %0, %9 : vector<16x32xf32>
    %11 = arith.mulf %10, %10 : vector<16x32xf32>
    %cst_7 = arith.constant dense<0.000000e+00> : vector<16xf32>
    %12 = vector.multi_reduction <add>, %11, %cst_7 [1] : vector<16x32xf32> to vector<16xf32>
    %13 = vector.shape_cast %12 : vector<16xf32> to vector<16x1xf32>
    %cst_8 = arith.constant 3.200000e+01 : f32
    %14 = vector.broadcast %cst_8 : f32 to vector<16x1xf32>
    %15 = arith.divf %13, %14 : vector<16x1xf32>
    %16 = vector.broadcast %8 : vector<16x1xf32> to vector<16x32xf32>
    %17 = arith.subf %0, %16 : vector<16x32xf32>
    %cst_9 = arith.constant 9.99999974E-6 : f32
    %18 = vector.broadcast %cst_9 : f32 to vector<16x1xf32>
    %19 = arith.addf %15, %18 : vector<16x1xf32>
    %20 = math.rsqrt %19 : vector<16x1xf32>
    %21 = vector.broadcast %20 : vector<16x1xf32> to vector<16x32xf32>
    %22 = arith.mulf %17, %21 : vector<16x32xf32>
    %23 = vector.broadcast %3 : vector<1x32xf32> to vector<16x32xf32>
    %24 = arith.mulf %22, %23 : vector<16x32xf32>
    %25 = vector.broadcast %4 : vector<1x32xf32> to vector<16x32xf32>
    %26 = arith.addf %24, %25 : vector<16x32xf32>
    %cst_10 = arith.constant 0.000000e+00 : f32
    %27 = vector.broadcast %cst_10 : f32 to vector<16x32xf32>
    %c16_11 = arith.constant 16 : index
    %c0_12 = arith.constant 0 : index
    %28 = vector.load %arg2[%c16_11, %c0_12] : memref<976x128xf32, #tpu.memory_space<vmem>>, vector<32x16xf32>
    %cst_13 = arith.constant dense<0.000000e+00> : vector<16x16xf32>
    %29 = tpu.matmul %26, %28, %cst_13 {dimension_numbers = #tpu.dot_dimension_numbers<[1], [0], [0], [1], [0, 0, 1, 1], [], []>} : vector<16x32xf32>, vector<32x16xf32>, vector<16x16xf32> -> vector<16x16xf32>
    %c112 = arith.constant 112 : index
    %c0_14 = arith.constant 0 : index
    %30 = vector.load %arg2[%c112, %c0_14] : memref<976x128xf32, #tpu.memory_space<vmem>>, vector<1x16xf32>
    %31 = vector.broadcast %30 : vector<1x16xf32> to vector<16x16xf32>
    %32 = arith.addf %29, %31 : vector<16x16xf32>
    %c48 = arith.constant 48 : index
    %c0_15 = arith.constant 0 : index
    %33 = vector.load %arg2[%c48, %c0_15] : memref<976x128xf32, #tpu.memory_space<vmem>>, vector<32x16xf32>
    %cst_16 = arith.constant dense<0.000000e+00> : vector<16x16xf32>
    %34 = tpu.matmul %26, %33, %cst_16 {dimension_numbers = #tpu.dot_dimension_numbers<[1], [0], [0], [1], [0, 0, 1, 1], [], []>} : vector<16x32xf32>, vector<32x16xf32>, vector<16x16xf32> -> vector<16x16xf32>
    %c120 = arith.constant 120 : index
    %c0_17 = arith.constant 0 : index
    %35 = vector.load %arg2[%c120, %c0_17] : memref<976x128xf32, #tpu.memory_space<vmem>>, vector<1x16xf32>
    %36 = vector.broadcast %35 : vector<1x16xf32> to vector<16x16xf32>
    %37 = arith.addf %34, %36 : vector<16x16xf32>
    %c80 = arith.constant 80 : index
    %c0_18 = arith.constant 0 : index
    %38 = vector.load %arg2[%c80, %c0_18] : memref<976x128xf32, #tpu.memory_space<vmem>>, vector<32x16xf32>
    %cst_19 = arith.constant dense<0.000000e+00> : vector<16x16xf32>
    %39 = tpu.matmul %26, %38, %cst_19 {dimension_numbers = #tpu.dot_dimension_numbers<[1], [0], [0], [1], [0, 0, 1, 1], [], []>} : vector<16x32xf32>, vector<32x16xf32>, vector<16x16xf32> -> vector<16x16xf32>
    %c128 = arith.constant 128 : index
    %c0_20 = arith.constant 0 : index
    %40 = vector.load %arg2[%c128, %c0_20] : memref<976x128xf32, #tpu.memory_space<vmem>>, vector<1x16xf32>
    %41 = vector.broadcast %40 : vector<1x16xf32> to vector<16x16xf32>
    %42 = arith.addf %39, %41 : vector<16x16xf32>
    %cst_21 = arith.constant dense<0.000000e+00> : vector<16x16xf32>
    %43 = tpu.matmul %32, %37, %cst_21 {dimension_numbers = #tpu.dot_dimension_numbers<[1], [1], [0], [0], [0, 0, 1, 0], [], []>} : vector<16x16xf32>, vector<16x16xf32>, vector<16x16xf32> -> vector<16x16xf32>
    %44 = arith.addf %43, %1 : vector<16x16xf32>
    %cst_22 = arith.constant dense<0xFF800000> : vector<16xf32>
    %45 = vector.multi_reduction <maximumf>, %44, %cst_22 [1] : vector<16x16xf32> to vector<16xf32>
    %46 = vector.shape_cast %45 : vector<16xf32> to vector<16x1xf32>
    %47 = vector.broadcast %46 : vector<16x1xf32> to vector<16x16xf32>
    %48 = arith.subf %44, %47 : vector<16x16xf32>
    %49 = math.exp %48 : vector<16x16xf32>
    %cst_23 = arith.constant dense<0.000000e+00> : vector<16xf32>
    %50 = vector.multi_reduction <add>, %49, %cst_23 [1] : vector<16x16xf32> to vector<16xf32>
    %51 = vector.shape_cast %50 : vector<16xf32> to vector<16x1xf32>
    %52 = vector.broadcast %51 : vector<16x1xf32> to vector<16x16xf32>
    %53 = arith.divf %49, %52 : vector<16x16xf32>
    %cst_24 = arith.constant dense<0.000000e+00> : vector<16x16xf32>
    %54 = tpu.matmul %53, %42, %cst_24 {dimension_numbers = #tpu.dot_dimension_numbers<[1], [0], [0], [1], [0, 0, 1, 1], [], []>} : vector<16x16xf32>, vector<16x16xf32>, vector<16x16xf32> -> vector<16x16xf32>
    %c136 = arith.constant 136 : index
    %c0_25 = arith.constant 0 : index
    %55 = vector.load %arg2[%c136, %c0_25] : memref<976x128xf32, #tpu.memory_space<vmem>>, vector<16x32xf32>
    %cst_26 = arith.constant dense<0.000000e+00> : vector<16x32xf32>
    %56 = tpu.matmul %54, %55, %cst_26 {dimension_numbers = #tpu.dot_dimension_numbers<[1], [0], [0], [1], [0, 0, 1, 1], [], []>} : vector<16x16xf32>, vector<16x32xf32>, vector<16x32xf32> -> vector<16x32xf32>
    %57 = arith.addf %27, %56 : vector<16x32xf32>
    %c152 = arith.constant 152 : index
    %c0_27 = arith.constant 0 : index
    %58 = vector.load %arg2[%c152, %c0_27] : memref<976x128xf32, #tpu.memory_space<vmem>>, vector<32x16xf32>
    %cst_28 = arith.constant dense<0.000000e+00> : vector<16x16xf32>
    %59 = tpu.matmul %26, %58, %cst_28 {dimension_numbers = #tpu.dot_dimension_numbers<[1], [0], [0], [1], [0, 0, 1, 1], [], []>} : vector<16x32xf32>, vector<32x16xf32>, vector<16x16xf32> -> vector<16x16xf32>
    %c248 = arith.constant 248 : index
    %c0_29 = arith.constant 0 : index
    %60 = vector.load %arg2[%c248, %c0_29] : memref<976x128xf32, #tpu.memory_space<vmem>>, vector<1x16xf32>
    %61 = vector.broadcast %60 : vector<1x16xf32> to vector<16x16xf32>
    %62 = arith.addf %59, %61 : vector<16x16xf32>
    %c184 = arith.constant 184 : index
    %c0_30 = arith.constant 0 : index
    %63 = vector.load %arg2[%c184, %c0_30] : memref<976x128xf32, #tpu.memory_space<vmem>>, vector<32x16xf32>
    %cst_31 = arith.constant dense<0.000000e+00> : vector<16x16xf32>
    %64 = tpu.matmul %26, %63, %cst_31 {dimension_numbers = #tpu.dot_dimension_numbers<[1], [0], [0], [1], [0, 0, 1, 1], [], []>} : vector<16x32xf32>, vector<32x16xf32>, vector<16x16xf32> -> vector<16x16xf32>
    %c256 = arith.constant 256 : index
    %c0_32 = arith.constant 0 : index
    %65 = vector.load %arg2[%c256, %c0_32] : memref<976x128xf32, #tpu.memory_space<vmem>>, vector<1x16xf32>
    %66 = vector.broadcast %65 : vector<1x16xf32> to vector<16x16xf32>
    %67 = arith.addf %64, %66 : vector<16x16xf32>
    %c216 = arith.constant 216 : index
    %c0_33 = arith.constant 0 : index
    %68 = vector.load %arg2[%c216, %c0_33] : memref<976x128xf32, #tpu.memory_space<vmem>>, vector<32x16xf32>
    %cst_34 = arith.constant dense<0.000000e+00> : vector<16x16xf32>
    %69 = tpu.matmul %26, %68, %cst_34 {dimension_numbers = #tpu.dot_dimension_numbers<[1], [0], [0], [1], [0, 0, 1, 1], [], []>} : vector<16x32xf32>, vector<32x16xf32>, vector<16x16xf32> -> vector<16x16xf32>
    %c264 = arith.constant 264 : index
    %c0_35 = arith.constant 0 : index
    %70 = vector.load %arg2[%c264, %c0_35] : memref<976x128xf32, #tpu.memory_space<vmem>>, vector<1x16xf32>
    %71 = vector.broadcast %70 : vector<1x16xf32> to vector<16x16xf32>
    %72 = arith.addf %69, %71 : vector<16x16xf32>
    %cst_36 = arith.constant dense<0.000000e+00> : vector<16x16xf32>
    %73 = tpu.matmul %62, %67, %cst_36 {dimension_numbers = #tpu.dot_dimension_numbers<[1], [1], [0], [0], [0, 0, 1, 0], [], []>} : vector<16x16xf32>, vector<16x16xf32>, vector<16x16xf32> -> vector<16x16xf32>
    %74 = arith.addf %73, %1 : vector<16x16xf32>
    %cst_37 = arith.constant dense<0xFF800000> : vector<16xf32>
    %75 = vector.multi_reduction <maximumf>, %74, %cst_37 [1] : vector<16x16xf32> to vector<16xf32>
    %76 = vector.shape_cast %75 : vector<16xf32> to vector<16x1xf32>
    %77 = vector.broadcast %76 : vector<16x1xf32> to vector<16x16xf32>
    %78 = arith.subf %74, %77 : vector<16x16xf32>
    %79 = math.exp %78 : vector<16x16xf32>
    %cst_38 = arith.constant dense<0.000000e+00> : vector<16xf32>
    %80 = vector.multi_reduction <add>, %79, %cst_38 [1] : vector<16x16xf32> to vector<16xf32>
    %81 = vector.shape_cast %80 : vector<16xf32> to vector<16x1xf32>
    %82 = vector.broadcast %81 : vector<16x1xf32> to vector<16x16xf32>
    %83 = arith.divf %79, %82 : vector<16x16xf32>
    %cst_39 = arith.constant dense<0.000000e+00> : vector<16x16xf32>
    %84 = tpu.matmul %83, %72, %cst_39 {dimension_numbers = #tpu.dot_dimension_numbers<[1], [0], [0], [1], [0, 0, 1, 1], [], []>} : vector<16x16xf32>, vector<16x16xf32>, vector<16x16xf32> -> vector<16x16xf32>
    %c272 = arith.constant 272 : index
    %c0_40 = arith.constant 0 : index
    %85 = vector.load %arg2[%c272, %c0_40] : memref<976x128xf32, #tpu.memory_space<vmem>>, vector<16x32xf32>
    %cst_41 = arith.constant dense<0.000000e+00> : vector<16x32xf32>
    %86 = tpu.matmul %84, %85, %cst_41 {dimension_numbers = #tpu.dot_dimension_numbers<[1], [0], [0], [1], [0, 0, 1, 1], [], []>} : vector<16x16xf32>, vector<16x32xf32>, vector<16x32xf32> -> vector<16x32xf32>
    %87 = arith.addf %57, %86 : vector<16x32xf32>
    %c288 = arith.constant 288 : index
    %c0_42 = arith.constant 0 : index
    %88 = vector.load %arg2[%c288, %c0_42] : memref<976x128xf32, #tpu.memory_space<vmem>>, vector<1x32xf32>
    %89 = vector.broadcast %88 : vector<1x32xf32> to vector<16x32xf32>
    %90 = arith.addf %87, %89 : vector<16x32xf32>
    %91 = arith.addf %26, %90 : vector<16x32xf32>
    %c296 = arith.constant 296 : index
    %c0_43 = arith.constant 0 : index
    %92 = vector.load %arg2[%c296, %c0_43] : memref<976x128xf32, #tpu.memory_space<vmem>>, vector<1x32xf32>
    %c304 = arith.constant 304 : index
    %c0_44 = arith.constant 0 : index
    %93 = vector.load %arg2[%c304, %c0_44] : memref<976x128xf32, #tpu.memory_space<vmem>>, vector<1x32xf32>
    %cst_45 = arith.constant dense<0.000000e+00> : vector<16xf32>
    %94 = vector.multi_reduction <add>, %91, %cst_45 [1] : vector<16x32xf32> to vector<16xf32>
    %95 = vector.shape_cast %94 : vector<16xf32> to vector<16x1xf32>
    %cst_46 = arith.constant 3.200000e+01 : f32
    %96 = vector.broadcast %cst_46 : f32 to vector<16x1xf32>
    %97 = arith.divf %95, %96 : vector<16x1xf32>
    %98 = vector.broadcast %97 : vector<16x1xf32> to vector<16x32xf32>
    %99 = arith.subf %91, %98 : vector<16x32xf32>
    %100 = arith.mulf %99, %99 : vector<16x32xf32>
    %cst_47 = arith.constant dense<0.000000e+00> : vector<16xf32>
    %101 = vector.multi_reduction <add>, %100, %cst_47 [1] : vector<16x32xf32> to vector<16xf32>
    %102 = vector.shape_cast %101 : vector<16xf32> to vector<16x1xf32>
    %cst_48 = arith.constant 3.200000e+01 : f32
    %103 = vector.broadcast %cst_48 : f32 to vector<16x1xf32>
    %104 = arith.divf %102, %103 : vector<16x1xf32>
    %105 = vector.broadcast %97 : vector<16x1xf32> to vector<16x32xf32>
    %106 = arith.subf %91, %105 : vector<16x32xf32>
    %cst_49 = arith.constant 9.99999974E-6 : f32
    %107 = vector.broadcast %cst_49 : f32 to vector<16x1xf32>
    %108 = arith.addf %104, %107 : vector<16x1xf32>
    %109 = math.rsqrt %108 : vector<16x1xf32>
    %110 = vector.broadcast %109 : vector<16x1xf32> to vector<16x32xf32>
    %111 = arith.mulf %106, %110 : vector<16x32xf32>
    %112 = vector.broadcast %92 : vector<1x32xf32> to vector<16x32xf32>
    %113 = arith.mulf %111, %112 : vector<16x32xf32>
    %114 = vector.broadcast %93 : vector<1x32xf32> to vector<16x32xf32>
    %115 = arith.addf %113, %114 : vector<16x32xf32>
    %c312 = arith.constant 312 : index
    %c0_50 = arith.constant 0 : index
    %116 = vector.load %arg2[%c312, %c0_50] : memref<976x128xf32, #tpu.memory_space<vmem>>, vector<32x64xf32>
    %cst_51 = arith.constant dense<0.000000e+00> : vector<16x64xf32>
    %117 = tpu.matmul %115, %116, %cst_51 {dimension_numbers = #tpu.dot_dimension_numbers<[1], [0], [0], [1], [0, 0, 1, 1], [], []>} : vector<16x32xf32>, vector<32x64xf32>, vector<16x64xf32> -> vector<16x64xf32>
    %c344 = arith.constant 344 : index
    %c0_52 = arith.constant 0 : index
    %118 = vector.load %arg2[%c344, %c0_52] : memref<976x128xf32, #tpu.memory_space<vmem>>, vector<1x64xf32>
    %119 = vector.broadcast %118 : vector<1x64xf32> to vector<16x64xf32>
    %120 = arith.addf %117, %119 : vector<16x64xf32>
    %cst_53 = arith.constant 5.000000e-01 : f32
    %121 = vector.broadcast %cst_53 : f32 to vector<16x64xf32>
    %122 = arith.mulf %121, %120 : vector<16x64xf32>
    %cst_54 = arith.constant 4.471500e-02 : f32
    %123 = vector.broadcast %cst_54 : f32 to vector<16x64xf32>
    %124 = arith.mulf %123, %120 : vector<16x64xf32>
    %125 = arith.mulf %124, %120 : vector<16x64xf32>
    %126 = arith.mulf %125, %120 : vector<16x64xf32>
    %127 = arith.addf %120, %126 : vector<16x64xf32>
    %cst_55 = arith.constant 0.797884583 : f32
    %128 = vector.broadcast %cst_55 : f32 to vector<16x64xf32>
    %129 = arith.mulf %128, %127 : vector<16x64xf32>
    %130 = math.tanh %129 : vector<16x64xf32>
    %cst_56 = arith.constant 1.000000e+00 : f32
    %131 = vector.broadcast %cst_56 : f32 to vector<16x64xf32>
    %132 = arith.addf %131, %130 : vector<16x64xf32>
    %133 = arith.mulf %122, %132 : vector<16x64xf32>
    %c352 = arith.constant 352 : index
    %c0_57 = arith.constant 0 : index
    %134 = vector.load %arg2[%c352, %c0_57] : memref<976x128xf32, #tpu.memory_space<vmem>>, vector<64x32xf32>
    %cst_58 = arith.constant dense<0.000000e+00> : vector<16x32xf32>
    %135 = tpu.matmul %133, %134, %cst_58 {dimension_numbers = #tpu.dot_dimension_numbers<[1], [0], [0], [1], [0, 0, 1, 1], [], []>} : vector<16x64xf32>, vector<64x32xf32>, vector<16x32xf32> -> vector<16x32xf32>
    %c416 = arith.constant 416 : index
    %c0_59 = arith.constant 0 : index
    %136 = vector.load %arg2[%c416, %c0_59] : memref<976x128xf32, #tpu.memory_space<vmem>>, vector<1x32xf32>
    %137 = vector.broadcast %136 : vector<1x32xf32> to vector<16x32xf32>
    %138 = arith.addf %135, %137 : vector<16x32xf32>
    %139 = arith.addf %115, %138 : vector<16x32xf32>
    %c424 = arith.constant 424 : index
    %c0_60 = arith.constant 0 : index
    %140 = vector.load %arg2[%c424, %c0_60] : memref<976x128xf32, #tpu.memory_space<vmem>>, vector<1x32xf32>
    %c432 = arith.constant 432 : index
    %c0_61 = arith.constant 0 : index
    %141 = vector.load %arg2[%c432, %c0_61] : memref<976x128xf32, #tpu.memory_space<vmem>>, vector<1x32xf32>
    %cst_62 = arith.constant dense<0.000000e+00> : vector<16xf32>
    %142 = vector.multi_reduction <add>, %139, %cst_62 [1] : vector<16x32xf32> to vector<16xf32>
    %143 = vector.shape_cast %142 : vector<16xf32> to vector<16x1xf32>
    %cst_63 = arith.constant 3.200000e+01 : f32
    %144 = vector.broadcast %cst_63 : f32 to vector<16x1xf32>
    %145 = arith.divf %143, %144 : vector<16x1xf32>
    %146 = vector.broadcast %145 : vector<16x1xf32> to vector<16x32xf32>
    %147 = arith.subf %139, %146 : vector<16x32xf32>
    %148 = arith.mulf %147, %147 : vector<16x32xf32>
    %cst_64 = arith.constant dense<0.000000e+00> : vector<16xf32>
    %149 = vector.multi_reduction <add>, %148, %cst_64 [1] : vector<16x32xf32> to vector<16xf32>
    %150 = vector.shape_cast %149 : vector<16xf32> to vector<16x1xf32>
    %cst_65 = arith.constant 3.200000e+01 : f32
    %151 = vector.broadcast %cst_65 : f32 to vector<16x1xf32>
    %152 = arith.divf %150, %151 : vector<16x1xf32>
    %153 = vector.broadcast %145 : vector<16x1xf32> to vector<16x32xf32>
    %154 = arith.subf %139, %153 : vector<16x32xf32>
    %cst_66 = arith.constant 9.99999974E-6 : f32
    %155 = vector.broadcast %cst_66 : f32 to vector<16x1xf32>
    %156 = arith.addf %152, %155 : vector<16x1xf32>
    %157 = math.rsqrt %156 : vector<16x1xf32>
    %158 = vector.broadcast %157 : vector<16x1xf32> to vector<16x32xf32>
    %159 = arith.mulf %154, %158 : vector<16x32xf32>
    %160 = vector.broadcast %140 : vector<1x32xf32> to vector<16x32xf32>
    %161 = arith.mulf %159, %160 : vector<16x32xf32>
    %162 = vector.broadcast %141 : vector<1x32xf32> to vector<16x32xf32>
    %163 = arith.addf %161, %162 : vector<16x32xf32>
    %cst_67 = arith.constant 0.000000e+00 : f32
    %164 = vector.broadcast %cst_67 : f32 to vector<16x32xf32>
    %c440 = arith.constant 440 : index
    %c0_68 = arith.constant 0 : index
    %165 = vector.load %arg2[%c440, %c0_68] : memref<976x128xf32, #tpu.memory_space<vmem>>, vector<32x16xf32>
    %cst_69 = arith.constant dense<0.000000e+00> : vector<16x16xf32>
    %166 = tpu.matmul %163, %165, %cst_69 {dimension_numbers = #tpu.dot_dimension_numbers<[1], [0], [0], [1], [0, 0, 1, 1], [], []>} : vector<16x32xf32>, vector<32x16xf32>, vector<16x16xf32> -> vector<16x16xf32>
    %c536 = arith.constant 536 : index
    %c0_70 = arith.constant 0 : index
    %167 = vector.load %arg2[%c536, %c0_70] : memref<976x128xf32, #tpu.memory_space<vmem>>, vector<1x16xf32>
    %168 = vector.broadcast %167 : vector<1x16xf32> to vector<16x16xf32>
    %169 = arith.addf %166, %168 : vector<16x16xf32>
    %c472 = arith.constant 472 : index
    %c0_71 = arith.constant 0 : index
    %170 = vector.load %arg2[%c472, %c0_71] : memref<976x128xf32, #tpu.memory_space<vmem>>, vector<32x16xf32>
    %cst_72 = arith.constant dense<0.000000e+00> : vector<16x16xf32>
    %171 = tpu.matmul %163, %170, %cst_72 {dimension_numbers = #tpu.dot_dimension_numbers<[1], [0], [0], [1], [0, 0, 1, 1], [], []>} : vector<16x32xf32>, vector<32x16xf32>, vector<16x16xf32> -> vector<16x16xf32>
    %c544 = arith.constant 544 : index
    %c0_73 = arith.constant 0 : index
    %172 = vector.load %arg2[%c544, %c0_73] : memref<976x128xf32, #tpu.memory_space<vmem>>, vector<1x16xf32>
    %173 = vector.broadcast %172 : vector<1x16xf32> to vector<16x16xf32>
    %174 = arith.addf %171, %173 : vector<16x16xf32>
    %c504 = arith.constant 504 : index
    %c0_74 = arith.constant 0 : index
    %175 = vector.load %arg2[%c504, %c0_74] : memref<976x128xf32, #tpu.memory_space<vmem>>, vector<32x16xf32>
    %cst_75 = arith.constant dense<0.000000e+00> : vector<16x16xf32>
    %176 = tpu.matmul %163, %175, %cst_75 {dimension_numbers = #tpu.dot_dimension_numbers<[1], [0], [0], [1], [0, 0, 1, 1], [], []>} : vector<16x32xf32>, vector<32x16xf32>, vector<16x16xf32> -> vector<16x16xf32>
    %c552 = arith.constant 552 : index
    %c0_76 = arith.constant 0 : index
    %177 = vector.load %arg2[%c552, %c0_76] : memref<976x128xf32, #tpu.memory_space<vmem>>, vector<1x16xf32>
    %178 = vector.broadcast %177 : vector<1x16xf32> to vector<16x16xf32>
    %179 = arith.addf %176, %178 : vector<16x16xf32>
    %cst_77 = arith.constant dense<0.000000e+00> : vector<16x16xf32>
    %180 = tpu.matmul %169, %174, %cst_77 {dimension_numbers = #tpu.dot_dimension_numbers<[1], [1], [0], [0], [0, 0, 1, 0], [], []>} : vector<16x16xf32>, vector<16x16xf32>, vector<16x16xf32> -> vector<16x16xf32>
    %181 = arith.addf %180, %1 : vector<16x16xf32>
    %cst_78 = arith.constant dense<0xFF800000> : vector<16xf32>
    %182 = vector.multi_reduction <maximumf>, %181, %cst_78 [1] : vector<16x16xf32> to vector<16xf32>
    %183 = vector.shape_cast %182 : vector<16xf32> to vector<16x1xf32>
    %184 = vector.broadcast %183 : vector<16x1xf32> to vector<16x16xf32>
    %185 = arith.subf %181, %184 : vector<16x16xf32>
    %186 = math.exp %185 : vector<16x16xf32>
    %cst_79 = arith.constant dense<0.000000e+00> : vector<16xf32>
    %187 = vector.multi_reduction <add>, %186, %cst_79 [1] : vector<16x16xf32> to vector<16xf32>
    %188 = vector.shape_cast %187 : vector<16xf32> to vector<16x1xf32>
    %189 = vector.broadcast %188 : vector<16x1xf32> to vector<16x16xf32>
    %190 = arith.divf %186, %189 : vector<16x16xf32>
    %cst_80 = arith.constant dense<0.000000e+00> : vector<16x16xf32>
    %191 = tpu.matmul %190, %179, %cst_80 {dimension_numbers = #tpu.dot_dimension_numbers<[1], [0], [0], [1], [0, 0, 1, 1], [], []>} : vector<16x16xf32>, vector<16x16xf32>, vector<16x16xf32> -> vector<16x16xf32>
    %c560 = arith.constant 560 : index
    %c0_81 = arith.constant 0 : index
    %192 = vector.load %arg2[%c560, %c0_81] : memref<976x128xf32, #tpu.memory_space<vmem>>, vector<16x32xf32>
    %cst_82 = arith.constant dense<0.000000e+00> : vector<16x32xf32>
    %193 = tpu.matmul %191, %192, %cst_82 {dimension_numbers = #tpu.dot_dimension_numbers<[1], [0], [0], [1], [0, 0, 1, 1], [], []>} : vector<16x16xf32>, vector<16x32xf32>, vector<16x32xf32> -> vector<16x32xf32>
    %194 = arith.addf %164, %193 : vector<16x32xf32>
    %c576 = arith.constant 576 : index
    %c0_83 = arith.constant 0 : index
    %195 = vector.load %arg2[%c576, %c0_83] : memref<976x128xf32, #tpu.memory_space<vmem>>, vector<32x16xf32>
    %cst_84 = arith.constant dense<0.000000e+00> : vector<16x16xf32>
    %196 = tpu.matmul %163, %195, %cst_84 {dimension_numbers = #tpu.dot_dimension_numbers<[1], [0], [0], [1], [0, 0, 1, 1], [], []>} : vector<16x32xf32>, vector<32x16xf32>, vector<16x16xf32> -> vector<16x16xf32>
    %c672 = arith.constant 672 : index
    %c0_85 = arith.constant 0 : index
    %197 = vector.load %arg2[%c672, %c0_85] : memref<976x128xf32, #tpu.memory_space<vmem>>, vector<1x16xf32>
    %198 = vector.broadcast %197 : vector<1x16xf32> to vector<16x16xf32>
    %199 = arith.addf %196, %198 : vector<16x16xf32>
    %c608 = arith.constant 608 : index
    %c0_86 = arith.constant 0 : index
    %200 = vector.load %arg2[%c608, %c0_86] : memref<976x128xf32, #tpu.memory_space<vmem>>, vector<32x16xf32>
    %cst_87 = arith.constant dense<0.000000e+00> : vector<16x16xf32>
    %201 = tpu.matmul %163, %200, %cst_87 {dimension_numbers = #tpu.dot_dimension_numbers<[1], [0], [0], [1], [0, 0, 1, 1], [], []>} : vector<16x32xf32>, vector<32x16xf32>, vector<16x16xf32> -> vector<16x16xf32>
    %c680 = arith.constant 680 : index
    %c0_88 = arith.constant 0 : index
    %202 = vector.load %arg2[%c680, %c0_88] : memref<976x128xf32, #tpu.memory_space<vmem>>, vector<1x16xf32>
    %203 = vector.broadcast %202 : vector<1x16xf32> to vector<16x16xf32>
    %204 = arith.addf %201, %203 : vector<16x16xf32>
    %c640 = arith.constant 640 : index
    %c0_89 = arith.constant 0 : index
    %205 = vector.load %arg2[%c640, %c0_89] : memref<976x128xf32, #tpu.memory_space<vmem>>, vector<32x16xf32>
    %cst_90 = arith.constant dense<0.000000e+00> : vector<16x16xf32>
    %206 = tpu.matmul %163, %205, %cst_90 {dimension_numbers = #tpu.dot_dimension_numbers<[1], [0], [0], [1], [0, 0, 1, 1], [], []>} : vector<16x32xf32>, vector<32x16xf32>, vector<16x16xf32> -> vector<16x16xf32>
    %c688 = arith.constant 688 : index
    %c0_91 = arith.constant 0 : index
    %207 = vector.load %arg2[%c688, %c0_91] : memref<976x128xf32, #tpu.memory_space<vmem>>, vector<1x16xf32>
    %208 = vector.broadcast %207 : vector<1x16xf32> to vector<16x16xf32>
    %209 = arith.addf %206, %208 : vector<16x16xf32>
    %cst_92 = arith.constant dense<0.000000e+00> : vector<16x16xf32>
    %210 = tpu.matmul %199, %204, %cst_92 {dimension_numbers = #tpu.dot_dimension_numbers<[1], [1], [0], [0], [0, 0, 1, 0], [], []>} : vector<16x16xf32>, vector<16x16xf32>, vector<16x16xf32> -> vector<16x16xf32>
    %211 = arith.addf %210, %1 : vector<16x16xf32>
    %cst_93 = arith.constant dense<0xFF800000> : vector<16xf32>
    %212 = vector.multi_reduction <maximumf>, %211, %cst_93 [1] : vector<16x16xf32> to vector<16xf32>
    %213 = vector.shape_cast %212 : vector<16xf32> to vector<16x1xf32>
    %214 = vector.broadcast %213 : vector<16x1xf32> to vector<16x16xf32>
    %215 = arith.subf %211, %214 : vector<16x16xf32>
    %216 = math.exp %215 : vector<16x16xf32>
    %cst_94 = arith.constant dense<0.000000e+00> : vector<16xf32>
    %217 = vector.multi_reduction <add>, %216, %cst_94 [1] : vector<16x16xf32> to vector<16xf32>
    %218 = vector.shape_cast %217 : vector<16xf32> to vector<16x1xf32>
    %219 = vector.broadcast %218 : vector<16x1xf32> to vector<16x16xf32>
    %220 = arith.divf %216, %219 : vector<16x16xf32>
    %cst_95 = arith.constant dense<0.000000e+00> : vector<16x16xf32>
    %221 = tpu.matmul %220, %209, %cst_95 {dimension_numbers = #tpu.dot_dimension_numbers<[1], [0], [0], [1], [0, 0, 1, 1], [], []>} : vector<16x16xf32>, vector<16x16xf32>, vector<16x16xf32> -> vector<16x16xf32>
    %c696 = arith.constant 696 : index
    %c0_96 = arith.constant 0 : index
    %222 = vector.load %arg2[%c696, %c0_96] : memref<976x128xf32, #tpu.memory_space<vmem>>, vector<16x32xf32>
    %cst_97 = arith.constant dense<0.000000e+00> : vector<16x32xf32>
    %223 = tpu.matmul %221, %222, %cst_97 {dimension_numbers = #tpu.dot_dimension_numbers<[1], [0], [0], [1], [0, 0, 1, 1], [], []>} : vector<16x16xf32>, vector<16x32xf32>, vector<16x32xf32> -> vector<16x32xf32>
    %224 = arith.addf %194, %223 : vector<16x32xf32>
    %c712 = arith.constant 712 : index
    %c0_98 = arith.constant 0 : index
    %225 = vector.load %arg2[%c712, %c0_98] : memref<976x128xf32, #tpu.memory_space<vmem>>, vector<1x32xf32>
    %226 = vector.broadcast %225 : vector<1x32xf32> to vector<16x32xf32>
    %227 = arith.addf %224, %226 : vector<16x32xf32>
    %228 = arith.addf %163, %227 : vector<16x32xf32>
    %c720 = arith.constant 720 : index
    %c0_99 = arith.constant 0 : index
    %229 = vector.load %arg2[%c720, %c0_99] : memref<976x128xf32, #tpu.memory_space<vmem>>, vector<1x32xf32>
    %c728 = arith.constant 728 : index
    %c0_100 = arith.constant 0 : index
    %230 = vector.load %arg2[%c728, %c0_100] : memref<976x128xf32, #tpu.memory_space<vmem>>, vector<1x32xf32>
    %cst_101 = arith.constant dense<0.000000e+00> : vector<16xf32>
    %231 = vector.multi_reduction <add>, %228, %cst_101 [1] : vector<16x32xf32> to vector<16xf32>
    %232 = vector.shape_cast %231 : vector<16xf32> to vector<16x1xf32>
    %cst_102 = arith.constant 3.200000e+01 : f32
    %233 = vector.broadcast %cst_102 : f32 to vector<16x1xf32>
    %234 = arith.divf %232, %233 : vector<16x1xf32>
    %235 = vector.broadcast %234 : vector<16x1xf32> to vector<16x32xf32>
    %236 = arith.subf %228, %235 : vector<16x32xf32>
    %237 = arith.mulf %236, %236 : vector<16x32xf32>
    %cst_103 = arith.constant dense<0.000000e+00> : vector<16xf32>
    %238 = vector.multi_reduction <add>, %237, %cst_103 [1] : vector<16x32xf32> to vector<16xf32>
    %239 = vector.shape_cast %238 : vector<16xf32> to vector<16x1xf32>
    %cst_104 = arith.constant 3.200000e+01 : f32
    %240 = vector.broadcast %cst_104 : f32 to vector<16x1xf32>
    %241 = arith.divf %239, %240 : vector<16x1xf32>
    %242 = vector.broadcast %234 : vector<16x1xf32> to vector<16x32xf32>
    %243 = arith.subf %228, %242 : vector<16x32xf32>
    %cst_105 = arith.constant 9.99999974E-6 : f32
    %244 = vector.broadcast %cst_105 : f32 to vector<16x1xf32>
    %245 = arith.addf %241, %244 : vector<16x1xf32>
    %246 = math.rsqrt %245 : vector<16x1xf32>
    %247 = vector.broadcast %246 : vector<16x1xf32> to vector<16x32xf32>
    %248 = arith.mulf %243, %247 : vector<16x32xf32>
    %249 = vector.broadcast %229 : vector<1x32xf32> to vector<16x32xf32>
    %250 = arith.mulf %248, %249 : vector<16x32xf32>
    %251 = vector.broadcast %230 : vector<1x32xf32> to vector<16x32xf32>
    %252 = arith.addf %250, %251 : vector<16x32xf32>
    %c736 = arith.constant 736 : index
    %c0_106 = arith.constant 0 : index
    %253 = vector.load %arg2[%c736, %c0_106] : memref<976x128xf32, #tpu.memory_space<vmem>>, vector<32x64xf32>
    %cst_107 = arith.constant dense<0.000000e+00> : vector<16x64xf32>
    %254 = tpu.matmul %252, %253, %cst_107 {dimension_numbers = #tpu.dot_dimension_numbers<[1], [0], [0], [1], [0, 0, 1, 1], [], []>} : vector<16x32xf32>, vector<32x64xf32>, vector<16x64xf32> -> vector<16x64xf32>
    %c768 = arith.constant 768 : index
    %c0_108 = arith.constant 0 : index
    %255 = vector.load %arg2[%c768, %c0_108] : memref<976x128xf32, #tpu.memory_space<vmem>>, vector<1x64xf32>
    %256 = vector.broadcast %255 : vector<1x64xf32> to vector<16x64xf32>
    %257 = arith.addf %254, %256 : vector<16x64xf32>
    %cst_109 = arith.constant 5.000000e-01 : f32
    %258 = vector.broadcast %cst_109 : f32 to vector<16x64xf32>
    %259 = arith.mulf %258, %257 : vector<16x64xf32>
    %cst_110 = arith.constant 4.471500e-02 : f32
    %260 = vector.broadcast %cst_110 : f32 to vector<16x64xf32>
    %261 = arith.mulf %260, %257 : vector<16x64xf32>
    %262 = arith.mulf %261, %257 : vector<16x64xf32>
    %263 = arith.mulf %262, %257 : vector<16x64xf32>
    %264 = arith.addf %257, %263 : vector<16x64xf32>
    %cst_111 = arith.constant 0.797884583 : f32
    %265 = vector.broadcast %cst_111 : f32 to vector<16x64xf32>
    %266 = arith.mulf %265, %264 : vector<16x64xf32>
    %267 = math.tanh %266 : vector<16x64xf32>
    %cst_112 = arith.constant 1.000000e+00 : f32
    %268 = vector.broadcast %cst_112 : f32 to vector<16x64xf32>
    %269 = arith.addf %268, %267 : vector<16x64xf32>
    %270 = arith.mulf %259, %269 : vector<16x64xf32>
    %c776 = arith.constant 776 : index
    %c0_113 = arith.constant 0 : index
    %271 = vector.load %arg2[%c776, %c0_113] : memref<976x128xf32, #tpu.memory_space<vmem>>, vector<64x32xf32>
    %cst_114 = arith.constant dense<0.000000e+00> : vector<16x32xf32>
    %272 = tpu.matmul %270, %271, %cst_114 {dimension_numbers = #tpu.dot_dimension_numbers<[1], [0], [0], [1], [0, 0, 1, 1], [], []>} : vector<16x64xf32>, vector<64x32xf32>, vector<16x32xf32> -> vector<16x32xf32>
    %c840 = arith.constant 840 : index
    %c0_115 = arith.constant 0 : index
    %273 = vector.load %arg2[%c840, %c0_115] : memref<976x128xf32, #tpu.memory_space<vmem>>, vector<1x32xf32>
    %274 = vector.broadcast %273 : vector<1x32xf32> to vector<16x32xf32>
    %275 = arith.addf %272, %274 : vector<16x32xf32>
    %276 = arith.addf %252, %275 : vector<16x32xf32>
    %c848 = arith.constant 848 : index
    %c0_116 = arith.constant 0 : index
    %277 = vector.load %arg2[%c848, %c0_116] : memref<976x128xf32, #tpu.memory_space<vmem>>, vector<1x32xf32>
    %c856 = arith.constant 856 : index
    %c0_117 = arith.constant 0 : index
    %278 = vector.load %arg2[%c856, %c0_117] : memref<976x128xf32, #tpu.memory_space<vmem>>, vector<1x32xf32>
    %cst_118 = arith.constant dense<0.000000e+00> : vector<16xf32>
    %279 = vector.multi_reduction <add>, %276, %cst_118 [1] : vector<16x32xf32> to vector<16xf32>
    %280 = vector.shape_cast %279 : vector<16xf32> to vector<16x1xf32>
    %cst_119 = arith.constant 3.200000e+01 : f32
    %281 = vector.broadcast %cst_119 : f32 to vector<16x1xf32>
    %282 = arith.divf %280, %281 : vector<16x1xf32>
    %283 = vector.broadcast %282 : vector<16x1xf32> to vector<16x32xf32>
    %284 = arith.subf %276, %283 : vector<16x32xf32>
    %285 = arith.mulf %284, %284 : vector<16x32xf32>
    %cst_120 = arith.constant dense<0.000000e+00> : vector<16xf32>
    %286 = vector.multi_reduction <add>, %285, %cst_120 [1] : vector<16x32xf32> to vector<16xf32>
    %287 = vector.shape_cast %286 : vector<16xf32> to vector<16x1xf32>
    %cst_121 = arith.constant 3.200000e+01 : f32
    %288 = vector.broadcast %cst_121 : f32 to vector<16x1xf32>
    %289 = arith.divf %287, %288 : vector<16x1xf32>
    %290 = vector.broadcast %282 : vector<16x1xf32> to vector<16x32xf32>
    %291 = arith.subf %276, %290 : vector<16x32xf32>
    %cst_122 = arith.constant 9.99999974E-6 : f32
    %292 = vector.broadcast %cst_122 : f32 to vector<16x1xf32>
    %293 = arith.addf %289, %292 : vector<16x1xf32>
    %294 = math.rsqrt %293 : vector<16x1xf32>
    %295 = vector.broadcast %294 : vector<16x1xf32> to vector<16x32xf32>
    %296 = arith.mulf %291, %295 : vector<16x32xf32>
    %297 = vector.broadcast %277 : vector<1x32xf32> to vector<16x32xf32>
    %298 = arith.mulf %296, %297 : vector<16x32xf32>
    %299 = vector.broadcast %278 : vector<1x32xf32> to vector<16x32xf32>
    %300 = arith.addf %298, %299 : vector<16x32xf32>
    %cst_123 = arith.constant dense<0.000000e+00> : vector<24x32xf32>
    %301 = tpu.matmul %2, %300, %cst_123 {dimension_numbers = #tpu.dot_dimension_numbers<[1], [0], [0], [1], [0, 0, 1, 1], [], []>} : vector<24x16xf32>, vector<16x32xf32>, vector<24x32xf32> -> vector<24x32xf32>
    %302 = vector.extract_strided_slice %301 {offsets = [0, 0], sizes = [8, 32], strides = [1, 1]} : vector<24x32xf32> to vector<8x32xf32>
    %303 = vector.extract_strided_slice %301 {offsets = [8, 0], sizes = [8, 32], strides = [1, 1]} : vector<24x32xf32> to vector<8x32xf32>
    %304 = vector.extract_strided_slice %301 {offsets = [16, 0], sizes = [8, 32], strides = [1, 1]} : vector<24x32xf32> to vector<8x32xf32>
    %c936 = arith.constant 936 : index
    %c0_124 = arith.constant 0 : index
    %305 = vector.load %arg2[%c936, %c0_124] : memref<976x128xf32, #tpu.memory_space<vmem>>, vector<32x128xf32>
    %c968 = arith.constant 968 : index
    %c0_125 = arith.constant 0 : index
    %306 = vector.load %arg2[%c968, %c0_125] : memref<976x128xf32, #tpu.memory_space<vmem>>, vector<1x128xf32>
    %c0_126 = arith.constant 0 : index
    %307 = memref.load %arg0[%c0_126] : memref<1xi32, #tpu.memory_space<smem>>
    %c0_i32 = arith.constant 0 : i32
    %308 = arith.cmpi ne, %307, %c0_i32 : i32
    %309 = arith.extui %308 : i1 to i32
    %c0_i32_127 = arith.constant 0 : i32
    %310 = arith.cmpi ne, %309, %c0_i32_127 : i32
    scf.if %310 {
      %c864 = arith.constant 864 : index
      %c0_131 = arith.constant 0 : index
      %315 = vector.load %arg2[%c864, %c0_131] : memref<976x128xf32, #tpu.memory_space<vmem>>, vector<32x32xf32>
      %cst_132 = arith.constant dense<0.000000e+00> : vector<8x32xf32>
      %316 = tpu.matmul %302, %315, %cst_132 {dimension_numbers = #tpu.dot_dimension_numbers<[1], [0], [0], [1], [0, 0, 1, 1], [], []>} : vector<8x32xf32>, vector<32x32xf32>, vector<8x32xf32> -> vector<8x32xf32>
      %c896 = arith.constant 896 : index
      %c0_133 = arith.constant 0 : index
      %317 = vector.load %arg2[%c896, %c0_133] : memref<976x128xf32, #tpu.memory_space<vmem>>, vector<32x32xf32>
      %cst_134 = arith.constant dense<0.000000e+00> : vector<8x32xf32>
      %318 = tpu.matmul %303, %317, %cst_134 {dimension_numbers = #tpu.dot_dimension_numbers<[1], [0], [0], [1], [0, 0, 1, 1], [], []>} : vector<8x32xf32>, vector<32x32xf32>, vector<8x32xf32> -> vector<8x32xf32>
      %319 = arith.addf %316, %318 : vector<8x32xf32>
      %c928 = arith.constant 928 : index
      %c0_135 = arith.constant 0 : index
      %320 = vector.load %arg2[%c928, %c0_135] : memref<976x128xf32, #tpu.memory_space<vmem>>, vector<1x32xf32>
      %321 = vector.broadcast %320 : vector<1x32xf32> to vector<8x32xf32>
      %322 = arith.addf %319, %321 : vector<8x32xf32>
      %cst_136 = arith.constant 5.000000e-01 : f32
      %323 = vector.broadcast %cst_136 : f32 to vector<8x32xf32>
      %324 = arith.mulf %323, %322 : vector<8x32xf32>
      %cst_137 = arith.constant 4.471500e-02 : f32
      %325 = vector.broadcast %cst_137 : f32 to vector<8x32xf32>
      %326 = arith.mulf %325, %322 : vector<8x32xf32>
      %327 = arith.mulf %326, %322 : vector<8x32xf32>
      %328 = arith.mulf %327, %322 : vector<8x32xf32>
      %329 = arith.addf %322, %328 : vector<8x32xf32>
      %cst_138 = arith.constant 0.797884583 : f32
      %330 = vector.broadcast %cst_138 : f32 to vector<8x32xf32>
      %331 = arith.mulf %330, %329 : vector<8x32xf32>
      %332 = math.tanh %331 : vector<8x32xf32>
      %cst_139 = arith.constant 1.000000e+00 : f32
      %333 = vector.broadcast %cst_139 : f32 to vector<8x32xf32>
      %334 = arith.addf %333, %332 : vector<8x32xf32>
      %335 = arith.mulf %324, %334 : vector<8x32xf32>
      %cst_140 = arith.constant dense<0.000000e+00> : vector<8x128xf32>
      %336 = tpu.matmul %335, %305, %cst_140 {dimension_numbers = #tpu.dot_dimension_numbers<[1], [0], [0], [1], [0, 0, 1, 1], [], []>} : vector<8x32xf32>, vector<32x128xf32>, vector<8x128xf32> -> vector<8x128xf32>
      %337 = vector.broadcast %306 : vector<1x128xf32> to vector<8x128xf32>
      %338 = arith.addf %336, %337 : vector<8x128xf32>
      %c0_141 = arith.constant 0 : index
      %c0_142 = arith.constant 0 : index
      %339 = vector.load %arg3[%c0_141, %c0_142] : memref<8x128xf32, #tpu.memory_space<vmem>>, vector<8x128xf32>
      tpu.vector_store %arg3[%c0_141, %c0_142], %338 {strides = array<i32>} : memref<8x128xf32, #tpu.memory_space<vmem>>, vector<8x128xf32>,
    } else {
    }
    %c0_128 = arith.constant 0 : index
    %311 = memref.load %arg0[%c0_128] : memref<1xi32, #tpu.memory_space<smem>>
    %c0_i32_129 = arith.constant 0 : i32
    %312 = arith.cmpi eq, %311, %c0_i32_129 : i32
    %313 = arith.extui %312 : i1 to i32
    %c0_i32_130 = arith.constant 0 : i32
    %314 = arith.cmpi ne, %313, %c0_i32_130 : i32
    scf.if %314 {
      %cst_131 = arith.constant dense<0.000000e+00> : vector<8x128xf32>
      %315 = tpu.matmul %304, %305, %cst_131 {dimension_numbers = #tpu.dot_dimension_numbers<[1], [0], [0], [1], [0, 0, 1, 1], [], []>} : vector<8x32xf32>, vector<32x128xf32>, vector<8x128xf32> -> vector<8x128xf32>
      %316 = vector.broadcast %306 : vector<1x128xf32> to vector<8x128xf32>
      %317 = arith.addf %315, %316 : vector<8x128xf32>
      %c0_132 = arith.constant 0 : index
      %c0_133 = arith.constant 0 : index
      %318 = vector.load %arg3[%c0_132, %c0_133] : memref<8x128xf32, #tpu.memory_space<vmem>>, vector<8x128xf32>
      tpu.vector_store %arg3[%c0_132, %c0_133], %317 {strides = array<i32>} : memref<8x128xf32, #tpu.memory_space<vmem>>, vector<8x128xf32>,
    } else {
    }
    return
  }
}

</mosaic_0001>

<llo_original>
// kernel: mul.36
$region0: #{mul.36}
  %s0 = inlined_call_operand.vmem [shape: f32[2,8], index: 0, kind: input, shape index: {}]
  %s1 = inlined_call_operand.vmem [shape: f32[16], index: 1, kind: output, shape index: {}]
  $region1: #{mul.36} parent=0
    #allocation0 [shape = 'u8[4096]{0}', space=vmem, size = 0x1000, scoped, tag = 'scoped mem for output reshape']
    #allocation1 [shape = 'u8[4096]{0}', space=vmem, size = 0x1000, scoped, tag = 'scoped mem for input reshape']
    %s3 = sshll.u32 1, 2
    %s4 = ssub.s32 %s3, 1
    %v5 = vld [vmem:[%s0] sm:%s4]
    %6 = vst [vmem:[#allocation1] sm:%s4] %v5
    %v7 = vld [vmem:[#allocation1] sm:$0x1]
    %vm8 = vcmask 64512
    %9 = vst.msk [vmem:[#allocation0] sm:$0x1] %vm8, %v7
    %s10 = scalar_lea.vmem [#allocation1], 1
    %v11 = vld [vmem:[%s10] sm:$0x1]
    %12 = vrot.lane.b32.xlu0 %v11, 8
    %v13 = vpop.permute.xlu0 %12
    %vm14 = vcmask 130112
    %15 = vst.msk [vmem:[#allocation0] sm:$0x1] %vm14, %v13
    %s17 = sshll.u32 1, 1
    %s18 = ssub.s32 %s17, 1
    %v20 = vld [vmem:[#allocation0] sm:%s18]
    %s21 = sshll.u32 1, 1
    %s22 = ssub.s32 %s21, 1
    %23 = vst [vmem:[%s1] sm:%s22] %v20

// kernel: bart_classifier_forward.1
$region0: #{bart_classifier_forward.1}
  #allocation0 [shape = 'u32[]', space=smem, size = 0x4, offset = 0x4, fixed_abs, tag = 'smem constant byte address 0x4 - core index']
  #allocation1 [shape = 'u32[144,128]{1,0:T(1,128)}', space=vmem, size = 0x12000, scoped, tag = 'internal scratch']
  #allocation2 [shape = 's32[1]{0:T(128)S(6)}', space=smem, size = 0x200, scoped, tag = 'scoped memory for bart_classifier_forward.1']
  %s0 = inlined_call_operand.<no memory space> [shape: s32[1], index: 0, kind: input, shape index: {}]
  %s1 = inlined_call_operand.vmem [shape: f32[56,128], index: 1, kind: input, shape index: {}]
  %s2 = inlined_call_operand.hbm [shape: f32[976,128], index: 2, kind: input, shape index: {}]
  %s3 = inlined_call_operand.vmem [shape: f32[8,128], index: 3, kind: output, shape index: {}]
  %s4 = sld [smem:[#allocation0]]
  $region34: #{bart_classifier_forward.1} parent=0
    _
  %s6 = ssub.s32 1, %s4
  %s7 = scalar_select 0, %s6, %s4
  %8 = sst [smem:[#allocation2]] %s0
  $region1: #{bart_classifier_forward.1} parent=0
    #allocation3 [shape = 'u8[499712]{0}', space=vmem, size = 0x7a000, scoped, tag = 'input window, operand 2, single buffered']
    #allocation4 [shape = 's32[1]{0}', space=sflag, size = 0x4, scoped, tag = 'scoped memory for bart_classifier_forward.1']
    %9 = vsyncpa [#allocation4], 0
    // Predicated region
    $region2: #{bart_classifier_forward.1} parent=1 // pred_check
      _
    $region3: #{bart_classifier_forward.1} parent=1 // pred_check_branch
      %11 = sbr.rel (0) target = $region5
    $region4: #{bart_classifier_forward.1} parent=1 // pred_region
      _
    $region5: #{bart_classifier_forward.1} parent=1 // pred_fallthru
      _
    // Predicated region
    $region6: #{bart_classifier_forward.1} parent=1 // pred_check
      _
    $region7: #{bart_classifier_forward.1} parent=1 // pred_check_branch
      %13 = sbr.rel (0) target = $region9
    $region8: #{bart_classifier_forward.1} parent=1 // pred_region
      _
    $region9: #{bart_classifier_forward.1} parent=1 // pred_fallthru
      _
    // Predicated region
    $region10: #{bart_classifier_forward.1} parent=1 // pred_check
      _
    $region11: #{bart_classifier_forward.1} parent=1 // pred_check_branch
      %15 = sbr.rel (0) target = $region13
    $region12: #{bart_classifier_forward.1} parent=1 // pred_region
      %s17 = ssub.s32 15616, 15616
      %18 = vsyncadd [#allocation4], %s17
      %s19 = sshll.u32 [#allocation3], 4
      %s20 = int_to_ptr.vmem [resolvable:$true] %s19
      %25 = dma.hbm_to_vmem [thread:$0]  %s2, 15616, %s20, [#allocation4], 128, 128, 8
    $region13: #{bart_classifier_forward.1} parent=1 // pred_fallthru
      _
    // Predicated region
    $region14: #{bart_classifier_forward.1} parent=1 // pred_check
      _
    $region15: #{bart_classifier_forward.1} parent=1 // pred_check_branch
      %27 = sbr.rel (0) target = $region17
    $region16: #{bart_classifier_forward.1} parent=1 // pred_region
      %28 = dma.done [#allocation4], 15616
    $region17: #{bart_classifier_forward.1} parent=1 // pred_fallthru
      _
    %v29 = vld [vmem:[%s1] sm:$0xff]
    %v30 = vld [vmem:[%s1 + $0x8] sm:$0xff]
    %v31 = vld [vmem:[%s1 + $0x10] sm:$0xff]
    %v32 = vld [vmem:[%s1 + $0x18] sm:$0xff]
    %v33 = vld [vmem:[%s1 + $0x20] sm:$0xff]
    %v34 = vld [vmem:[%s1 + $0x28] sm:$0xff]
    %v35 = vld [vmem:[%s1 + $0x30] sm:$0xff]
    %v36 = vld [vmem:[#allocation3] sm:$0x1]
    %v37 = vld [vmem:[#allocation3 + $0x8] sm:$0x1]
    %vm38 = vcmask 261120
    %v39 = vsel %vm38, %v29, 0.0
    %40 = vadd.xlane.f32.xlu0 %v39
    %v41 = vpop.xlane.xlu0 %40
    %v42 = vsel %vm38, %v30, 0.0
    %43 = vadd.xlane.f32.xlu0 %v42
    %v44 = vpop.xlane.xlu0 %43
    %v45 = vrcp.pop 32.0
    %v46 = vmul.f32 %v41, %v45
    %v47 = vmul.f32 %v44, %v45
    %v48 = vsub.f32 %v29, %v46
    %v49 = vsub.f32 %v30, %v47
    %v50 = vmul.f32 %v48, %v48
    %v51 = vmul.f32 %v49, %v49
    %v52 = vsel %vm38, %v50, 0.0
    %53 = vadd.xlane.f32.xlu0 %v52
    %v54 = vpop.xlane.xlu0 %53
    %v55 = vsel %vm38, %v51, 0.0
    %56 = vadd.xlane.f32.xlu0 %v55
    %v57 = vpop.xlane.xlu0 %56
    %v58 = vmul.f32 %v54, %v45
    %v59 = vmul.f32 %v57, %v45
    %v60 = vadd.f32 %v58, 1e-05
    %v61 = vadd.f32 %v59, 1e-05
    %v62 = vrsqrt.pop %v60
    %v63 = vrsqrt.pop %v61
    %v64 = vmul.f32 %v48, %v62
    %v65 = vmul.f32 %v49, %v63
    %v66 = vlaneseq
    %v67 = vshrl.u32 %v66, 7
    %v68 = vsub.s32 0, %v67
    %v69 = vrot.slane %v36, %v68
    %v70 = vmul.f32 %v64, %v69
    %v71 = vmul.f32 %v65, %v69
    %v72 = vlaneseq
    %v73 = vshrl.u32 %v72, 7
    %v74 = vsub.s32 0, %v73
    %v75 = vrot.slane %v37, %v74
    %v76 = vadd.f32 %v70, %v75
    %v77 = vadd.f32 %v71, %v75
    %v78 = vld [vmem:[#allocation3 + $0x10] sm:$0xff]
    %v79 = vld [vmem:[#allocation3 + $0x18] sm:$0xff]
    %v80 = vld [vmem:[#allocation3 + $0x20] sm:$0xff]
    %v81 = vld [vmem:[#allocation3 + $0x28] sm:$0xff]
    %v82 = vld [vmem:[#allocation3 + $0x70] sm:$0x1]
    %v83 = vlaneseq
    %v84 = vshrl.u32 %v83, 7
    %v85 = vsub.s32 0, %v84
    %v86 = vrot.slane %v82, %v85
    %v88 = vsel %vm38, %v76, 0
    %v91 = vsel %vm38, %v77, 0
    %93 = vmatprep.subr.mxu0 0.0
    %94 = vmatpush1.msra.mxu0 0.0
    %95 = vmatprep.subr.mxu0 0.0
    %96 = vmatpush1.msra.mxu0 0.0
    %97 = vmatprep.subr.mxu0 0.0
    %98 = vmatpush1.msra.mxu0 0.0
    %99 = vmatprep.subr.mxu0 0.0
    %100 = vmatpush1.msra.mxu0 0.0
    %101 = vmatprep.subr.mxu0 0.0
    %102 = vmatpush1.msra.mxu0 0.0
    %103 = vmatprep.subr.mxu0 0.0
    %104 = vmatpush1.msra.mxu0 0.0
    %105 = vmatprep.subr.mxu0 0.0
    %106 = vmatpush1.msra.mxu0 0.0
    %107 = vmatprep.subr.mxu0 0.0
    %108 = vmatpush1.msra.mxu0 0.0
    %109 = vmatprep.subr.mxu0 0.0
    %110 = vmatpush1.msra.mxu0 0.0
    %111 = vmatprep.subr.mxu0 0.0
    %112 = vmatpush1.msra.mxu0 0.0
    %113 = vmatprep.subr.mxu0 0.0
    %114 = vmatpush1.msra.mxu0 0.0
    %115 = vmatprep.subr.mxu0 0.0
    %116 = vmatpush1.msra.mxu0 0.0
    %117 = vmatprep.subr.mxu0 0.0
    %118 = vmatpush1.msra.mxu0 %v81
    %119 = vmatprep.subr.mxu0 0.0
    %120 = vmatpush1.msra.mxu0 %v80
    %121 = vmatprep.subr.mxu0 0.0
    %122 = vmatpush1.msra.mxu0 %v79
    %123 = vmatprep.subr.mxu0 0.0
    %124 = vmatpush1.msra.mxu0 %v78
    %125 = vmatprep.subr.mxu0 0.0
    %126 = vmatpush2.msra.mxu0 0.0
    %127 = vmatprep.subr.mxu0 0.0
    %128 = vmatpush2.msra.mxu0 0.0
    %129 = vmatprep.subr.mxu0 0.0
    %130 = vmatpush2.msra.mxu0 0.0
    %131 = vmatprep.subr.mxu0 0.0
    %132 = vmatpush2.msra.mxu0 0.0
    %133 = vmatprep.subr.mxu0 0.0
    %134 = vmatpush2.msra.mxu0 0.0
    %135 = vmatprep.subr.mxu0 0.0
    %136 = vmatpush2.msra.mxu0 0.0
    %137 = vmatprep.subr.mxu0 0.0
    %138 = vmatpush2.msra.mxu0 0.0
    %139 = vmatprep.subr.mxu0 0.0
    %140 = vmatpush2.msra.mxu0 0.0
    %141 = vmatprep.subr.mxu0 0.0
    %142 = vmatpush2.msra.mxu0 0.0
    %143 = vmatprep.subr.mxu0 0.0
    %144 = vmatpush2.msra.mxu0 0.0
    %145 = vmatprep.subr.mxu0 0.0
    %146 = vmatpush2.msra.mxu0 0.0
    %147 = vmatprep.subr.mxu0 0.0
    %148 = vmatpush2.msra.mxu0 0.0
    %149 = vmatprep.subr.mxu0 0.0
    %150 = vmatpush2.msra.mxu0 0.0
    %151 = vmatprep.subr.mxu0 0.0
    %152 = vmatpush2.msra.mxu0 0.0
    %153 = vmatprep.subr.mxu0 0.0
    %154 = vmatpush2.msra.mxu0 0.0
    %155 = vmatprep.subr.mxu0 0.0
    %156 = vmatpush2.msra.mxu0 0.0
    %157 = vmatprep.mubr.f32.mxu0 0.0
    %158 = vmatmul.mubr.f32.gmra.mxu0 %v88
    %v159 = vpop.f32.mrf.mxu0
    %v160 = vadd.f32 %v86, %v159
    %v161 = vpop.f32.mrf.mxu0
    %162 = vmatprep.mubr.f32.mxu0 0.0
    %163 = vmatmul.mubr.f32.gmra.mxu0 %v91
    %v164 = vpop.f32.mrf.mxu0
    %v165 = vadd.f32 %v86, %v164
    %v166 = vpop.f32.mrf.mxu0
    %167 = vdwg.mxu0
    %v168 = vld [vmem:[#allocation3 + $0x30] sm:$0xff]
    %v169 = vld [vmem:[#allocation3 + $0x38] sm:$0xff]
    %v170 = vld [vmem:[#allocation3 + $0x40] sm:$0xff]
    %v171 = vld [vmem:[#allocation3 + $0x48] sm:$0xff]
    %v172 = vld [vmem:[#allocation3 + $0x78] sm:$0x1]
    %v173 = vlaneseq
    %v174 = vshrl.u32 %v173, 7
    %v175 = vsub.s32 0, %v174
    %v176 = vrot.slane %v172, %v175
    %177 = vmatprep.subr.mxu0 0.0
    %178 = vmatpush1.msra.mxu0 0.0
    %179 = vmatprep.subr.mxu0 0.0
    %180 = vmatpush1.msra.mxu0 0.0
    %181 = vmatprep.subr.mxu0 0.0
    %182 = vmatpush1.msra.mxu0 0.0
    %183 = vmatprep.subr.mxu0 0.0
    %184 = vmatpush1.msra.mxu0 0.0
    %185 = vmatprep.subr.mxu0 0.0
    %186 = vmatpush1.msra.mxu0 0.0
    %187 = vmatprep.subr.mxu0 0.0
    %188 = vmatpush1.msra.mxu0 0.0
    %189 = vmatprep.subr.mxu0 0.0
    %190 = vmatpush1.msra.mxu0 0.0
    %191 = vmatprep.subr.mxu0 0.0
    %192 = vmatpush1.msra.mxu0 0.0
    %193 = vmatprep.subr.mxu0 0.0
    %194 = vmatpush1.msra.mxu0 0.0
    %195 = vmatprep.subr.mxu0 0.0
    %196 = vmatpush1.msra.mxu0 0.0
    %197 = vmatprep.subr.mxu0 0.0
    %198 = vmatpush1.msra.mxu0 0.0
    %199 = vmatprep.subr.mxu0 0.0
    %200 = vmatpush1.msra.mxu0 0.0
    %201 = vmatprep.subr.mxu0 0.0
    %202 = vmatpush1.msra.mxu0 %v171
    %203 = vmatprep.subr.mxu0 0.0
    %204 = vmatpush1.msra.mxu0 %v170
    %205 = vmatprep.subr.mxu0 0.0
    %206 = vmatpush1.msra.mxu0 %v169
    %207 = vmatprep.subr.mxu0 0.0
    %208 = vmatpush1.msra.mxu0 %v168
    %209 = vmatprep.subr.mxu0 0.0
    %210 = vmatpush2.msra.mxu0 0.0
    %211 = vmatprep.subr.mxu0 0.0
    %212 = vmatpush2.msra.mxu0 0.0
    %213 = vmatprep.subr.mxu0 0.0
    %214 = vmatpush2.msra.mxu0 0.0
    %215 = vmatprep.subr.mxu0 0.0
    %216 = vmatpush2.msra.mxu0 0.0
    %217 = vmatprep.subr.mxu0 0.0
    %218 = vmatpush2.msra.mxu0 0.0
    %219 = vmatprep.subr.mxu0 0.0
    %220 = vmatpush2.msra.mxu0 0.0
    %221 = vmatprep.subr.mxu0 0.0
    %222 = vmatpush2.msra.mxu0 0.0
    %223 = vmatprep.subr.mxu0 0.0
    %224 = vmatpush2.msra.mxu0 0.0
    %225 = vmatprep.subr.mxu0 0.0
    %226 = vmatpush2.msra.mxu0 0.0
    %227 = vmatprep.subr.mxu0 0.0
    %228 = vmatpush2.msra.mxu0 0.0
    %229 = vmatprep.subr.mxu0 0.0
    %230 = vmatpush2.msra.mxu0 0.0
    %231 = vmatprep.subr.mxu0 0.0
    %232 = vmatpush2.msra.mxu0 0.0
    %233 = vmatprep.subr.mxu0 0.0
    %234 = vmatpush2.msra.mxu0 0.0
    %235 = vmatprep.subr.mxu0 0.0
    %236 = vmatpush2.msra.mxu0 0.0
    %237 = vmatprep.subr.mxu0 0.0
    %238 = vmatpush2.msra.mxu0 0.0
    %239 = vmatprep.subr.mxu0 0.0
    %240 = vmatpush2.msra.mxu0 0.0
    %241 = vmatprep.mubr.f32.mxu0 0.0
    %242 = vmatmul.mubr.f32.gmra.mxu0 %v88
    %v243 = vpop.f32.mrf.mxu0
    %v244 = vadd.f32 %v176, %v243
    %v245 = vpop.f32.mrf.mxu0
    %246 = vmatprep.mubr.f32.mxu0 0.0
    %247 = vmatmul.mubr.f32.gmra.mxu0 %v91
    %v248 = vpop.f32.mrf.mxu0
    %v249 = vadd.f32 %v176, %v248
    %v250 = vpop.f32.mrf.mxu0
    %251 = vdwg.mxu0
    %v252 = vld [vmem:[#allocation3 + $0x50] sm:$0xff]
    %v253 = vld [vmem:[#allocation3 + $0x58] sm:$0xff]
    %v254 = vld [vmem:[#allocation3 + $0x60] sm:$0xff]
    %v255 = vld [vmem:[#allocation3 + $0x68] sm:$0xff]
    %v256 = vld [vmem:[#allocation3 + $0x80] sm:$0x1]
    %v257 = vlaneseq
    %v258 = vshrl.u32 %v257, 7
    %v259 = vsub.s32 0, %v258
    %v260 = vrot.slane %v256, %v259
    %261 = vmatprep.subr.mxu0 0.0
    %262 = vmatpush1.msra.mxu0 0.0
    %263 = vmatprep.subr.mxu0 0.0
    %264 = vmatpush1.msra.mxu0 0.0
    %265 = vmatprep.subr.mxu0 0.0
    %266 = vmatpush1.msra.mxu0 0.0
    %267 = vmatprep.subr.mxu0 0.0
    %268 = vmatpush1.msra.mxu0 0.0
    %269 = vmatprep.subr.mxu0 0.0
    %270 = vmatpush1.msra.mxu0 0.0
    %271 = vmatprep.subr.mxu0 0.0
    %272 = vmatpush1.msra.mxu0 0.0
    %273 = vmatprep.subr.mxu0 0.0
    %274 = vmatpush1.msra.mxu0 0.0
    %275 = vmatprep.subr.mxu0 0.0
    %276 = vmatpush1.msra.mxu0 0.0
    %277 = vmatprep.subr.mxu0 0.0
    %278 = vmatpush1.msra.mxu0 0.0
    %279 = vmatprep.subr.mxu0 0.0
    %280 = vmatpush1.msra.mxu0 0.0
    %281 = vmatprep.subr.mxu0 0.0
    %282 = vmatpush1.msra.mxu0 0.0
    %283 = vmatprep.subr.mxu0 0.0
    %284 = vmatpush1.msra.mxu0 0.0
    %285 = vmatprep.subr.mxu0 0.0
    %286 = vmatpush1.msra.mxu0 %v255
    %287 = vmatprep.subr.mxu0 0.0
    %288 = vmatpush1.msra.mxu0 %v254
    %289 = vmatprep.subr.mxu0 0.0
    %290 = vmatpush1.msra.mxu0 %v253
    %291 = vmatprep.subr.mxu0 0.0
    %292 = vmatpush1.msra.mxu0 %v252
    %293 = vmatprep.subr.mxu0 0.0
    %294 = vmatpush2.msra.mxu0 0.0
    %295 = vmatprep.subr.mxu0 0.0
    %296 = vmatpush2.msra.mxu0 0.0
    %297 = vmatprep.subr.mxu0 0.0
    %298 = vmatpush2.msra.mxu0 0.0
    %299 = vmatprep.subr.mxu0 0.0
    %300 = vmatpush2.msra.mxu0 0.0
    %301 = vmatprep.subr.mxu0 0.0
    %302 = vmatpush2.msra.mxu0 0.0
    %303 = vmatprep.subr.mxu0 0.0
    %304 = vmatpush2.msra.mxu0 0.0
    %305 = vmatprep.subr.mxu0 0.0
    %306 = vmatpush2.msra.mxu0 0.0
    %307 = vmatprep.subr.mxu0 0.0
    %308 = vmatpush2.msra.mxu0 0.0
    %309 = vmatprep.subr.mxu0 0.0
    %310 = vmatpush2.msra.mxu0 0.0
    %311 = vmatprep.subr.mxu0 0.0
    %312 = vmatpush2.msra.mxu0 0.0
    %313 = vmatprep.subr.mxu0 0.0
    %314 = vmatpush2.msra.mxu0 0.0
    %315 = vmatprep.subr.mxu0 0.0
    %316 = vmatpush2.msra.mxu0 0.0
    %317 = vmatprep.subr.mxu0 0.0
    %318 = vmatpush2.msra.mxu0 0.0
    %319 = vmatprep.subr.mxu0 0.0
    %320 = vmatpush2.msra.mxu0 0.0
    %321 = vmatprep.subr.mxu0 0.0
    %322 = vmatpush2.msra.mxu0 0.0
    %323 = vmatprep.subr.mxu0 0.0
    %324 = vmatpush2.msra.mxu0 0.0
    %325 = vmatprep.mubr.f32.mxu0 0.0
    %326 = vmatmul.mubr.f32.gmra.mxu0 %v88
    %v327 = vpop.f32.mrf.mxu0
    %v328 = vadd.f32 %v260, %v327
    %v329 = vpop.f32.mrf.mxu0
    %330 = vmatprep.mubr.f32.mxu0 0.0
    %331 = vmatmul.mubr.f32.gmra.mxu0 %v91
    %v332 = vpop.f32.mrf.mxu0
    %v333 = vadd.f32 %v260, %v332
    %v334 = vpop.f32.mrf.mxu0
    %335 = vdwg.mxu0
    %vm336 = vcmask 130048
    %v338 = vsel %vm336, %v160, 0
    %v341 = vsel %vm336, %v165, 0
    %v344 = vsel %vm336, %v244, 0
    %v347 = vsel %vm336, %v249, 0
    %349 = vmatprep.subr.mxu0 0.0
    %350 = vmatpush1.xpose.msra.mxu0 0.0
    %351 = vmatprep.subr.mxu0 0.0
    %352 = vmatpush1.xpose.msra.mxu0 0.0
    %353 = vmatprep.subr.mxu0 0.0
    %354 = vmatpush1.xpose.msra.mxu0 0.0
    %355 = vmatprep.subr.mxu0 0.0
    %356 = vmatpush1.xpose.msra.mxu0 0.0
    %357 = vmatprep.subr.mxu0 0.0
    %358 = vmatpush1.xpose.msra.mxu0 0.0
    %359 = vmatprep.subr.mxu0 0.0
    %360 = vmatpush1.xpose.msra.mxu0 0.0
    %361 = vmatprep.subr.mxu0 0.0
    %362 = vmatpush1.xpose.msra.mxu0 0.0
    %363 = vmatprep.subr.mxu0 0.0
    %364 = vmatpush1.xpose.msra.mxu0 0.0
    %365 = vmatprep.subr.mxu0 0.0
    %366 = vmatpush1.xpose.msra.mxu0 0.0
    %367 = vmatprep.subr.mxu0 0.0
    %368 = vmatpush1.xpose.msra.mxu0 0.0
    %369 = vmatprep.subr.mxu0 0.0
    %370 = vmatpush1.xpose.msra.mxu0 0.0
    %371 = vmatprep.subr.mxu0 0.0
    %372 = vmatpush1.xpose.msra.mxu0 0.0
    %373 = vmatprep.subr.mxu0 0.0
    %374 = vmatpush1.xpose.msra.mxu0 0.0
    %375 = vmatprep.subr.mxu0 0.0
    %376 = vmatpush1.xpose.msra.mxu0 0.0
    %377 = vmatprep.subr.mxu0 0.0
    %378 = vmatpush1.xpose.msra.mxu0 %v347
    %379 = vmatprep.subr.mxu0 0.0
    %380 = vmatpush1.xpose.msra.mxu0 %v344
    %381 = vmatprep.subr.mxu0 0.0
    %382 = vmatpush2.xpose.msra.mxu0 0.0
    %383 = vmatprep.subr.mxu0 0.0
    %384 = vmatpush2.xpose.msra.mxu0 0.0
    %385 = vmatprep.subr.mxu0 0.0
    %386 = vmatpush2.xpose.msra.mxu0 0.0
    %387 = vmatprep.subr.mxu0 0.0
    %388 = vmatpush2.xpose.msra.mxu0 0.0
    %389 = vmatprep.subr.mxu0 0.0
    %390 = vmatpush2.xpose.msra.mxu0 0.0
    %391 = vmatprep.subr.mxu0 0.0
    %392 = vmatpush2.xpose.msra.mxu0 0.0
    %393 = vmatprep.subr.mxu0 0.0
    %394 = vmatpush2.xpose.msra.mxu0 0.0
    %395 = vmatprep.subr.mxu0 0.0
    %396 = vmatpush2.xpose.msra.mxu0 0.0
    %397 = vmatprep.subr.mxu0 0.0
    %398 = vmatpush2.xpose.msra.mxu0 0.0
    %399 = vmatprep.subr.mxu0 0.0
    %400 = vmatpush2.xpose.msra.mxu0 0.0
    %401 = vmatprep.subr.mxu0 0.0
    %402 = vmatpush2.xpose.msra.mxu0 0.0
    %403 = vmatprep.subr.mxu0 0.0
    %404 = vmatpush2.xpose.msra.mxu0 0.0
    %405 = vmatprep.subr.mxu0 0.0
    %406 = vmatpush2.xpose.msra.mxu0 0.0
    %407 = vmatprep.subr.mxu0 0.0
    %408 = vmatpush2.xpose.msra.mxu0 0.0
    %409 = vmatprep.subr.mxu0 0.0
    %410 = vmatpush2.xpose.msra.mxu0 0.0
    %411 = vmatprep.subr.mxu0 0.0
    %412 = vmatpush2.xpose.msra.mxu0 0.0
    %413 = vmatprep.mubr.f32.mxu0 0.0
    %414 = vmatmul.mubr.f32.gmra.mxu0 %v338
    %v415 = vpop.f32.mrf.mxu0
    %v416 = vadd.f32 %v31, %v415
    %v417 = vpop.f32.mrf.mxu0
    %418 = vmatprep.mubr.f32.mxu0 0.0
    %419 = vmatmul.mubr.f32.gmra.mxu0 %v341
    %v420 = vpop.f32.mrf.mxu0
    %v421 = vadd.f32 %v32, %v420
    %v422 = vpop.f32.mrf.mxu0
    %423 = vdwg.mxu0
    %v424 = vsel %vm336, %v416, -inf
    %425 = vmax.xlane.f32.xlu0 %v424
    %v426 = vpop.xlane.xlu0 %425
    %v427 = vsel %vm336, %v421, -inf
    %428 = vmax.xlane.f32.xlu0 %v427
    %v429 = vpop.xlane.xlu0 %428
    %v430 = vsub.f32 %v416, %v426
    %v431 = vsub.f32 %v421, %v429
    %v432 = vmul.f32 %v430, 1.442695
    %v433 = vpow.pop %v432
    %v434 = vmul.f32 %v431, 1.442695
    %v435 = vpow.pop %v434
    %v436 = vsel %vm336, %v433, 0.0
    %437 = vadd.xlane.f32.xlu0 %v436
    %v438 = vpop.xlane.xlu0 %437
    %v439 = vsel %vm336, %v435, 0.0
    %440 = vadd.xlane.f32.xlu0 %v439
    %v441 = vpop.xlane.xlu0 %440
    %v442 = vrcp.pop %v438
    %v443 = vmul.f32 %v433, %v442
    %v444 = vrcp.pop %v441
    %v445 = vmul.f32 %v435, %v444
    %v447 = vsel %vm336, %v443, 0
    %v450 = vsel %vm336, %v445, 0
    %452 = vmatprep.subr.mxu0 0.0
    %453 = vmatpush1.msra.mxu0 0.0
    %454 = vmatprep.subr.mxu0 0.0
    %455 = vmatpush1.msra.mxu0 0.0
    %456 = vmatprep.subr.mxu0 0.0
    %457 = vmatpush1.msra.mxu0 0.0
    %458 = vmatprep.subr.mxu0 0.0
    %459 = vmatpush1.msra.mxu0 0.0
    %460 = vmatprep.subr.mxu0 0.0
    %461 = vmatpush1.msra.mxu0 0.0
    %462 = vmatprep.subr.mxu0 0.0
    %463 = vmatpush1.msra.mxu0 0.0
    %464 = vmatprep.subr.mxu0 0.0
    %465 = vmatpush1.msra.mxu0 0.0
    %466 = vmatprep.subr.mxu0 0.0
    %467 = vmatpush1.msra.mxu0 0.0
    %468 = vmatprep.subr.mxu0 0.0
    %469 = vmatpush1.msra.mxu0 0.0
    %470 = vmatprep.subr.mxu0 0.0
    %471 = vmatpush1.msra.mxu0 0.0
    %472 = vmatprep.subr.mxu0 0.0
    %473 = vmatpush1.msra.mxu0 0.0
    %474 = vmatprep.subr.mxu0 0.0
    %475 = vmatpush1.msra.mxu0 0.0
    %476 = vmatprep.subr.mxu0 0.0
    %477 = vmatpush1.msra.mxu0 0.0
    %478 = vmatprep.subr.mxu0 0.0
    %479 = vmatpush1.msra.mxu0 0.0
    %480 = vmatprep.subr.mxu0 0.0
    %481 = vmatpush1.msra.mxu0 %v333
    %482 = vmatprep.subr.mxu0 0.0
    %483 = vmatpush1.msra.mxu0 %v328
    %484 = vmatprep.subr.mxu0 0.0
    %485 = vmatpush2.msra.mxu0 0.0
    %486 = vmatprep.subr.mxu0 0.0
    %487 = vmatpush2.msra.mxu0 0.0
    %488 = vmatprep.subr.mxu0 0.0
    %489 = vmatpush2.msra.mxu0 0.0
    %490 = vmatprep.subr.mxu0 0.0
    %491 = vmatpush2.msra.mxu0 0.0
    %492 = vmatprep.subr.mxu0 0.0
    %493 = vmatpush2.msra.mxu0 0.0
    %494 = vmatprep.subr.mxu0 0.0
    %495 = vmatpush2.msra.mxu0 0.0
    %496 = vmatprep.subr.mxu0 0.0
    %497 = vmatpush2.msra.mxu0 0.0
    %498 = vmatprep.subr.mxu0 0.0
    %499 = vmatpush2.msra.mxu0 0.0
    %500 = vmatprep.subr.mxu0 0.0
    %501 = vmatpush2.msra.mxu0 0.0
    %502 = vmatprep.subr.mxu0 0.0
    %503 = vmatpush2.msra.mxu0 0.0
    %504 = vmatprep.subr.mxu0 0.0
    %505 = vmatpush2.msra.mxu0 0.0
    %506 = vmatprep.subr.mxu0 0.0
    %507 = vmatpush2.msra.mxu0 0.0
    %508 = vmatprep.subr.mxu0 0.0
    %509 = vmatpush2.msra.mxu0 0.0
    %510 = vmatprep.subr.mxu0 0.0
    %511 = vmatpush2.msra.mxu0 0.0
    %512 = vmatprep.subr.mxu0 0.0
    %513 = vmatpush2.msra.mxu0 0.0
    %514 = vmatprep.subr.mxu0 0.0
    %515 = vmatpush2.msra.mxu0 0.0
    %516 = vmatprep.mubr.f32.mxu0 0.0
    %517 = vmatmul.mubr.f32.gmra.mxu0 %v447
    %v518 = vpop.f32.mrf.mxu0
    %v519 = vadd.f32 0.0, %v518
    %v520 = vpop.f32.mrf.mxu0
    %521 = vmatprep.mubr.f32.mxu0 0.0
    %522 = vmatmul.mubr.f32.gmra.mxu0 %v450
    %v523 = vpop.f32.mrf.mxu0
    %v524 = vadd.f32 0.0, %v523
    %v525 = vpop.f32.mrf.mxu0
    %526 = vdwg.mxu0
    %v527 = vld [vmem:[#allocation3 + $0x88] sm:$0xff]
    %v528 = vld [vmem:[#allocation3 + $0x90] sm:$0xff]
    %v529 = vld [vmem:[#allocation3 + $0x98] sm:$0xff]
    %v530 = vld [vmem:[#allocation3 + $0xa0] sm:$0xff]
    %v531 = vld [vmem:[#allocation3 + $0xa8] sm:$0xff]
    %v532 = vld [vmem:[#allocation3 + $0xb0] sm:$0xff]
    %v533 = vld [vmem:[#allocation3 + $0xf8] sm:$0x1]
    %v534 = vlaneseq
    %v535 = vshrl.u32 %v534, 7
    %v536 = vsub.s32 0, %v535
    %v537 = vrot.slane %v533, %v536
    %538 = vmatprep.subr.mxu0 0.0
    %539 = vmatpush1.msra.mxu0 0.0
    %540 = vmatprep.subr.mxu0 0.0
    %541 = vmatpush1.msra.mxu0 0.0
    %542 = vmatprep.subr.mxu0 0.0
    %543 = vmatpush1.msra.mxu0 0.0
    %544 = vmatprep.subr.mxu0 0.0
    %545 = vmatpush1.msra.mxu0 0.0
    %546 = vmatprep.subr.mxu0 0.0
    %547 = vmatpush1.msra.mxu0 0.0
    %548 = vmatprep.subr.mxu0 0.0
    %549 = vmatpush1.msra.mxu0 0.0
    %550 = vmatprep.subr.mxu0 0.0
    %551 = vmatpush1.msra.mxu0 0.0
    %552 = vmatprep.subr.mxu0 0.0
    %553 = vmatpush1.msra.mxu0 0.0
    %554 = vmatprep.subr.mxu0 0.0
    %555 = vmatpush1.msra.mxu0 0.0
    %556 = vmatprep.subr.mxu0 0.0
    %557 = vmatpush1.msra.mxu0 0.0
    %558 = vmatprep.subr.mxu0 0.0
    %559 = vmatpush1.msra.mxu0 0.0
    %560 = vmatprep.subr.mxu0 0.0
    %561 = vmatpush1.msra.mxu0 0.0
    %562 = vmatprep.subr.mxu0 0.0
    %563 = vmatpush1.msra.mxu0 %v532
    %564 = vmatprep.subr.mxu0 0.0
    %565 = vmatpush1.msra.mxu0 %v531
    %566 = vmatprep.subr.mxu0 0.0
    %567 = vmatpush1.msra.mxu0 %v530
    %568 = vmatprep.subr.mxu0 0.0
    %569 = vmatpush1.msra.mxu0 %v529
    %570 = vmatprep.subr.mxu0 0.0
    %571 = vmatpush2.msra.mxu0 0.0
    %572 = vmatprep.subr.mxu0 0.0
    %573 = vmatpush2.msra.mxu0 0.0
    %574 = vmatprep.subr.mxu0 0.0
    %575 = vmatpush2.msra.mxu0 0.0
    %576 = vmatprep.subr.mxu0 0.0
    %577 = vmatpush2.msra.mxu0 0.0
    %578 = vmatprep.subr.mxu0 0.0
    %579 = vmatpush2.msra.mxu0 0.0
    %580 = vmatprep.subr.mxu0 0.0
    %581 = vmatpush2.msra.mxu0 0.0
    %582 = vmatprep.subr.mxu0 0.0
    %583 = vmatpush2.msra.mxu0 0.0
    %584 = vmatprep.subr.mxu0 0.0
    %585 = vmatpush2.msra.mxu0 0.0
    %586 = vmatprep.subr.mxu0 0.0
    %587 = vmatpush2.msra.mxu0 0.0
    %588 = vmatprep.subr.mxu0 0.0
    %589 = vmatpush2.msra.mxu0 0.0
    %590 = vmatprep.subr.mxu0 0.0
    %591 = vmatpush2.msra.mxu0 0.0
    %592 = vmatprep.subr.mxu0 0.0
    %593 = vmatpush2.msra.mxu0 0.0
    %594 = vmatprep.subr.mxu0 0.0
    %595 = vmatpush2.msra.mxu0 0.0
    %596 = vmatprep.subr.mxu0 0.0
    %597 = vmatpush2.msra.mxu0 0.0
    %598 = vmatprep.subr.mxu0 0.0
    %599 = vmatpush2.msra.mxu0 0.0
    %600 = vmatprep.subr.mxu0 0.0
    %601 = vmatpush2.msra.mxu0 0.0
    %602 = vmatprep.mubr.f32.mxu0 0.0
    %603 = vmatmul.mubr.f32.gmra.mxu0 %v88
    %v604 = vpop.f32.mrf.mxu0
    %v605 = vadd.f32 %v537, %v604
    %v606 = vpop.f32.mrf.mxu0
    %607 = vmatprep.mubr.f32.mxu0 0.0
    %608 = vmatmul.mubr.f32.gmra.mxu0 %v91
    %v609 = vpop.f32.mrf.mxu0
    %v610 = vadd.f32 %v537, %v609
    %v611 = vpop.f32.mrf.mxu0
    %612 = vdwg.mxu0
    %v613 = vld [vmem:[#allocation3 + $0xb8] sm:$0xff]
    %v614 = vld [vmem:[#allocation3 + $0xc0] sm:$0xff]
    %v615 = vld [vmem:[#allocation3 + $0xc8] sm:$0xff]
    %v616 = vld [vmem:[#allocation3 + $0xd0] sm:$0xff]
    %v617 = vld [vmem:[#allocation3 + $0x100] sm:$0x1]
    %v618 = vlaneseq
    %v619 = vshrl.u32 %v618, 7
    %v620 = vsub.s32 0, %v619
    %v621 = vrot.slane %v617, %v620
    %622 = vmatprep.subr.mxu0 0.0
    %623 = vmatpush1.msra.mxu0 0.0
    %624 = vmatprep.subr.mxu0 0.0
    %625 = vmatpush1.msra.mxu0 0.0
    %626 = vmatprep.subr.mxu0 0.0
    %627 = vmatpush1.msra.mxu0 0.0
    %628 = vmatprep.subr.mxu0 0.0
    %629 = vmatpush1.msra.mxu0 0.0
    %630 = vmatprep.subr.mxu0 0.0
    %631 = vmatpush1.msra.mxu0 0.0
    %632 = vmatprep.subr.mxu0 0.0
    %633 = vmatpush1.msra.mxu0 0.0
    %634 = vmatprep.subr.mxu0 0.0
    %635 = vmatpush1.msra.mxu0 0.0
    %636 = vmatprep.subr.mxu0 0.0
    %637 = vmatpush1.msra.mxu0 0.0
    %638 = vmatprep.subr.mxu0 0.0
    %639 = vmatpush1.msra.mxu0 0.0
    %640 = vmatprep.subr.mxu0 0.0
    %641 = vmatpush1.msra.mxu0 0.0
    %642 = vmatprep.subr.mxu0 0.0
    %643 = vmatpush1.msra.mxu0 0.0
    %644 = vmatprep.subr.mxu0 0.0
    %645 = vmatpush1.msra.mxu0 0.0
    %646 = vmatprep.subr.mxu0 0.0
    %647 = vmatpush1.msra.mxu0 %v616
    %648 = vmatprep.subr.mxu0 0.0
    %649 = vmatpush1.msra.mxu0 %v615
    %650 = vmatprep.subr.mxu0 0.0
    %651 = vmatpush1.msra.mxu0 %v614
    %652 = vmatprep.subr.mxu0 0.0
    %653 = vmatpush1.msra.mxu0 %v613
    %654 = vmatprep.subr.mxu0 0.0
    %655 = vmatpush2.msra.mxu0 0.0
    %656 = vmatprep.subr.mxu0 0.0
    %657 = vmatpush2.msra.mxu0 0.0
    %658 = vmatprep.subr.mxu0 0.0
    %659 = vmatpush2.msra.mxu0 0.0
    %660 = vmatprep.subr.mxu0 0.0
    %661 = vmatpush2.msra.mxu0 0.0
    %662 = vmatprep.subr.mxu0 0.0
    %663 = vmatpush2.msra.mxu0 0.0
    %664 = vmatprep.subr.mxu0 0.0
    %665 = vmatpush2.msra.mxu0 0.0
    %666 = vmatprep.subr.mxu0 0.0
    %667 = vmatpush2.msra.mxu0 0.0
    %668 = vmatprep.subr.mxu0 0.0
    %669 = vmatpush2.msra.mxu0 0.0
    %670 = vmatprep.subr.mxu0 0.0
    %671 = vmatpush2.msra.mxu0 0.0
    %672 = vmatprep.subr.mxu0 0.0
    %673 = vmatpush2.msra.mxu0 0.0
    %674 = vmatprep.subr.mxu0 0.0
    %675 = vmatpush2.msra.mxu0 0.0
    %676 = vmatprep.subr.mxu0 0.0
    %677 = vmatpush2.msra.mxu0 0.0
    %678 = vmatprep.subr.mxu0 0.0
    %679 = vmatpush2.msra.mxu0 0.0
    %680 = vmatprep.subr.mxu0 0.0
    %681 = vmatpush2.msra.mxu0 0.0
    %682 = vmatprep.subr.mxu0 0.0
    %683 = vmatpush2.msra.mxu0 0.0
    %684 = vmatprep.subr.mxu0 0.0
    %685 = vmatpush2.msra.mxu0 0.0
    %686 = vmatprep.mubr.f32.mxu0 0.0
    %687 = vmatmul.mubr.f32.gmra.mxu0 %v88
    %v688 = vpop.f32.mrf.mxu0
    %v689 = vadd.f32 %v621, %v688
    %v690 = vpop.f32.mrf.mxu0
    %691 = vmatprep.mubr.f32.mxu0 0.0
    %692 = vmatmul.mubr.f32.gmra.mxu0 %v91
    %v693 = vpop.f32.mrf.mxu0
    %v694 = vadd.f32 %v621, %v693
    %v695 = vpop.f32.mrf.mxu0
    %696 = vdwg.mxu0
    %v697 = vld [vmem:[#allocation3 + $0xd8] sm:$0xff]
    %v698 = vld [vmem:[#allocation3 + $0xe0] sm:$0xff]
    %v699 = vld [vmem:[#allocation3 + $0xe8] sm:$0xff]
    %v700 = vld [vmem:[#allocation3 + $0xf0] sm:$0xff]
    %v701 = vld [vmem:[#allocation3 + $0x108] sm:$0x1]
    %v702 = vlaneseq
    %v703 = vshrl.u32 %v702, 7
    %v704 = vsub.s32 0, %v703
    %v705 = vrot.slane %v701, %v704
    %706 = vmatprep.subr.mxu0 0.0
    %707 = vmatpush1.msra.mxu0 0.0
    %708 = vmatprep.subr.mxu0 0.0
    %709 = vmatpush1.msra.mxu0 0.0
    %710 = vmatprep.subr.mxu0 0.0
    %711 = vmatpush1.msra.mxu0 0.0
    %712 = vmatprep.subr.mxu0 0.0
    %713 = vmatpush1.msra.mxu0 0.0
    %714 = vmatprep.subr.mxu0 0.0
    %715 = vmatpush1.msra.mxu0 0.0
    %716 = vmatprep.subr.mxu0 0.0
    %717 = vmatpush1.msra.mxu0 0.0
    %718 = vmatprep.subr.mxu0 0.0
    %719 = vmatpush1.msra.mxu0 0.0
    %720 = vmatprep.subr.mxu0 0.0
    %721 = vmatpush1.msra.mxu0 0.0
    %722 = vmatprep.subr.mxu0 0.0
    %723 = vmatpush1.msra.mxu0 0.0
    %724 = vmatprep.subr.mxu0 0.0
    %725 = vmatpush1.msra.mxu0 0.0
    %726 = vmatprep.subr.mxu0 0.0
    %727 = vmatpush1.msra.mxu0 0.0
    %728 = vmatprep.subr.mxu0 0.0
    %729 = vmatpush1.msra.mxu0 0.0
    %730 = vmatprep.subr.mxu0 0.0
    %731 = vmatpush1.msra.mxu0 %v700
    %732 = vmatprep.subr.mxu0 0.0
    %733 = vmatpush1.msra.mxu0 %v699
    %734 = vmatprep.subr.mxu0 0.0
    %735 = vmatpush1.msra.mxu0 %v698
    %736 = vmatprep.subr.mxu0 0.0
    %737 = vmatpush1.msra.mxu0 %v697
    %738 = vmatprep.subr.mxu0 0.0
    %739 = vmatpush2.msra.mxu0 0.0
    %740 = vmatprep.subr.mxu0 0.0
    %741 = vmatpush2.msra.mxu0 0.0
    %742 = vmatprep.subr.mxu0 0.0
    %743 = vmatpush2.msra.mxu0 0.0
    %744 = vmatprep.subr.mxu0 0.0
    %745 = vmatpush2.msra.mxu0 0.0
    %746 = vmatprep.subr.mxu0 0.0
    %747 = vmatpush2.msra.mxu0 0.0
    %748 = vmatprep.subr.mxu0 0.0
    %749 = vmatpush2.msra.mxu0 0.0
    %750 = vmatprep.subr.mxu0 0.0
    %751 = vmatpush2.msra.mxu0 0.0
    %752 = vmatprep.subr.mxu0 0.0
    %753 = vmatpush2.msra.mxu0 0.0
    %754 = vmatprep.subr.mxu0 0.0
    %755 = vmatpush2.msra.mxu0 0.0
    %756 = vmatprep.subr.mxu0 0.0
    %757 = vmatpush2.msra.mxu0 0.0
    %758 = vmatprep.subr.mxu0 0.0
    %759 = vmatpush2.msra.mxu0 0.0
    %760 = vmatprep.subr.mxu0 0.0
    %761 = vmatpush2.msra.mxu0 0.0
    %762 = vmatprep.subr.mxu0 0.0
    %763 = vmatpush2.msra.mxu0 0.0
    %764 = vmatprep.subr.mxu0 0.0
    %765 = vmatpush2.msra.mxu0 0.0
    %766 = vmatprep.subr.mxu0 0.0
    %767 = vmatpush2.msra.mxu0 0.0
    %768 = vmatprep.subr.mxu0 0.0
    %769 = vmatpush2.msra.mxu0 0.0
    %770 = vmatprep.mubr.f32.mxu0 0.0
    %771 = vmatmul.mubr.f32.gmra.mxu0 %v88
    %v772 = vpop.f32.mrf.mxu0
    %v773 = vadd.f32 %v705, %v772
    %v774 = vpop.f32.mrf.mxu0
    %775 = vmatprep.mubr.f32.mxu0 0.0
    %776 = vmatmul.mubr.f32.gmra.mxu0 %v91
    %v777 = vpop.f32.mrf.mxu0
    %v778 = vadd.f32 %v705, %v777
    %v779 = vpop.f32.mrf.mxu0
    %780 = vdwg.mxu0
    %v782 = vsel %vm336, %v605, 0
    %v785 = vsel %vm336, %v610, 0
    %v788 = vsel %vm336, %v689, 0
    %v791 = vsel %vm336, %v694, 0
    %793 = vmatprep.subr.mxu0 0.0
    %794 = vmatpush1.xpose.msra.mxu0 0.0
    %795 = vmatprep.subr.mxu0 0.0
    %796 = vmatpush1.xpose.msra.mxu0 0.0
    %797 = vmatprep.subr.mxu0 0.0
    %798 = vmatpush1.xpose.msra.mxu0 0.0
    %799 = vmatprep.subr.mxu0 0.0
    %800 = vmatpush1.xpose.msra.mxu0 0.0
    %801 = vmatprep.subr.mxu0 0.0
    %802 = vmatpush1.xpose.msra.mxu0 0.0
    %803 = vmatprep.subr.mxu0 0.0
    %804 = vmatpush1.xpose.msra.mxu0 0.0
    %805 = vmatprep.subr.mxu0 0.0
    %806 = vmatpush1.xpose.msra.mxu0 0.0
    %807 = vmatprep.subr.mxu0 0.0
    %808 = vmatpush1.xpose.msra.mxu0 0.0
    %809 = vmatprep.subr.mxu0 0.0
    %810 = vmatpush1.xpose.msra.mxu0 0.0
    %811 = vmatprep.subr.mxu0 0.0
    %812 = vmatpush1.xpose.msra.mxu0 0.0
    %813 = vmatprep.subr.mxu0 0.0
    %814 = vmatpush1.xpose.msra.mxu0 0.0
    %815 = vmatprep.subr.mxu0 0.0
    %816 = vmatpush1.xpose.msra.mxu0 0.0
    %817 = vmatprep.subr.mxu0 0.0
    %818 = vmatpush1.xpose.msra.mxu0 0.0
    %819 = vmatprep.subr.mxu0 0.0
    %820 = vmatpush1.xpose.msra.mxu0 0.0
    %821 = vmatprep.subr.mxu0 0.0
    %822 = vmatpush1.xpose.msra.mxu0 %v791
    %823 = vmatprep.subr.mxu0 0.0
    %824 = vmatpush1.xpose.msra.mxu0 %v788
    %825 = vmatprep.subr.mxu0 0.0
    %826 = vmatpush2.xpose.msra.mxu0 0.0
    %827 = vmatprep.subr.mxu0 0.0
    %828 = vmatpush2.xpose.msra.mxu0 0.0
    %829 = vmatprep.subr.mxu0 0.0
    %830 = vmatpush2.xpose.msra.mxu0 0.0
    %831 = vmatprep.subr.mxu0 0.0
    %832 = vmatpush2.xpose.msra.mxu0 0.0
    %833 = vmatprep.subr.mxu0 0.0
    %834 = vmatpush2.xpose.msra.mxu0 0.0
    %835 = vmatprep.subr.mxu0 0.0
    %836 = vmatpush2.xpose.msra.mxu0 0.0
    %837 = vmatprep.subr.mxu0 0.0
    %838 = vmatpush2.xpose.msra.mxu0 0.0
    %839 = vmatprep.subr.mxu0 0.0
    %840 = vmatpush2.xpose.msra.mxu0 0.0
    %841 = vmatprep.subr.mxu0 0.0
    %842 = vmatpush2.xpose.msra.mxu0 0.0
    %843 = vmatprep.subr.mxu0 0.0
    %844 = vmatpush2.xpose.msra.mxu0 0.0
    %845 = vmatprep.subr.mxu0 0.0
    %846 = vmatpush2.xpose.msra.mxu0 0.0
    %847 = vmatprep.subr.mxu0 0.0
    %848 = vmatpush2.xpose.msra.mxu0 0.0
    %849 = vmatprep.subr.mxu0 0.0
    %850 = vmatpush2.xpose.msra.mxu0 0.0
    %851 = vmatprep.subr.mxu0 0.0
    %852 = vmatpush2.xpose.msra.mxu0 0.0
    %853 = vmatprep.subr.mxu0 0.0
    %854 = vmatpush2.xpose.msra.mxu0 0.0
    %855 = vmatprep.subr.mxu0 0.0
    %856 = vmatpush2.xpose.msra.mxu0 0.0
    %857 = vmatprep.mubr.f32.mxu0 0.0
    %858 = vmatmul.mubr.f32.gmra.mxu0 %v782
    %v859 = vpop.f32.mrf.mxu0
    %v860 = vadd.f32 %v31, %v859
    %v861 = vpop.f32.mrf.mxu0
    %862 = vmatprep.mubr.f32.mxu0 0.0
    %863 = vmatmul.mubr.f32.gmra.mxu0 %v785
    %v864 = vpop.f32.mrf.mxu0
    %v865 = vadd.f32 %v32, %v864
    %v866 = vpop.f32.mrf.mxu0
    %867 = vdwg.mxu0
    %v868 = vsel %vm336, %v860, -inf
    %869 = vmax.xlane.f32.xlu0 %v868
    %v870 = vpop.xlane.xlu0 %869
    %v871 = vsel %vm336, %v865, -inf
    %872 = vmax.xlane.f32.xlu0 %v871
    %v873 = vpop.xlane.xlu0 %872
    %v874 = vsub.f32 %v860, %v870
    %v875 = vsub.f32 %v865, %v873
    %v876 = vmul.f32 %v874, 1.442695
    %v877 = vpow.pop %v876
    %v878 = vmul.f32 %v875, 1.442695
    %v879 = vpow.pop %v878
    %v880 = vsel %vm336, %v877, 0.0
    %881 = vadd.xlane.f32.xlu0 %v880
    %v882 = vpop.xlane.xlu0 %881
    %v883 = vsel %vm336, %v879, 0.0
    %884 = vadd.xlane.f32.xlu0 %v883
    %v885 = vpop.xlane.xlu0 %884
    %v886 = vrcp.pop %v882
    %v887 = vmul.f32 %v877, %v886
    %v888 = vrcp.pop %v885
    %v889 = vmul.f32 %v879, %v888
    %v891 = vsel %vm336, %v887, 0
    %v894 = vsel %vm336, %v889, 0
    %896 = vmatprep.subr.mxu0 0.0
    %897 = vmatpush1.msra.mxu0 0.0
    %898 = vmatprep.subr.mxu0 0.0
    %899 = vmatpush1.msra.mxu0 0.0
    %900 = vmatprep.subr.mxu0 0.0
    %901 = vmatpush1.msra.mxu0 0.0
    %902 = vmatprep.subr.mxu0 0.0
    %903 = vmatpush1.msra.mxu0 0.0
    %904 = vmatprep.subr.mxu0 0.0
    %905 = vmatpush1.msra.mxu0 0.0
    %906 = vmatprep.subr.mxu0 0.0
    %907 = vmatpush1.msra.mxu0 0.0
    %908 = vmatprep.subr.mxu0 0.0
    %909 = vmatpush1.msra.mxu0 0.0
    %910 = vmatprep.subr.mxu0 0.0
    %911 = vmatpush1.msra.mxu0 0.0
    %912 = vmatprep.subr.mxu0 0.0
    %913 = vmatpush1.msra.mxu0 0.0
    %914 = vmatprep.subr.mxu0 0.0
    %915 = vmatpush1.msra.mxu0 0.0
    %916 = vmatprep.subr.mxu0 0.0
    %917 = vmatpush1.msra.mxu0 0.0
    %918 = vmatprep.subr.mxu0 0.0
    %919 = vmatpush1.msra.mxu0 0.0
    %920 = vmatprep.subr.mxu0 0.0
    %921 = vmatpush1.msra.mxu0 0.0
    %922 = vmatprep.subr.mxu0 0.0
    %923 = vmatpush1.msra.mxu0 0.0
    %924 = vmatprep.subr.mxu0 0.0
    %925 = vmatpush1.msra.mxu0 %v778
    %926 = vmatprep.subr.mxu0 0.0
    %927 = vmatpush1.msra.mxu0 %v773
    %928 = vmatprep.subr.mxu0 0.0
    %929 = vmatpush2.msra.mxu0 0.0
    %930 = vmatprep.subr.mxu0 0.0
    %931 = vmatpush2.msra.mxu0 0.0
    %932 = vmatprep.subr.mxu0 0.0
    %933 = vmatpush2.msra.mxu0 0.0
    %934 = vmatprep.subr.mxu0 0.0
    %935 = vmatpush2.msra.mxu0 0.0
    %936 = vmatprep.subr.mxu0 0.0
    %937 = vmatpush2.msra.mxu0 0.0
    %938 = vmatprep.subr.mxu0 0.0
    %939 = vmatpush2.msra.mxu0 0.0
    %940 = vmatprep.subr.mxu0 0.0
    %941 = vmatpush2.msra.mxu0 0.0
    %942 = vmatprep.subr.mxu0 0.0
    %943 = vmatpush2.msra.mxu0 0.0
    %944 = vmatprep.subr.mxu0 0.0
    %945 = vmatpush2.msra.mxu0 0.0
    %946 = vmatprep.subr.mxu0 0.0
    %947 = vmatpush2.msra.mxu0 0.0
    %948 = vmatprep.subr.mxu0 0.0
    %949 = vmatpush2.msra.mxu0 0.0
    %950 = vmatprep.subr.mxu0 0.0
    %951 = vmatpush2.msra.mxu0 0.0
    %952 = vmatprep.subr.mxu0 0.0
    %953 = vmatpush2.msra.mxu0 0.0
    %954 = vmatprep.subr.mxu0 0.0
    %955 = vmatpush2.msra.mxu0 0.0
    %956 = vmatprep.subr.mxu0 0.0
    %957 = vmatpush2.msra.mxu0 0.0
    %958 = vmatprep.subr.mxu0 0.0
    %959 = vmatpush2.msra.mxu0 0.0
    %960 = vmatprep.mubr.f32.mxu0 0.0
    %961 = vmatmul.mubr.f32.gmra.mxu0 %v891
    %v962 = vpop.f32.mrf.mxu0
    %v963 = vadd.f32 0.0, %v962
    %v964 = vpop.f32.mrf.mxu0
    %965 = vmatprep.mubr.f32.mxu0 0.0
    %966 = vmatmul.mubr.f32.gmra.mxu0 %v894
    %v967 = vpop.f32.mrf.mxu0
    %v968 = vadd.f32 0.0, %v967
    %v969 = vpop.f32.mrf.mxu0
    %970 = vdwg.mxu0
    %v971 = vld [vmem:[#allocation3 + $0x110] sm:$0xff]
    %v972 = vld [vmem:[#allocation3 + $0x118] sm:$0xff]
    %v974 = vsel %vm336, %v963, 0
    %v977 = vsel %vm336, %v968, 0
    %979 = vmatprep.subr.mxu0 0.0
    %980 = vmatpush1.msra.mxu0 0.0
    %981 = vmatprep.subr.mxu0 0.0
    %982 = vmatpush1.msra.mxu0 0.0
    %983 = vmatprep.subr.mxu0 0.0
    %984 = vmatpush1.msra.mxu0 0.0
    %985 = vmatprep.subr.mxu0 0.0
    %986 = vmatpush1.msra.mxu0 0.0
    %987 = vmatprep.subr.mxu0 0.0
    %988 = vmatpush1.msra.mxu0 0.0
    %989 = vmatprep.subr.mxu0 0.0
    %990 = vmatpush1.msra.mxu0 0.0
    %991 = vmatprep.subr.mxu0 0.0
    %992 = vmatpush1.msra.mxu0 0.0
    %993 = vmatprep.subr.mxu0 0.0
    %994 = vmatpush1.msra.mxu0 0.0
    %995 = vmatprep.subr.mxu0 0.0
    %996 = vmatpush1.msra.mxu0 0.0
    %997 = vmatprep.subr.mxu0 0.0
    %998 = vmatpush1.msra.mxu0 0.0
    %999 = vmatprep.subr.mxu0 0.0
    %1000 = vmatpush1.msra.mxu0 0.0
    %1001 = vmatprep.subr.mxu0 0.0
    %1002 = vmatpush1.msra.mxu0 0.0
    %1003 = vmatprep.subr.mxu0 0.0
    %1004 = vmatpush1.msra.mxu0 0.0
    %1005 = vmatprep.subr.mxu0 0.0
    %1006 = vmatpush1.msra.mxu0 0.0
    %1007 = vmatprep.subr.mxu0 0.0
    %1008 = vmatpush1.msra.mxu0 %v972
    %1009 = vmatprep.subr.mxu0 0.0
    %1010 = vmatpush1.msra.mxu0 %v971
    %1011 = vmatprep.subr.mxu0 0.0
    %1012 = vmatpush2.msra.mxu0 0.0
    %1013 = vmatprep.subr.mxu0 0.0
    %1014 = vmatpush2.msra.mxu0 0.0
    %1015 = vmatprep.subr.mxu0 0.0
    %1016 = vmatpush2.msra.mxu0 0.0
    %1017 = vmatprep.subr.mxu0 0.0
    %1018 = vmatpush2.msra.mxu0 0.0
    %1019 = vmatprep.subr.mxu0 0.0
    %1020 = vmatpush2.msra.mxu0 0.0
    %1021 = vmatprep.subr.mxu0 0.0
    %1022 = vmatpush2.msra.mxu0 0.0
    %1023 = vmatprep.subr.mxu0 0.0
    %1024 = vmatpush2.msra.mxu0 0.0
    %1025 = vmatprep.subr.mxu0 0.0
    %1026 = vmatpush2.msra.mxu0 0.0
    %1027 = vmatprep.subr.mxu0 0.0
    %1028 = vmatpush2.msra.mxu0 0.0
    %1029 = vmatprep.subr.mxu0 0.0
    %1030 = vmatpush2.msra.mxu0 0.0
    %1031 = vmatprep.subr.mxu0 0.0
    %1032 = vmatpush2.msra.mxu0 0.0
    %1033 = vmatprep.subr.mxu0 0.0
    %1034 = vmatpush2.msra.mxu0 0.0
    %1035 = vmatprep.subr.mxu0 0.0
    %1036 = vmatpush2.msra.mxu0 0.0
    %1037 = vmatprep.subr.mxu0 0.0
    %1038 = vmatpush2.msra.mxu0 0.0
    %1039 = vmatprep.subr.mxu0 0.0
    %1040 = vmatpush2.msra.mxu0 0.0
    %1041 = vmatprep.subr.mxu0 0.0
    %1042 = vmatpush2.msra.mxu0 0.0
    %1043 = vmatprep.mubr.f32.mxu0 0.0
    %1044 = vmatmul.mubr.f32.gmra.mxu0 %v974
    %v1045 = vpop.f32.mrf.mxu0
    %v1046 = vadd.f32 0.0, %v1045
    %v1047 = vpop.f32.mrf.mxu0
    %1048 = vmatprep.mubr.f32.mxu0 0.0
    %1049 = vmatmul.mubr.f32.gmra.mxu0 %v977
    %v1050 = vpop.f32.mrf.mxu0
    %v1051 = vadd.f32 0.0, %v1050
    %v1052 = vpop.f32.mrf.mxu0
    %1053 = vdwg.mxu0
    %v1055 = vsel %vm336, %v519, 0
    %v1058 = vsel %vm336, %v524, 0
    %1060 = vmatprep.subr.mxu0 0.0
    %1061 = vmatpush1.msra.mxu0 0.0
    %1062 = vmatprep.subr.mxu0 0.0
    %1063 = vmatpush1.msra.mxu0 0.0
    %1064 = vmatprep.subr.mxu0 0.0
    %1065 = vmatpush1.msra.mxu0 0.0
    %1066 = vmatprep.subr.mxu0 0.0
    %1067 = vmatpush1.msra.mxu0 0.0
    %1068 = vmatprep.subr.mxu0 0.0
    %1069 = vmatpush1.msra.mxu0 0.0
    %1070 = vmatprep.subr.mxu0 0.0
    %1071 = vmatpush1.msra.mxu0 0.0
    %1072 = vmatprep.subr.mxu0 0.0
    %1073 = vmatpush1.msra.mxu0 0.0
    %1074 = vmatprep.subr.mxu0 0.0
    %1075 = vmatpush1.msra.mxu0 0.0
    %1076 = vmatprep.subr.mxu0 0.0
    %1077 = vmatpush1.msra.mxu0 0.0
    %1078 = vmatprep.subr.mxu0 0.0
    %1079 = vmatpush1.msra.mxu0 0.0
    %1080 = vmatprep.subr.mxu0 0.0
    %1081 = vmatpush1.msra.mxu0 0.0
    %1082 = vmatprep.subr.mxu0 0.0
    %1083 = vmatpush1.msra.mxu0 0.0
    %1084 = vmatprep.subr.mxu0 0.0
    %1085 = vmatpush1.msra.mxu0 0.0
    %1086 = vmatprep.subr.mxu0 0.0
    %1087 = vmatpush1.msra.mxu0 0.0
    %1088 = vmatprep.subr.mxu0 0.0
    %1089 = vmatpush1.msra.mxu0 %v528
    %1090 = vmatprep.subr.mxu0 0.0
    %1091 = vmatpush1.msra.mxu0 %v527
    %1092 = vmatprep.subr.mxu0 0.0
    %1093 = vmatpush2.msra.mxu0 0.0
    %1094 = vmatprep.subr.mxu0 0.0
    %1095 = vmatpush2.msra.mxu0 0.0
    %1096 = vmatprep.subr.mxu0 0.0
    %1097 = vmatpush2.msra.mxu0 0.0
    %1098 = vmatprep.subr.mxu0 0.0
    %1099 = vmatpush2.msra.mxu0 0.0
    %1100 = vmatprep.subr.mxu0 0.0
    %1101 = vmatpush2.msra.mxu0 0.0
    %1102 = vmatprep.subr.mxu0 0.0
    %1103 = vmatpush2.msra.mxu0 0.0
    %1104 = vmatprep.subr.mxu0 0.0
    %1105 = vmatpush2.msra.mxu0 0.0
    %1106 = vmatprep.subr.mxu0 0.0
    %1107 = vmatpush2.msra.mxu0 0.0
    %1108 = vmatprep.subr.mxu0 0.0
    %1109 = vmatpush2.msra.mxu0 0.0
    %1110 = vmatprep.subr.mxu0 0.0
    %1111 = vmatpush2.msra.mxu0 0.0
    %1112 = vmatprep.subr.mxu0 0.0
    %1113 = vmatpush2.msra.mxu0 0.0
    %1114 = vmatprep.subr.mxu0 0.0
    %1115 = vmatpush2.msra.mxu0 0.0
    %1116 = vmatprep.subr.mxu0 0.0
    %1117 = vmatpush2.msra.mxu0 0.0
    %1118 = vmatprep.subr.mxu0 0.0
    %1119 = vmatpush2.msra.mxu0 0.0
    %1120 = vmatprep.subr.mxu0 0.0
    %1121 = vmatpush2.msra.mxu0 0.0
    %1122 = vmatprep.subr.mxu0 0.0
    %1123 = vmatpush2.msra.mxu0 0.0
    %1124 = vmatprep.mubr.f32.mxu0 0.0
    %1125 = vmatmul.mubr.f32.gmra.mxu0 %v1055
    %v1126 = vpop.f32.mrf.mxu0
    %v1127 = vadd.f32 %v1046, %v1126
    %v1128 = vpop.f32.mrf.mxu0
    %1129 = vmatprep.mubr.f32.mxu0 0.0
    %1130 = vmatmul.mubr.f32.gmra.mxu0 %v1058
    %v1131 = vpop.f32.mrf.mxu0
    %v1132 = vadd.f32 %v1051, %v1131
    %v1133 = vpop.f32.mrf.mxu0
    %1134 = vdwg.mxu0
    %v1135 = vld [vmem:[#allocation3 + $0x120] sm:$0x1]
    %v1136 = vlaneseq
    %v1137 = vshrl.u32 %v1136, 7
    %v1138 = vsub.s32 0, %v1137
    %v1139 = vrot.slane %v1135, %v1138
    %v1140 = vadd.f32 %v1127, %v1139
    %v1141 = vadd.f32 %v1132, %v1139
    %v1142 = vadd.f32 %v76, %v1140
    %v1143 = vadd.f32 %v77, %v1141
    %v1144 = vld [vmem:[#allocation3 + $0x128] sm:$0x1]
    %v1145 = vld [vmem:[#allocation3 + $0x130] sm:$0x1]
    %v1146 = vsel %vm38, %v1142, 0.0
    %1147 = vadd.xlane.f32.xlu0 %v1146
    %v1148 = vpop.xlane.xlu0 %1147
    %v1149 = vsel %vm38, %v1143, 0.0
    %1150 = vadd.xlane.f32.xlu0 %v1149
    %v1151 = vpop.xlane.xlu0 %1150
    %v1152 = vmul.f32 %v1148, %v45
    %v1153 = vmul.f32 %v1151, %v45
    %v1154 = vsub.f32 %v1142, %v1152
    %v1155 = vsub.f32 %v1143, %v1153
    %v1156 = vmul.f32 %v1154, %v1154
    %v1157 = vmul.f32 %v1155, %v1155
    %v1158 = vsel %vm38, %v1156, 0.0
    %1159 = vadd.xlane.f32.xlu0 %v1158
    %v1160 = vpop.xlane.xlu0 %1159
    %v1161 = vsel %vm38, %v1157, 0.0
    %1162 = vadd.xlane.f32.xlu0 %v1161
    %v1163 = vpop.xlane.xlu0 %1162
    %v1164 = vmul.f32 %v1160, %v45
    %v1165 = vmul.f32 %v1163, %v45
    %v1166 = vadd.f32 %v1164, 1e-05
    %v1167 = vadd.f32 %v1165, 1e-05
    %v1168 = vrsqrt.pop %v1166
    %v1169 = vrsqrt.pop %v1167
    %v1170 = vmul.f32 %v1154, %v1168
    %v1171 = vmul.f32 %v1155, %v1169
    %v1172 = vlaneseq
    %v1173 = vshrl.u32 %v1172, 7
    %v1174 = vsub.s32 0, %v1173
    %v1175 = vrot.slane %v1144, %v1174
    %v1176 = vmul.f32 %v1170, %v1175
    %v1177 = vmul.f32 %v1171, %v1175
    %v1178 = vlaneseq
    %v1179 = vshrl.u32 %v1178, 7
    %v1180 = vsub.s32 0, %v1179
    %v1181 = vrot.slane %v1145, %v1180
    %v1182 = vadd.f32 %v1176, %v1181
    %v1183 = vadd.f32 %v1177, %v1181
    %v1184 = vld [vmem:[#allocation3 + $0x138] sm:$0xff]
    %v1185 = vld [vmem:[#allocation3 + $0x140] sm:$0xff]
    %v1186 = vld [vmem:[#allocation3 + $0x148] sm:$0xff]
    %v1187 = vld [vmem:[#allocation3 + $0x150] sm:$0xff]
    %v1188 = vld [vmem:[#allocation3 + $0x158] sm:$0x1]
    %v1189 = vlaneseq
    %v1190 = vshrl.u32 %v1189, 7
    %v1191 = vsub.s32 0, %v1190
    %v1192 = vrot.slane %v1188, %v1191
    %v1194 = vsel %vm38, %v1182, 0
    %v1197 = vsel %vm38, %v1183, 0
    %1199 = vmatprep.subr.mxu0 0.0
    %1200 = vmatpush1.msra.mxu0 0.0
    %1201 = vmatprep.subr.mxu0 0.0
    %1202 = vmatpush1.msra.mxu0 0.0
    %1203 = vmatprep.subr.mxu0 0.0
    %1204 = vmatpush1.msra.mxu0 0.0
    %1205 = vmatprep.subr.mxu0 0.0
    %1206 = vmatpush1.msra.mxu0 0.0
    %1207 = vmatprep.subr.mxu0 0.0
    %1208 = vmatpush1.msra.mxu0 0.0
    %1209 = vmatprep.subr.mxu0 0.0
    %1210 = vmatpush1.msra.mxu0 0.0
    %1211 = vmatprep.subr.mxu0 0.0
    %1212 = vmatpush1.msra.mxu0 0.0
    %1213 = vmatprep.subr.mxu0 0.0
    %1214 = vmatpush1.msra.mxu0 0.0
    %1215 = vmatprep.subr.mxu0 0.0
    %1216 = vmatpush1.msra.mxu0 0.0
    %1217 = vmatprep.subr.mxu0 0.0
    %1218 = vmatpush1.msra.mxu0 0.0
    %1219 = vmatprep.subr.mxu0 0.0
    %1220 = vmatpush1.msra.mxu0 0.0
    %1221 = vmatprep.subr.mxu0 0.0
    %1222 = vmatpush1.msra.mxu0 0.0
    %1223 = vmatprep.subr.mxu0 0.0
    %1224 = vmatpush1.msra.mxu0 %v1187
    %1225 = vmatprep.subr.mxu0 0.0
    %1226 = vmatpush1.msra.mxu0 %v1186
    %1227 = vmatprep.subr.mxu0 0.0
    %1228 = vmatpush1.msra.mxu0 %v1185
    %1229 = vmatprep.subr.mxu0 0.0
    %1230 = vmatpush1.msra.mxu0 %v1184
    %1231 = vmatprep.subr.mxu0 0.0
    %1232 = vmatpush2.msra.mxu0 0.0
    %1233 = vmatprep.subr.mxu0 0.0
    %1234 = vmatpush2.msra.mxu0 0.0
    %1235 = vmatprep.subr.mxu0 0.0
    %1236 = vmatpush2.msra.mxu0 0.0
    %1237 = vmatprep.subr.mxu0 0.0
    %1238 = vmatpush2.msra.mxu0 0.0
    %1239 = vmatprep.subr.mxu0 0.0
    %1240 = vmatpush2.msra.mxu0 0.0
    %1241 = vmatprep.subr.mxu0 0.0
    %1242 = vmatpush2.msra.mxu0 0.0
    %1243 = vmatprep.subr.mxu0 0.0
    %1244 = vmatpush2.msra.mxu0 0.0
    %1245 = vmatprep.subr.mxu0 0.0
    %1246 = vmatpush2.msra.mxu0 0.0
    %1247 = vmatprep.subr.mxu0 0.0
    %1248 = vmatpush2.msra.mxu0 0.0
    %1249 = vmatprep.subr.mxu0 0.0
    %1250 = vmatpush2.msra.mxu0 0.0
    %1251 = vmatprep.subr.mxu0 0.0
    %1252 = vmatpush2.msra.mxu0 0.0
    %1253 = vmatprep.subr.mxu0 0.0
    %1254 = vmatpush2.msra.mxu0 0.0
    %1255 = vmatprep.subr.mxu0 0.0
    %1256 = vmatpush2.msra.mxu0 0.0
    %1257 = vmatprep.subr.mxu0 0.0
    %1258 = vmatpush2.msra.mxu0 0.0
    %1259 = vmatprep.subr.mxu0 0.0
    %1260 = vmatpush2.msra.mxu0 0.0
    %1261 = vmatprep.subr.mxu0 0.0
    %1262 = vmatpush2.msra.mxu0 0.0
    %1263 = vmatprep.mubr.f32.mxu0 0.0
    %1264 = vmatmul.mubr.f32.gmra.mxu0 %v1194
    %v1265 = vpop.f32.mrf.mxu0
    %v1266 = vadd.f32 %v1192, %v1265
    %v1267 = vpop.f32.mrf.mxu0
    %1268 = vmatprep.mubr.f32.mxu0 0.0
    %1269 = vmatmul.mubr.f32.gmra.mxu0 %v1197
    %v1270 = vpop.f32.mrf.mxu0
    %v1271 = vadd.f32 %v1192, %v1270
    %v1272 = vpop.f32.mrf.mxu0
    %1273 = vdwg.mxu0
    %v1274 = vmul.f32 %v1266, 0.5
    %v1275 = vmul.f32 %v1271, 0.5
    %v1276 = vmul.f32 %v1266, 0.044715
    %v1277 = vmul.f32 %v1271, 0.044715
    %v1278 = vmul.f32 %v1276, %v1266
    %v1279 = vmul.f32 %v1277, %v1271
    %v1280 = vmul.f32 %v1278, %v1266
    %v1281 = vmul.f32 %v1279, %v1271
    %v1282 = vadd.f32 %v1266, %v1280
    %v1283 = vadd.f32 %v1271, %v1281
    %v1284 = vmul.f32 %v1282, 0.7978846
    %v1285 = vmul.f32 %v1283, 0.7978846
    %v1286 = vtanh.pop %v1284
    %v1287 = vtanh.pop %v1285
    %v1288 = vadd.f32 %v1286, 1.0
    %v1289 = vadd.f32 %v1287, 1.0
    %v1290 = vmul.f32 %v1274, %v1288
    %v1291 = vmul.f32 %v1275, %v1289
    %v1292 = vld [vmem:[#allocation3 + $0x160] sm:$0xff]
    %v1293 = vld [vmem:[#allocation3 + $0x168] sm:$0xff]
    %v1294 = vld [vmem:[#allocation3 + $0x170] sm:$0xff]
    %v1295 = vld [vmem:[#allocation3 + $0x178] sm:$0xff]
    %v1296 = vld [vmem:[#allocation3 + $0x180] sm:$0xff]
    %v1297 = vld [vmem:[#allocation3 + $0x188] sm:$0xff]
    %v1298 = vld [vmem:[#allocation3 + $0x190] sm:$0xff]
    %v1299 = vld [vmem:[#allocation3 + $0x198] sm:$0xff]
    %v1300 = vld [vmem:[#allocation3 + $0x1a0] sm:$0x1]
    %v1301 = vlaneseq
    %v1302 = vshrl.u32 %v1301, 7
    %v1303 = vsub.s32 0, %v1302
    %v1304 = vrot.slane %v1300, %v1303
    %vm1305 = vcmask 523264
    %v1307 = vsel %vm1305, %v1290, 0
    %v1310 = vsel %vm1305, %v1291, 0
    %1312 = vmatprep.subr.mxu0 0.0
    %1313 = vmatpush1.msra.mxu0 0.0
    %1314 = vmatprep.subr.mxu0 0.0
    %1315 = vmatpush1.msra.mxu0 0.0
    %1316 = vmatprep.subr.mxu0 0.0
    %1317 = vmatpush1.msra.mxu0 0.0
    %1318 = vmatprep.subr.mxu0 0.0
    %1319 = vmatpush1.msra.mxu0 0.0
    %1320 = vmatprep.subr.mxu0 0.0
    %1321 = vmatpush1.msra.mxu0 0.0
    %1322 = vmatprep.subr.mxu0 0.0
    %1323 = vmatpush1.msra.mxu0 0.0
    %1324 = vmatprep.subr.mxu0 0.0
    %1325 = vmatpush1.msra.mxu0 0.0
    %1326 = vmatprep.subr.mxu0 0.0
    %1327 = vmatpush1.msra.mxu0 0.0
    %1328 = vmatprep.subr.mxu0 0.0
    %1329 = vmatpush1.msra.mxu0 %v1299
    %1330 = vmatprep.subr.mxu0 0.0
    %1331 = vmatpush1.msra.mxu0 %v1298
    %1332 = vmatprep.subr.mxu0 0.0
    %1333 = vmatpush1.msra.mxu0 %v1297
    %1334 = vmatprep.subr.mxu0 0.0
    %1335 = vmatpush1.msra.mxu0 %v1296
    %1336 = vmatprep.subr.mxu0 0.0
    %1337 = vmatpush1.msra.mxu0 %v1295
    %1338 = vmatprep.subr.mxu0 0.0
    %1339 = vmatpush1.msra.mxu0 %v1294
    %1340 = vmatprep.subr.mxu0 0.0
    %1341 = vmatpush1.msra.mxu0 %v1293
    %1342 = vmatprep.subr.mxu0 0.0
    %1343 = vmatpush1.msra.mxu0 %v1292
    %1344 = vmatprep.subr.mxu0 0.0
    %1345 = vmatpush2.msra.mxu0 0.0
    %1346 = vmatprep.subr.mxu0 0.0
    %1347 = vmatpush2.msra.mxu0 0.0
    %1348 = vmatprep.subr.mxu0 0.0
    %1349 = vmatpush2.msra.mxu0 0.0
    %1350 = vmatprep.subr.mxu0 0.0
    %1351 = vmatpush2.msra.mxu0 0.0
    %1352 = vmatprep.subr.mxu0 0.0
    %1353 = vmatpush2.msra.mxu0 0.0
    %1354 = vmatprep.subr.mxu0 0.0
    %1355 = vmatpush2.msra.mxu0 0.0
    %1356 = vmatprep.subr.mxu0 0.0
    %1357 = vmatpush2.msra.mxu0 0.0
    %1358 = vmatprep.subr.mxu0 0.0
    %1359 = vmatpush2.msra.mxu0 0.0
    %1360 = vmatprep.subr.mxu0 0.0
    %1361 = vmatpush2.msra.mxu0 0.0
    %1362 = vmatprep.subr.mxu0 0.0
    %1363 = vmatpush2.msra.mxu0 0.0
    %1364 = vmatprep.subr.mxu0 0.0
    %1365 = vmatpush2.msra.mxu0 0.0
    %1366 = vmatprep.subr.mxu0 0.0
    %1367 = vmatpush2.msra.mxu0 0.0
    %1368 = vmatprep.subr.mxu0 0.0
    %1369 = vmatpush2.msra.mxu0 0.0
    %1370 = vmatprep.subr.mxu0 0.0
    %1371 = vmatpush2.msra.mxu0 0.0
    %1372 = vmatprep.subr.mxu0 0.0
    %1373 = vmatpush2.msra.mxu0 0.0
    %1374 = vmatprep.subr.mxu0 0.0
    %1375 = vmatpush2.msra.mxu0 0.0
    %1376 = vmatprep.mubr.f32.mxu0 0.0
    %1377 = vmatmul.mubr.f32.gmra.mxu0 %v1307
    %v1378 = vpop.f32.mrf.mxu0
    %v1379 = vadd.f32 %v1304, %v1378
    %v1380 = vpop.f32.mrf.mxu0
    %1381 = vmatprep.mubr.f32.mxu0 0.0
    %1382 = vmatmul.mubr.f32.gmra.mxu0 %v1310
    %v1383 = vpop.f32.mrf.mxu0
    %v1384 = vadd.f32 %v1304, %v1383
    %v1385 = vpop.f32.mrf.mxu0
    %1386 = vdwg.mxu0
    %v1387 = vadd.f32 %v1182, %v1379
    %v1388 = vadd.f32 %v1183, %v1384
    %v1389 = vld [vmem:[#allocation3 + $0x1a8] sm:$0x1]
    %v1390 = vld [vmem:[#allocation3 + $0x1b0] sm:$0x1]
    %v1391 = vsel %vm38, %v1387, 0.0
    %1392 = vadd.xlane.f32.xlu0 %v1391
    %v1393 = vpop.xlane.xlu0 %1392
    %v1394 = vsel %vm38, %v1388, 0.0
    %1395 = vadd.xlane.f32.xlu0 %v1394
    %v1396 = vpop.xlane.xlu0 %1395
    %v1397 = vmul.f32 %v1393, %v45
    %v1398 = vmul.f32 %v1396, %v45
    %v1399 = vsub.f32 %v1387, %v1397
    %v1400 = vsub.f32 %v1388, %v1398
    %v1401 = vmul.f32 %v1399, %v1399
    %v1402 = vmul.f32 %v1400, %v1400
    %v1403 = vsel %vm38, %v1401, 0.0
    %1404 = vadd.xlane.f32.xlu0 %v1403
    %v1405 = vpop.xlane.xlu0 %1404
    %v1406 = vsel %vm38, %v1402, 0.0
    %1407 = vadd.xlane.f32.xlu0 %v1406
    %v1408 = vpop.xlane.xlu0 %1407
    %v1409 = vmul.f32 %v1405, %v45
    %v1410 = vmul.f32 %v1408, %v45
    %v1411 = vadd.f32 %v1409, 1e-05
    %v1412 = vadd.f32 %v1410, 1e-05
    %v1413 = vrsqrt.pop %v1411
    %v1414 = vrsqrt.pop %v1412
    %v1415 = vmul.f32 %v1399, %v1413
    %v1416 = vmul.f32 %v1400, %v1414
    %v1417 = vlaneseq
    %v1418 = vshrl.u32 %v1417, 7
    %v1419 = vsub.s32 0, %v1418
    %v1420 = vrot.slane %v1389, %v1419
    %v1421 = vmul.f32 %v1415, %v1420
    %v1422 = vmul.f32 %v1416, %v1420
    %v1423 = vlaneseq
    %v1424 = vshrl.u32 %v1423, 7
    %v1425 = vsub.s32 0, %v1424
    %v1426 = vrot.slane %v1390, %v1425
    %v1427 = vadd.f32 %v1421, %v1426
    %v1428 = vadd.f32 %v1422, %v1426
    %v1429 = vld [vmem:[#allocation3 + $0x1b8] sm:$0xff]
    %v1430 = vld [vmem:[#allocation3 + $0x1c0] sm:$0xff]
    %v1431 = vld [vmem:[#allocation3 + $0x1c8] sm:$0xff]
    %v1432 = vld [vmem:[#allocation3 + $0x1d0] sm:$0xff]
    %v1433 = vld [vmem:[#allocation3 + $0x218] sm:$0x1]
    %v1434 = vlaneseq
    %v1435 = vshrl.u32 %v1434, 7
    %v1436 = vsub.s32 0, %v1435
    %v1437 = vrot.slane %v1433, %v1436
    %v1439 = vsel %vm38, %v1427, 0
    %v1442 = vsel %vm38, %v1428, 0
    %1444 = vmatprep.subr.mxu0 0.0
    %1445 = vmatpush1.msra.mxu0 0.0
    %1446 = vmatprep.subr.mxu0 0.0
    %1447 = vmatpush1.msra.mxu0 0.0
    %1448 = vmatprep.subr.mxu0 0.0
    %1449 = vmatpush1.msra.mxu0 0.0
    %1450 = vmatprep.subr.mxu0 0.0
    %1451 = vmatpush1.msra.mxu0 0.0
    %1452 = vmatprep.subr.mxu0 0.0
    %1453 = vmatpush1.msra.mxu0 0.0
    %1454 = vmatprep.subr.mxu0 0.0
    %1455 = vmatpush1.msra.mxu0 0.0
    %1456 = vmatprep.subr.mxu0 0.0
    %1457 = vmatpush1.msra.mxu0 0.0
    %1458 = vmatprep.subr.mxu0 0.0
    %1459 = vmatpush1.msra.mxu0 0.0
    %1460 = vmatprep.subr.mxu0 0.0
    %1461 = vmatpush1.msra.mxu0 0.0
    %1462 = vmatprep.subr.mxu0 0.0
    %1463 = vmatpush1.msra.mxu0 0.0
    %1464 = vmatprep.subr.mxu0 0.0
    %1465 = vmatpush1.msra.mxu0 0.0
    %1466 = vmatprep.subr.mxu0 0.0
    %1467 = vmatpush1.msra.mxu0 0.0
    %1468 = vmatprep.subr.mxu0 0.0
    %1469 = vmatpush1.msra.mxu0 %v1432
    %1470 = vmatprep.subr.mxu0 0.0
    %1471 = vmatpush1.msra.mxu0 %v1431
    %1472 = vmatprep.subr.mxu0 0.0
    %1473 = vmatpush1.msra.mxu0 %v1430
    %1474 = vmatprep.subr.mxu0 0.0
    %1475 = vmatpush1.msra.mxu0 %v1429
    %1476 = vmatprep.subr.mxu0 0.0
    %1477 = vmatpush2.msra.mxu0 0.0
    %1478 = vmatprep.subr.mxu0 0.0
    %1479 = vmatpush2.msra.mxu0 0.0
    %1480 = vmatprep.subr.mxu0 0.0
    %1481 = vmatpush2.msra.mxu0 0.0
    %1482 = vmatprep.subr.mxu0 0.0
    %1483 = vmatpush2.msra.mxu0 0.0
    %1484 = vmatprep.subr.mxu0 0.0
    %1485 = vmatpush2.msra.mxu0 0.0
    %1486 = vmatprep.subr.mxu0 0.0
    %1487 = vmatpush2.msra.mxu0 0.0
    %1488 = vmatprep.subr.mxu0 0.0
    %1489 = vmatpush2.msra.mxu0 0.0
    %1490 = vmatprep.subr.mxu0 0.0
    %1491 = vmatpush2.msra.mxu0 0.0
    %1492 = vmatprep.subr.mxu0 0.0
    %1493 = vmatpush2.msra.mxu0 0.0
    %1494 = vmatprep.subr.mxu0 0.0
    %1495 = vmatpush2.msra.mxu0 0.0
    %1496 = vmatprep.subr.mxu0 0.0
    %1497 = vmatpush2.msra.mxu0 0.0
    %1498 = vmatprep.subr.mxu0 0.0
    %1499 = vmatpush2.msra.mxu0 0.0
    %1500 = vmatprep.subr.mxu0 0.0
    %1501 = vmatpush2.msra.mxu0 0.0
    %1502 = vmatprep.subr.mxu0 0.0
    %1503 = vmatpush2.msra.mxu0 0.0
    %1504 = vmatprep.subr.mxu0 0.0
    %1505 = vmatpush2.msra.mxu0 0.0
    %1506 = vmatprep.subr.mxu0 0.0
    %1507 = vmatpush2.msra.mxu0 0.0
    %1508 = vmatprep.mubr.f32.mxu0 0.0
    %1509 = vmatmul.mubr.f32.gmra.mxu0 %v1439
    %v1510 = vpop.f32.mrf.mxu0
    %v1511 = vadd.f32 %v1437, %v1510
    %v1512 = vpop.f32.mrf.mxu0
    %1513 = vmatprep.mubr.f32.mxu0 0.0
    %1514 = vmatmul.mubr.f32.gmra.mxu0 %v1442
    %v1515 = vpop.f32.mrf.mxu0
    %v1516 = vadd.f32 %v1437, %v1515
    %v1517 = vpop.f32.mrf.mxu0
    %1518 = vdwg.mxu0
    %v1519 = vld [vmem:[#allocation3 + $0x1d8] sm:$0xff]
    %v1520 = vld [vmem:[#allocation3 + $0x1e0] sm:$0xff]
    %v1521 = vld [vmem:[#allocation3 + $0x1e8] sm:$0xff]
    %v1522 = vld [vmem:[#allocation3 + $0x1f0] sm:$0xff]
    %v1523 = vld [vmem:[#allocation3 + $0x220] sm:$0x1]
    %v1524 = vlaneseq
    %v1525 = vshrl.u32 %v1524, 7
    %v1526 = vsub.s32 0, %v1525
    %v1527 = vrot.slane %v1523, %v1526
    %1528 = vmatprep.subr.mxu0 0.0
    %1529 = vmatpush1.msra.mxu0 0.0
    %1530 = vmatprep.subr.mxu0 0.0
    %1531 = vmatpush1.msra.mxu0 0.0
    %1532 = vmatprep.subr.mxu0 0.0
    %1533 = vmatpush1.msra.mxu0 0.0
    %1534 = vmatprep.subr.mxu0 0.0
    %1535 = vmatpush1.msra.mxu0 0.0
    %1536 = vmatprep.subr.mxu0 0.0
    %1537 = vmatpush1.msra.mxu0 0.0
    %1538 = vmatprep.subr.mxu0 0.0
    %1539 = vmatpush1.msra.mxu0 0.0
    %1540 = vmatprep.subr.mxu0 0.0
    %1541 = vmatpush1.msra.mxu0 0.0
    %1542 = vmatprep.subr.mxu0 0.0
    %1543 = vmatpush1.msra.mxu0 0.0
    %1544 = vmatprep.subr.mxu0 0.0
    %1545 = vmatpush1.msra.mxu0 0.0
    %1546 = vmatprep.subr.mxu0 0.0
    %1547 = vmatpush1.msra.mxu0 0.0
    %1548 = vmatprep.subr.mxu0 0.0
    %1549 = vmatpush1.msra.mxu0 0.0
    %1550 = vmatprep.subr.mxu0 0.0
    %1551 = vmatpush1.msra.mxu0 0.0
    %1552 = vmatprep.subr.mxu0 0.0
    %1553 = vmatpush1.msra.mxu0 %v1522
    %1554 = vmatprep.subr.mxu0 0.0
    %1555 = vmatpush1.msra.mxu0 %v1521
    %1556 = vmatprep.subr.mxu0 0.0
    %1557 = vmatpush1.msra.mxu0 %v1520
    %1558 = vmatprep.subr.mxu0 0.0
    %1559 = vmatpush1.msra.mxu0 %v1519
    %1560 = vmatprep.subr.mxu0 0.0
    %1561 = vmatpush2.msra.mxu0 0.0
    %1562 = vmatprep.subr.mxu0 0.0
    %1563 = vmatpush2.msra.mxu0 0.0
    %1564 = vmatprep.subr.mxu0 0.0
    %1565 = vmatpush2.msra.mxu0 0.0
    %1566 = vmatprep.subr.mxu0 0.0
    %1567 = vmatpush2.msra.mxu0 0.0
    %1568 = vmatprep.subr.mxu0 0.0
    %1569 = vmatpush2.msra.mxu0 0.0
    %1570 = vmatprep.subr.mxu0 0.0
    %1571 = vmatpush2.msra.mxu0 0.0
    %1572 = vmatprep.subr.mxu0 0.0
    %1573 = vmatpush2.msra.mxu0 0.0
    %1574 = vmatprep.subr.mxu0 0.0
    %1575 = vmatpush2.msra.mxu0 0.0
    %1576 = vmatprep.subr.mxu0 0.0
    %1577 = vmatpush2.msra.mxu0 0.0
    %1578 = vmatprep.subr.mxu0 0.0
    %1579 = vmatpush2.msra.mxu0 0.0
    %1580 = vmatprep.subr.mxu0 0.0
    %1581 = vmatpush2.msra.mxu0 0.0
    %1582 = vmatprep.subr.mxu0 0.0
    %1583 = vmatpush2.msra.mxu0 0.0
    %1584 = vmatprep.subr.mxu0 0.0
    %1585 = vmatpush2.msra.mxu0 0.0
    %1586 = vmatprep.subr.mxu0 0.0
    %1587 = vmatpush2.msra.mxu0 0.0
    %1588 = vmatprep.subr.mxu0 0.0
    %1589 = vmatpush2.msra.mxu0 0.0
    %1590 = vmatprep.subr.mxu0 0.0
    %1591 = vmatpush2.msra.mxu0 0.0
    %1592 = vmatprep.mubr.f32.mxu0 0.0
    %1593 = vmatmul.mubr.f32.gmra.mxu0 %v1439
    %v1594 = vpop.f32.mrf.mxu0
    %v1595 = vadd.f32 %v1527, %v1594
    %v1596 = vpop.f32.mrf.mxu0
    %1597 = vmatprep.mubr.f32.mxu0 0.0
    %1598 = vmatmul.mubr.f32.gmra.mxu0 %v1442
    %v1599 = vpop.f32.mrf.mxu0
    %v1600 = vadd.f32 %v1527, %v1599
    %v1601 = vpop.f32.mrf.mxu0
    %1602 = vdwg.mxu0
    %v1603 = vld [vmem:[#allocation3 + $0x1f8] sm:$0xff]
    %v1604 = vld [vmem:[#allocation3 + $0x200] sm:$0xff]
    %v1605 = vld [vmem:[#allocation3 + $0x208] sm:$0xff]
    %v1606 = vld [vmem:[#allocation3 + $0x210] sm:$0xff]
    %v1607 = vld [vmem:[#allocation3 + $0x228] sm:$0x1]
    %v1608 = vlaneseq
    %v1609 = vshrl.u32 %v1608, 7
    %v1610 = vsub.s32 0, %v1609
    %v1611 = vrot.slane %v1607, %v1610
    %1612 = vmatprep.subr.mxu0 0.0
    %1613 = vmatpush1.msra.mxu0 0.0
    %1614 = vmatprep.subr.mxu0 0.0
    %1615 = vmatpush1.msra.mxu0 0.0
    %1616 = vmatprep.subr.mxu0 0.0
    %1617 = vmatpush1.msra.mxu0 0.0
    %1618 = vmatprep.subr.mxu0 0.0
    %1619 = vmatpush1.msra.mxu0 0.0
    %1620 = vmatprep.subr.mxu0 0.0
    %1621 = vmatpush1.msra.mxu0 0.0
    %1622 = vmatprep.subr.mxu0 0.0
    %1623 = vmatpush1.msra.mxu0 0.0
    %1624 = vmatprep.subr.mxu0 0.0
    %1625 = vmatpush1.msra.mxu0 0.0
    %1626 = vmatprep.subr.mxu0 0.0
    %1627 = vmatpush1.msra.mxu0 0.0
    %1628 = vmatprep.subr.mxu0 0.0
    %1629 = vmatpush1.msra.mxu0 0.0
    %1630 = vmatprep.subr.mxu0 0.0
    %1631 = vmatpush1.msra.mxu0 0.0
    %1632 = vmatprep.subr.mxu0 0.0
    %1633 = vmatpush1.msra.mxu0 0.0
    %1634 = vmatprep.subr.mxu0 0.0
    %1635 = vmatpush1.msra.mxu0 0.0
    %1636 = vmatprep.subr.mxu0 0.0
    %1637 = vmatpush1.msra.mxu0 %v1606
    %1638 = vmatprep.subr.mxu0 0.0
    %1639 = vmatpush1.msra.mxu0 %v1605
    %1640 = vmatprep.subr.mxu0 0.0
    %1641 = vmatpush1.msra.mxu0 %v1604
    %1642 = vmatprep.subr.mxu0 0.0
    %1643 = vmatpush1.msra.mxu0 %v1603
    %1644 = vmatprep.subr.mxu0 0.0
    %1645 = vmatpush2.msra.mxu0 0.0
    %1646 = vmatprep.subr.mxu0 0.0
    %1647 = vmatpush2.msra.mxu0 0.0
    %1648 = vmatprep.subr.mxu0 0.0
    %1649 = vmatpush2.msra.mxu0 0.0
    %1650 = vmatprep.subr.mxu0 0.0
    %1651 = vmatpush2.msra.mxu0 0.0
    %1652 = vmatprep.subr.mxu0 0.0
    %1653 = vmatpush2.msra.mxu0 0.0
    %1654 = vmatprep.subr.mxu0 0.0
    %1655 = vmatpush2.msra.mxu0 0.0
    %1656 = vmatprep.subr.mxu0 0.0
    %1657 = vmatpush2.msra.mxu0 0.0
    %1658 = vmatprep.subr.mxu0 0.0
    %1659 = vmatpush2.msra.mxu0 0.0
    %1660 = vmatprep.subr.mxu0 0.0
    %1661 = vmatpush2.msra.mxu0 0.0
    %1662 = vmatprep.subr.mxu0 0.0
    %1663 = vmatpush2.msra.mxu0 0.0
    %1664 = vmatprep.subr.mxu0 0.0
    %1665 = vmatpush2.msra.mxu0 0.0
    %1666 = vmatprep.subr.mxu0 0.0
    %1667 = vmatpush2.msra.mxu0 0.0
    %1668 = vmatprep.subr.mxu0 0.0
    %1669 = vmatpush2.msra.mxu0 0.0
    %1670 = vmatprep.subr.mxu0 0.0
    %1671 = vmatpush2.msra.mxu0 0.0
    %1672 = vmatprep.subr.mxu0 0.0
    %1673 = vmatpush2.msra.mxu0 0.0
    %1674 = vmatprep.subr.mxu0 0.0
    %1675 = vmatpush2.msra.mxu0 0.0
    %1676 = vmatprep.mubr.f32.mxu0 0.0
    %1677 = vmatmul.mubr.f32.gmra.mxu0 %v1439
    %v1678 = vpop.f32.mrf.mxu0
    %v1679 = vadd.f32 %v1611, %v1678
    %v1680 = vpop.f32.mrf.mxu0
    %1681 = vmatprep.mubr.f32.mxu0 0.0
    %1682 = vmatmul.mubr.f32.gmra.mxu0 %v1442
    %v1683 = vpop.f32.mrf.mxu0
    %v1684 = vadd.f32 %v1611, %v1683
    %v1685 = vpop.f32.mrf.mxu0
    %1686 = vdwg.mxu0
    %v1688 = vsel %vm336, %v1511, 0
    %v1691 = vsel %vm336, %v1516, 0
    %v1694 = vsel %vm336, %v1595, 0
    %v1697 = vsel %vm336, %v1600, 0
    %1699 = vmatprep.subr.mxu0 0.0
    %1700 = vmatpush1.xpose.msra.mxu0 0.0
    %1701 = vmatprep.subr.mxu0 0.0
    %1702 = vmatpush1.xpose.msra.mxu0 0.0
    %1703 = vmatprep.subr.mxu0 0.0
    %1704 = vmatpush1.xpose.msra.mxu0 0.0
    %1705 = vmatprep.subr.mxu0 0.0
    %1706 = vmatpush1.xpose.msra.mxu0 0.0
    %1707 = vmatprep.subr.mxu0 0.0
    %1708 = vmatpush1.xpose.msra.mxu0 0.0
    %1709 = vmatprep.subr.mxu0 0.0
    %1710 = vmatpush1.xpose.msra.mxu0 0.0
    %1711 = vmatprep.subr.mxu0 0.0
    %1712 = vmatpush1.xpose.msra.mxu0 0.0
    %1713 = vmatprep.subr.mxu0 0.0
    %1714 = vmatpush1.xpose.msra.mxu0 0.0
    %1715 = vmatprep.subr.mxu0 0.0
    %1716 = vmatpush1.xpose.msra.mxu0 0.0
    %1717 = vmatprep.subr.mxu0 0.0
    %1718 = vmatpush1.xpose.msra.mxu0 0.0
    %1719 = vmatprep.subr.mxu0 0.0
    %1720 = vmatpush1.xpose.msra.mxu0 0.0
    %1721 = vmatprep.subr.mxu0 0.0
    %1722 = vmatpush1.xpose.msra.mxu0 0.0
    %1723 = vmatprep.subr.mxu0 0.0
    %1724 = vmatpush1.xpose.msra.mxu0 0.0
    %1725 = vmatprep.subr.mxu0 0.0
    %1726 = vmatpush1.xpose.msra.mxu0 0.0
    %1727 = vmatprep.subr.mxu0 0.0
    %1728 = vmatpush1.xpose.msra.mxu0 %v1697
    %1729 = vmatprep.subr.mxu0 0.0
    %1730 = vmatpush1.xpose.msra.mxu0 %v1694
    %1731 = vmatprep.subr.mxu0 0.0
    %1732 = vmatpush2.xpose.msra.mxu0 0.0
    %1733 = vmatprep.subr.mxu0 0.0
    %1734 = vmatpush2.xpose.msra.mxu0 0.0
    %1735 = vmatprep.subr.mxu0 0.0
    %1736 = vmatpush2.xpose.msra.mxu0 0.0
    %1737 = vmatprep.subr.mxu0 0.0
    %1738 = vmatpush2.xpose.msra.mxu0 0.0
    %1739 = vmatprep.subr.mxu0 0.0
    %1740 = vmatpush2.xpose.msra.mxu0 0.0
    %1741 = vmatprep.subr.mxu0 0.0
    %1742 = vmatpush2.xpose.msra.mxu0 0.0
    %1743 = vmatprep.subr.mxu0 0.0
    %1744 = vmatpush2.xpose.msra.mxu0 0.0
    %1745 = vmatprep.subr.mxu0 0.0
    %1746 = vmatpush2.xpose.msra.mxu0 0.0
    %1747 = vmatprep.subr.mxu0 0.0
    %1748 = vmatpush2.xpose.msra.mxu0 0.0
    %1749 = vmatprep.subr.mxu0 0.0
    %1750 = vmatpush2.xpose.msra.mxu0 0.0
    %1751 = vmatprep.subr.mxu0 0.0
    %1752 = vmatpush2.xpose.msra.mxu0 0.0
    %1753 = vmatprep.subr.mxu0 0.0
    %1754 = vmatpush2.xpose.msra.mxu0 0.0
    %1755 = vmatprep.subr.mxu0 0.0
    %1756 = vmatpush2.xpose.msra.mxu0 0.0
    %1757 = vmatprep.subr.mxu0 0.0
    %1758 = vmatpush2.xpose.msra.mxu0 0.0
    %1759 = vmatprep.subr.mxu0 0.0
    %1760 = vmatpush2.xpose.msra.mxu0 0.0
    %1761 = vmatprep.subr.mxu0 0.0
    %1762 = vmatpush2.xpose.msra.mxu0 0.0
    %1763 = vmatprep.mubr.f32.mxu0 0.0
    %1764 = vmatmul.mubr.f32.gmra.mxu0 %v1688
    %v1765 = vpop.f32.mrf.mxu0
    %v1766 = vadd.f32 %v31, %v1765
    %v1767 = vpop.f32.mrf.mxu0
    %1768 = vmatprep.mubr.f32.mxu0 0.0
    %1769 = vmatmul.mubr.f32.gmra.mxu0 %v1691
    %v1770 = vpop.f32.mrf.mxu0
    %v1771 = vadd.f32 %v32, %v1770
    %v1772 = vpop.f32.mrf.mxu0
    %1773 = vdwg.mxu0
    %v1774 = vsel %vm336, %v1766, -inf
    %1775 = vmax.xlane.f32.xlu0 %v1774
    %v1776 = vpop.xlane.xlu0 %1775
    %v1777 = vsel %vm336, %v1771, -inf
    %1778 = vmax.xlane.f32.xlu0 %v1777
    %v1779 = vpop.xlane.xlu0 %1778
    %v1780 = vsub.f32 %v1766, %v1776
    %v1781 = vsub.f32 %v1771, %v1779
    %v1782 = vmul.f32 %v1780, 1.442695
    %v1783 = vpow.pop %v1782
    %v1784 = vmul.f32 %v1781, 1.442695
    %v1785 = vpow.pop %v1784
    %v1786 = vsel %vm336, %v1783, 0.0
    %1787 = vadd.xlane.f32.xlu0 %v1786
    %v1788 = vpop.xlane.xlu0 %1787
    %v1789 = vsel %vm336, %v1785, 0.0
    %1790 = vadd.xlane.f32.xlu0 %v1789
    %v1791 = vpop.xlane.xlu0 %1790
    %v1792 = vrcp.pop %v1788
    %v1793 = vmul.f32 %v1783, %v1792
    %v1794 = vrcp.pop %v1791
    %v1795 = vmul.f32 %v1785, %v1794
    %v1797 = vsel %vm336, %v1793, 0
    %v1800 = vsel %vm336, %v1795, 0
    %1802 = vmatprep.subr.mxu0 0.0
    %1803 = vmatpush1.msra.mxu0 0.0
    %1804 = vmatprep.subr.mxu0 0.0
    %1805 = vmatpush1.msra.mxu0 0.0
    %1806 = vmatprep.subr.mxu0 0.0
    %1807 = vmatpush1.msra.mxu0 0.0
    %1808 = vmatprep.subr.mxu0 0.0
    %1809 = vmatpush1.msra.mxu0 0.0
    %1810 = vmatprep.subr.mxu0 0.0
    %1811 = vmatpush1.msra.mxu0 0.0
    %1812 = vmatprep.subr.mxu0 0.0
    %1813 = vmatpush1.msra.mxu0 0.0
    %1814 = vmatprep.subr.mxu0 0.0
    %1815 = vmatpush1.msra.mxu0 0.0
    %1816 = vmatprep.subr.mxu0 0.0
    %1817 = vmatpush1.msra.mxu0 0.0
    %1818 = vmatprep.subr.mxu0 0.0
    %1819 = vmatpush1.msra.mxu0 0.0
    %1820 = vmatprep.subr.mxu0 0.0
    %1821 = vmatpush1.msra.mxu0 0.0
    %1822 = vmatprep.subr.mxu0 0.0
    %1823 = vmatpush1.msra.mxu0 0.0
    %1824 = vmatprep.subr.mxu0 0.0
    %1825 = vmatpush1.msra.mxu0 0.0
    %1826 = vmatprep.subr.mxu0 0.0
    %1827 = vmatpush1.msra.mxu0 0.0
    %1828 = vmatprep.subr.mxu0 0.0
    %1829 = vmatpush1.msra.mxu0 0.0
    %1830 = vmatprep.subr.mxu0 0.0
    %1831 = vmatpush1.msra.mxu0 %v1684
    %1832 = vmatprep.subr.mxu0 0.0
    %1833 = vmatpush1.msra.mxu0 %v1679
    %1834 = vmatprep.subr.mxu0 0.0
    %1835 = vmatpush2.msra.mxu0 0.0
    %1836 = vmatprep.subr.mxu0 0.0
    %1837 = vmatpush2.msra.mxu0 0.0
    %1838 = vmatprep.subr.mxu0 0.0
    %1839 = vmatpush2.msra.mxu0 0.0
    %1840 = vmatprep.subr.mxu0 0.0
    %1841 = vmatpush2.msra.mxu0 0.0
    %1842 = vmatprep.subr.mxu0 0.0
    %1843 = vmatpush2.msra.mxu0 0.0
    %1844 = vmatprep.subr.mxu0 0.0
    %1845 = vmatpush2.msra.mxu0 0.0
    %1846 = vmatprep.subr.mxu0 0.0
    %1847 = vmatpush2.msra.mxu0 0.0
    %1848 = vmatprep.subr.mxu0 0.0
    %1849 = vmatpush2.msra.mxu0 0.0
    %1850 = vmatprep.subr.mxu0 0.0
    %1851 = vmatpush2.msra.mxu0 0.0
    %1852 = vmatprep.subr.mxu0 0.0
    %1853 = vmatpush2.msra.mxu0 0.0
    %1854 = vmatprep.subr.mxu0 0.0
    %1855 = vmatpush2.msra.mxu0 0.0
    %1856 = vmatprep.subr.mxu0 0.0
    %1857 = vmatpush2.msra.mxu0 0.0
    %1858 = vmatprep.subr.mxu0 0.0
    %1859 = vmatpush2.msra.mxu0 0.0
    %1860 = vmatprep.subr.mxu0 0.0
    %1861 = vmatpush2.msra.mxu0 0.0
    %1862 = vmatprep.subr.mxu0 0.0
    %1863 = vmatpush2.msra.mxu0 0.0
    %1864 = vmatprep.subr.mxu0 0.0
    %1865 = vmatpush2.msra.mxu0 0.0
    %1866 = vmatprep.mubr.f32.mxu0 0.0
    %1867 = vmatmul.mubr.f32.gmra.mxu0 %v1797
    %v1868 = vpop.f32.mrf.mxu0
    %v1869 = vadd.f32 0.0, %v1868
    %v1870 = vpop.f32.mrf.mxu0
    %1871 = vmatprep.mubr.f32.mxu0 0.0
    %1872 = vmatmul.mubr.f32.gmra.mxu0 %v1800
    %v1873 = vpop.f32.mrf.mxu0
    %v1874 = vadd.f32 0.0, %v1873
    %v1875 = vpop.f32.mrf.mxu0
    %1876 = vdwg.mxu0
    %v1877 = vld [vmem:[#allocation3 + $0x230] sm:$0xff]
    %v1878 = vld [vmem:[#allocation3 + $0x238] sm:$0xff]
    %v1879 = vld [vmem:[#allocation3 + $0x240] sm:$0xff]
    %v1880 = vld [vmem:[#allocation3 + $0x248] sm:$0xff]
    %v1881 = vld [vmem:[#allocation3 + $0x250] sm:$0xff]
    %v1882 = vld [vmem:[#allocation3 + $0x258] sm:$0xff]
    %v1883 = vld [vmem:[#allocation3 + $0x2a0] sm:$0x1]
    %v1884 = vlaneseq
    %v1885 = vshrl.u32 %v1884, 7
    %v1886 = vsub.s32 0, %v1885
    %v1887 = vrot.slane %v1883, %v1886
    %1888 = vmatprep.subr.mxu0 0.0
    %1889 = vmatpush1.msra.mxu0 0.0
    %1890 = vmatprep.subr.mxu0 0.0
    %1891 = vmatpush1.msra.mxu0 0.0
    %1892 = vmatprep.subr.mxu0 0.0
    %1893 = vmatpush1.msra.mxu0 0.0
    %1894 = vmatprep.subr.mxu0 0.0
    %1895 = vmatpush1.msra.mxu0 0.0
    %1896 = vmatprep.subr.mxu0 0.0
    %1897 = vmatpush1.msra.mxu0 0.0
    %1898 = vmatprep.subr.mxu0 0.0
    %1899 = vmatpush1.msra.mxu0 0.0
    %1900 = vmatprep.subr.mxu0 0.0
    %1901 = vmatpush1.msra.mxu0 0.0
    %1902 = vmatprep.subr.mxu0 0.0
    %1903 = vmatpush1.msra.mxu0 0.0
    %1904 = vmatprep.subr.mxu0 0.0
    %1905 = vmatpush1.msra.mxu0 0.0
    %1906 = vmatprep.subr.mxu0 0.0
    %1907 = vmatpush1.msra.mxu0 0.0
    %1908 = vmatprep.subr.mxu0 0.0
    %1909 = vmatpush1.msra.mxu0 0.0
    %1910 = vmatprep.subr.mxu0 0.0
    %1911 = vmatpush1.msra.mxu0 0.0
    %1912 = vmatprep.subr.mxu0 0.0
    %1913 = vmatpush1.msra.mxu0 %v1882
    %1914 = vmatprep.subr.mxu0 0.0
    %1915 = vmatpush1.msra.mxu0 %v1881
    %1916 = vmatprep.subr.mxu0 0.0
    %1917 = vmatpush1.msra.mxu0 %v1880
    %1918 = vmatprep.subr.mxu0 0.0
    %1919 = vmatpush1.msra.mxu0 %v1879
    %1920 = vmatprep.subr.mxu0 0.0
    %1921 = vmatpush2.msra.mxu0 0.0
    %1922 = vmatprep.subr.mxu0 0.0
    %1923 = vmatpush2.msra.mxu0 0.0
    %1924 = vmatprep.subr.mxu0 0.0
    %1925 = vmatpush2.msra.mxu0 0.0
    %1926 = vmatprep.subr.mxu0 0.0
    %1927 = vmatpush2.msra.mxu0 0.0
    %1928 = vmatprep.subr.mxu0 0.0
    %1929 = vmatpush2.msra.mxu0 0.0
    %1930 = vmatprep.subr.mxu0 0.0
    %1931 = vmatpush2.msra.mxu0 0.0
    %1932 = vmatprep.subr.mxu0 0.0
    %1933 = vmatpush2.msra.mxu0 0.0
    %1934 = vmatprep.subr.mxu0 0.0
    %1935 = vmatpush2.msra.mxu0 0.0
    %1936 = vmatprep.subr.mxu0 0.0
    %1937 = vmatpush2.msra.mxu0 0.0
    %1938 = vmatprep.subr.mxu0 0.0
    %1939 = vmatpush2.msra.mxu0 0.0
    %1940 = vmatprep.subr.mxu0 0.0
    %1941 = vmatpush2.msra.mxu0 0.0
    %1942 = vmatprep.subr.mxu0 0.0
    %1943 = vmatpush2.msra.mxu0 0.0
    %1944 = vmatprep.subr.mxu0 0.0
    %1945 = vmatpush2.msra.mxu0 0.0
    %1946 = vmatprep.subr.mxu0 0.0
    %1947 = vmatpush2.msra.mxu0 0.0
    %1948 = vmatprep.subr.mxu0 0.0
    %1949 = vmatpush2.msra.mxu0 0.0
    %1950 = vmatprep.subr.mxu0 0.0
    %1951 = vmatpush2.msra.mxu0 0.0
    %1952 = vmatprep.mubr.f32.mxu0 0.0
    %1953 = vmatmul.mubr.f32.gmra.mxu0 %v1439
    %v1954 = vpop.f32.mrf.mxu0
    %v1955 = vadd.f32 %v1887, %v1954
    %v1956 = vpop.f32.mrf.mxu0
    %1957 = vmatprep.mubr.f32.mxu0 0.0
    %1958 = vmatmul.mubr.f32.gmra.mxu0 %v1442
    %v1959 = vpop.f32.mrf.mxu0
    %v1960 = vadd.f32 %v1887, %v1959
    %v1961 = vpop.f32.mrf.mxu0
    %1962 = vdwg.mxu0
    %v1963 = vld [vmem:[#allocation3 + $0x260] sm:$0xff]
    %v1964 = vld [vmem:[#allocation3 + $0x268] sm:$0xff]
    %v1965 = vld [vmem:[#allocation3 + $0x270] sm:$0xff]
    %v1966 = vld [vmem:[#allocation3 + $0x278] sm:$0xff]
    %v1967 = vld [vmem:[#allocation3 + $0x2a8] sm:$0x1]
    %v1968 = vlaneseq
    %v1969 = vshrl.u32 %v1968, 7
    %v1970 = vsub.s32 0, %v1969
    %v1971 = vrot.slane %v1967, %v1970
    %1972 = vmatprep.subr.mxu0 0.0
    %1973 = vmatpush1.msra.mxu0 0.0
    %1974 = vmatprep.subr.mxu0 0.0
    %1975 = vmatpush1.msra.mxu0 0.0
    %1976 = vmatprep.subr.mxu0 0.0
    %1977 = vmatpush1.msra.mxu0 0.0
    %1978 = vmatprep.subr.mxu0 0.0
    %1979 = vmatpush1.msra.mxu0 0.0
    %1980 = vmatprep.subr.mxu0 0.0
    %1981 = vmatpush1.msra.mxu0 0.0
    %1982 = vmatprep.subr.mxu0 0.0
    %1983 = vmatpush1.msra.mxu0 0.0
    %1984 = vmatprep.subr.mxu0 0.0
    %1985 = vmatpush1.msra.mxu0 0.0
    %1986 = vmatprep.subr.mxu0 0.0
    %1987 = vmatpush1.msra.mxu0 0.0
    %1988 = vmatprep.subr.mxu0 0.0
    %1989 = vmatpush1.msra.mxu0 0.0
    %1990 = vmatprep.subr.mxu0 0.0
    %1991 = vmatpush1.msra.mxu0 0.0
    %1992 = vmatprep.subr.mxu0 0.0
    %1993 = vmatpush1.msra.mxu0 0.0
    %1994 = vmatprep.subr.mxu0 0.0
    %1995 = vmatpush1.msra.mxu0 0.0
    %1996 = vmatprep.subr.mxu0 0.0
    %1997 = vmatpush1.msra.mxu0 %v1966
    %1998 = vmatprep.subr.mxu0 0.0
    %1999 = vmatpush1.msra.mxu0 %v1965
    %2000 = vmatprep.subr.mxu0 0.0
    %2001 = vmatpush1.msra.mxu0 %v1964
    %2002 = vmatprep.subr.mxu0 0.0
    %2003 = vmatpush1.msra.mxu0 %v1963
    %2004 = vmatprep.subr.mxu0 0.0
    %2005 = vmatpush2.msra.mxu0 0.0
    %2006 = vmatprep.subr.mxu0 0.0
    %2007 = vmatpush2.msra.mxu0 0.0
    %2008 = vmatprep.subr.mxu0 0.0
    %2009 = vmatpush2.msra.mxu0 0.0
    %2010 = vmatprep.subr.mxu0 0.0
    %2011 = vmatpush2.msra.mxu0 0.0
    %2012 = vmatprep.subr.mxu0 0.0
    %2013 = vmatpush2.msra.mxu0 0.0
    %2014 = vmatprep.subr.mxu0 0.0
    %2015 = vmatpush2.msra.mxu0 0.0
    %2016 = vmatprep.subr.mxu0 0.0
    %2017 = vmatpush2.msra.mxu0 0.0
    %2018 = vmatprep.subr.mxu0 0.0
    %2019 = vmatpush2.msra.mxu0 0.0
    %2020 = vmatprep.subr.mxu0 0.0
    %2021 = vmatpush2.msra.mxu0 0.0
    %2022 = vmatprep.subr.mxu0 0.0
    %2023 = vmatpush2.msra.mxu0 0.0
    %2024 = vmatprep.subr.mxu0 0.0
    %2025 = vmatpush2.msra.mxu0 0.0
    %2026 = vmatprep.subr.mxu0 0.0
    %2027 = vmatpush2.msra.mxu0 0.0
    %2028 = vmatprep.subr.mxu0 0.0
    %2029 = vmatpush2.msra.mxu0 0.0
    %2030 = vmatprep.subr.mxu0 0.0
    %2031 = vmatpush2.msra.mxu0 0.0
    %2032 = vmatprep.subr.mxu0 0.0
    %2033 = vmatpush2.msra.mxu0 0.0
    %2034 = vmatprep.subr.mxu0 0.0
    %2035 = vmatpush2.msra.mxu0 0.0
    %2036 = vmatprep.mubr.f32.mxu0 0.0
    %2037 = vmatmul.mubr.f32.gmra.mxu0 %v1439
    %v2038 = vpop.f32.mrf.mxu0
    %v2039 = vadd.f32 %v1971, %v2038
    %v2040 = vpop.f32.mrf.mxu0
    %2041 = vmatprep.mubr.f32.mxu0 0.0
    %2042 = vmatmul.mubr.f32.gmra.mxu0 %v1442
    %v2043 = vpop.f32.mrf.mxu0
    %v2044 = vadd.f32 %v1971, %v2043
    %v2045 = vpop.f32.mrf.mxu0
    %2046 = vdwg.mxu0
    %v2047 = vld [vmem:[#allocation3 + $0x280] sm:$0xff]
    %v2048 = vld [vmem:[#allocation3 + $0x288] sm:$0xff]
    %v2049 = vld [vmem:[#allocation3 + $0x290] sm:$0xff]
    %v2050 = vld [vmem:[#allocation3 + $0x298] sm:$0xff]
    %v2051 = vld [vmem:[#allocation3 + $0x2b0] sm:$0x1]
    %v2052 = vlaneseq
    %v2053 = vshrl.u32 %v2052, 7
    %v2054 = vsub.s32 0, %v2053
    %v2055 = vrot.slane %v2051, %v2054
    %2056 = vmatprep.subr.mxu0 0.0
    %2057 = vmatpush1.msra.mxu0 0.0
    %2058 = vmatprep.subr.mxu0 0.0
    %2059 = vmatpush1.msra.mxu0 0.0
    %2060 = vmatprep.subr.mxu0 0.0
    %2061 = vmatpush1.msra.mxu0 0.0
    %2062 = vmatprep.subr.mxu0 0.0
    %2063 = vmatpush1.msra.mxu0 0.0
    %2064 = vmatprep.subr.mxu0 0.0
    %2065 = vmatpush1.msra.mxu0 0.0
    %2066 = vmatprep.subr.mxu0 0.0
    %2067 = vmatpush1.msra.mxu0 0.0
    %2068 = vmatprep.subr.mxu0 0.0
    %2069 = vmatpush1.msra.mxu0 0.0
    %2070 = vmatprep.subr.mxu0 0.0
    %2071 = vmatpush1.msra.mxu0 0.0
    %2072 = vmatprep.subr.mxu0 0.0
    %2073 = vmatpush1.msra.mxu0 0.0
    %2074 = vmatprep.subr.mxu0 0.0
    %2075 = vmatpush1.msra.mxu0 0.0
    %2076 = vmatprep.subr.mxu0 0.0
    %2077 = vmatpush1.msra.mxu0 0.0
    %2078 = vmatprep.subr.mxu0 0.0
    %2079 = vmatpush1.msra.mxu0 0.0
    %2080 = vmatprep.subr.mxu0 0.0
    %2081 = vmatpush1.msra.mxu0 %v2050
    %2082 = vmatprep.subr.mxu0 0.0
    %2083 = vmatpush1.msra.mxu0 %v2049
    %2084 = vmatprep.subr.mxu0 0.0
    %2085 = vmatpush1.msra.mxu0 %v2048
    %2086 = vmatprep.subr.mxu0 0.0
    %2087 = vmatpush1.msra.mxu0 %v2047
    %2088 = vmatprep.subr.mxu0 0.0
    %2089 = vmatpush2.msra.mxu0 0.0
    %2090 = vmatprep.subr.mxu0 0.0
    %2091 = vmatpush2.msra.mxu0 0.0
    %2092 = vmatprep.subr.mxu0 0.0
    %2093 = vmatpush2.msra.mxu0 0.0
    %2094 = vmatprep.subr.mxu0 0.0
    %2095 = vmatpush2.msra.mxu0 0.0
    %2096 = vmatprep.subr.mxu0 0.0
    %2097 = vmatpush2.msra.mxu0 0.0
    %2098 = vmatprep.subr.mxu0 0.0
    %2099 = vmatpush2.msra.mxu0 0.0
    %2100 = vmatprep.subr.mxu0 0.0
    %2101 = vmatpush2.msra.mxu0 0.0
    %2102 = vmatprep.subr.mxu0 0.0
    %2103 = vmatpush2.msra.mxu0 0.0
    %2104 = vmatprep.subr.mxu0 0.0
    %2105 = vmatpush2.msra.mxu0 0.0
    %2106 = vmatprep.subr.mxu0 0.0
    %2107 = vmatpush2.msra.mxu0 0.0
    %2108 = vmatprep.subr.mxu0 0.0
    %2109 = vmatpush2.msra.mxu0 0.0
    %2110 = vmatprep.subr.mxu0 0.0
    %2111 = vmatpush2.msra.mxu0 0.0
    %2112 = vmatprep.subr.mxu0 0.0
    %2113 = vmatpush2.msra.mxu0 0.0
    %2114 = vmatprep.subr.mxu0 0.0
    %2115 = vmatpush2.msra.mxu0 0.0
    %2116 = vmatprep.subr.mxu0 0.0
    %2117 = vmatpush2.msra.mxu0 0.0
    %2118 = vmatprep.subr.mxu0 0.0
    %2119 = vmatpush2.msra.mxu0 0.0
    %2120 = vmatprep.mubr.f32.mxu0 0.0
    %2121 = vmatmul.mubr.f32.gmra.mxu0 %v1439
    %v2122 = vpop.f32.mrf.mxu0
    %v2123 = vadd.f32 %v2055, %v2122
    %v2124 = vpop.f32.mrf.mxu0
    %2125 = vmatprep.mubr.f32.mxu0 0.0
    %2126 = vmatmul.mubr.f32.gmra.mxu0 %v1442
    %v2127 = vpop.f32.mrf.mxu0
    %v2128 = vadd.f32 %v2055, %v2127
    %v2129 = vpop.f32.mrf.mxu0
    %2130 = vdwg.mxu0
    %v2132 = vsel %vm336, %v1955, 0
    %v2135 = vsel %vm336, %v1960, 0
    %v2138 = vsel %vm336, %v2039, 0
    %v2141 = vsel %vm336, %v2044, 0
    %2143 = vmatprep.subr.mxu0 0.0
    %2144 = vmatpush1.xpose.msra.mxu0 0.0
    %2145 = vmatprep.subr.mxu0 0.0
    %2146 = vmatpush1.xpose.msra.mxu0 0.0
    %2147 = vmatprep.subr.mxu0 0.0
    %2148 = vmatpush1.xpose.msra.mxu0 0.0
    %2149 = vmatprep.subr.mxu0 0.0
    %2150 = vmatpush1.xpose.msra.mxu0 0.0
    %2151 = vmatprep.subr.mxu0 0.0
    %2152 = vmatpush1.xpose.msra.mxu0 0.0
    %2153 = vmatprep.subr.mxu0 0.0
    %2154 = vmatpush1.xpose.msra.mxu0 0.0
    %2155 = vmatprep.subr.mxu0 0.0
    %2156 = vmatpush1.xpose.msra.mxu0 0.0
    %2157 = vmatprep.subr.mxu0 0.0
    %2158 = vmatpush1.xpose.msra.mxu0 0.0
    %2159 = vmatprep.subr.mxu0 0.0
    %2160 = vmatpush1.xpose.msra.mxu0 0.0
    %2161 = vmatprep.subr.mxu0 0.0
    %2162 = vmatpush1.xpose.msra.mxu0 0.0
    %2163 = vmatprep.subr.mxu0 0.0
    %2164 = vmatpush1.xpose.msra.mxu0 0.0
    %2165 = vmatprep.subr.mxu0 0.0
    %2166 = vmatpush1.xpose.msra.mxu0 0.0
    %2167 = vmatprep.subr.mxu0 0.0
    %2168 = vmatpush1.xpose.msra.mxu0 0.0
    %2169 = vmatprep.subr.mxu0 0.0
    %2170 = vmatpush1.xpose.msra.mxu0 0.0
    %2171 = vmatprep.subr.mxu0 0.0
    %2172 = vmatpush1.xpose.msra.mxu0 %v2141
    %2173 = vmatprep.subr.mxu0 0.0
    %2174 = vmatpush1.xpose.msra.mxu0 %v2138
    %2175 = vmatprep.subr.mxu0 0.0
    %2176 = vmatpush2.xpose.msra.mxu0 0.0
    %2177 = vmatprep.subr.mxu0 0.0
    %2178 = vmatpush2.xpose.msra.mxu0 0.0
    %2179 = vmatprep.subr.mxu0 0.0
    %2180 = vmatpush2.xpose.msra.mxu0 0.0
    %2181 = vmatprep.subr.mxu0 0.0
    %2182 = vmatpush2.xpose.msra.mxu0 0.0
    %2183 = vmatprep.subr.mxu0 0.0
    %2184 = vmatpush2.xpose.msra.mxu0 0.0
    %2185 = vmatprep.subr.mxu0 0.0
    %2186 = vmatpush2.xpose.msra.mxu0 0.0
    %2187 = vmatprep.subr.mxu0 0.0
    %2188 = vmatpush2.xpose.msra.mxu0 0.0
    %2189 = vmatprep.subr.mxu0 0.0
    %2190 = vmatpush2.xpose.msra.mxu0 0.0
    %2191 = vmatprep.subr.mxu0 0.0
    %2192 = vmatpush2.xpose.msra.mxu0 0.0
    %2193 = vmatprep.subr.mxu0 0.0
    %2194 = vmatpush2.xpose.msra.mxu0 0.0
    %2195 = vmatprep.subr.mxu0 0.0
    %2196 = vmatpush2.xpose.msra.mxu0 0.0
    %2197 = vmatprep.subr.mxu0 0.0
    %2198 = vmatpush2.xpose.msra.mxu0 0.0
    %2199 = vmatprep.subr.mxu0 0.0
    %2200 = vmatpush2.xpose.msra.mxu0 0.0
    %2201 = vmatprep.subr.mxu0 0.0
    %2202 = vmatpush2.xpose.msra.mxu0 0.0
    %2203 = vmatprep.subr.mxu0 0.0
    %2204 = vmatpush2.xpose.msra.mxu0 0.0
    %2205 = vmatprep.subr.mxu0 0.0
    %2206 = vmatpush2.xpose.msra.mxu0 0.0
    %2207 = vmatprep.mubr.f32.mxu0 0.0
    %2208 = vmatmul.mubr.f32.gmra.mxu0 %v2132
    %v2209 = vpop.f32.mrf.mxu0
    %v2210 = vadd.f32 %v31, %v2209
    %v2211 = vpop.f32.mrf.mxu0
    %2212 = vmatprep.mubr.f32.mxu0 0.0
    %2213 = vmatmul.mubr.f32.gmra.mxu0 %v2135
    %v2214 = vpop.f32.mrf.mxu0
    %v2215 = vadd.f32 %v32, %v2214
    %v2216 = vpop.f32.mrf.mxu0
    %2217 = vdwg.mxu0
    %v2218 = vsel %vm336, %v2210, -inf
    %2219 = vmax.xlane.f32.xlu0 %v2218
    %v2220 = vpop.xlane.xlu0 %2219
    %v2221 = vsel %vm336, %v2215, -inf
    %2222 = vmax.xlane.f32.xlu0 %v2221
    %v2223 = vpop.xlane.xlu0 %2222
    %v2224 = vsub.f32 %v2210, %v2220
    %v2225 = vsub.f32 %v2215, %v2223
    %v2226 = vmul.f32 %v2224, 1.442695
    %v2227 = vpow.pop %v2226
    %v2228 = vmul.f32 %v2225, 1.442695
    %v2229 = vpow.pop %v2228
    %v2230 = vsel %vm336, %v2227, 0.0
    %2231 = vadd.xlane.f32.xlu0 %v2230
    %v2232 = vpop.xlane.xlu0 %2231
    %v2233 = vsel %vm336, %v2229, 0.0
    %2234 = vadd.xlane.f32.xlu0 %v2233
    %v2235 = vpop.xlane.xlu0 %2234
    %v2236 = vrcp.pop %v2232
    %v2237 = vmul.f32 %v2227, %v2236
    %v2238 = vrcp.pop %v2235
    %v2239 = vmul.f32 %v2229, %v2238
    %v2241 = vsel %vm336, %v2237, 0
    %v2244 = vsel %vm336, %v2239, 0
    %2246 = vmatprep.subr.mxu0 0.0
    %2247 = vmatpush1.msra.mxu0 0.0
    %2248 = vmatprep.subr.mxu0 0.0
    %2249 = vmatpush1.msra.mxu0 0.0
    %2250 = vmatprep.subr.mxu0 0.0
    %2251 = vmatpush1.msra.mxu0 0.0
    %2252 = vmatprep.subr.mxu0 0.0
    %2253 = vmatpush1.msra.mxu0 0.0
    %2254 = vmatprep.subr.mxu0 0.0
    %2255 = vmatpush1.msra.mxu0 0.0
    %2256 = vmatprep.subr.mxu0 0.0
    %2257 = vmatpush1.msra.mxu0 0.0
    %2258 = vmatprep.subr.mxu0 0.0
    %2259 = vmatpush1.msra.mxu0 0.0
    %2260 = vmatprep.subr.mxu0 0.0
    %2261 = vmatpush1.msra.mxu0 0.0
    %2262 = vmatprep.subr.mxu0 0.0
    %2263 = vmatpush1.msra.mxu0 0.0
    %2264 = vmatprep.subr.mxu0 0.0
    %2265 = vmatpush1.msra.mxu0 0.0
    %2266 = vmatprep.subr.mxu0 0.0
    %2267 = vmatpush1.msra.mxu0 0.0
    %2268 = vmatprep.subr.mxu0 0.0
    %2269 = vmatpush1.msra.mxu0 0.0
    %2270 = vmatprep.subr.mxu0 0.0
    %2271 = vmatpush1.msra.mxu0 0.0
    %2272 = vmatprep.subr.mxu0 0.0
    %2273 = vmatpush1.msra.mxu0 0.0
    %2274 = vmatprep.subr.mxu0 0.0
    %2275 = vmatpush1.msra.mxu0 %v2128
    %2276 = vmatprep.subr.mxu0 0.0
    %2277 = vmatpush1.msra.mxu0 %v2123
    %2278 = vmatprep.subr.mxu0 0.0
    %2279 = vmatpush2.msra.mxu0 0.0
    %2280 = vmatprep.subr.mxu0 0.0
    %2281 = vmatpush2.msra.mxu0 0.0
    %2282 = vmatprep.subr.mxu0 0.0
    %2283 = vmatpush2.msra.mxu0 0.0
    %2284 = vmatprep.subr.mxu0 0.0
    %2285 = vmatpush2.msra.mxu0 0.0
    %2286 = vmatprep.subr.mxu0 0.0
    %2287 = vmatpush2.msra.mxu0 0.0
    %2288 = vmatprep.subr.mxu0 0.0
    %2289 = vmatpush2.msra.mxu0 0.0
    %2290 = vmatprep.subr.mxu0 0.0
    %2291 = vmatpush2.msra.mxu0 0.0
    %2292 = vmatprep.subr.mxu0 0.0
    %2293 = vmatpush2.msra.mxu0 0.0
    %2294 = vmatprep.subr.mxu0 0.0
    %2295 = vmatpush2.msra.mxu0 0.0
    %2296 = vmatprep.subr.mxu0 0.0
    %2297 = vmatpush2.msra.mxu0 0.0
    %2298 = vmatprep.subr.mxu0 0.0
    %2299 = vmatpush2.msra.mxu0 0.0
    %2300 = vmatprep.subr.mxu0 0.0
    %2301 = vmatpush2.msra.mxu0 0.0
    %2302 = vmatprep.subr.mxu0 0.0
    %2303 = vmatpush2.msra.mxu0 0.0
    %2304 = vmatprep.subr.mxu0 0.0
    %2305 = vmatpush2.msra.mxu0 0.0
    %2306 = vmatprep.subr.mxu0 0.0
    %2307 = vmatpush2.msra.mxu0 0.0
    %2308 = vmatprep.subr.mxu0 0.0
    %2309 = vmatpush2.msra.mxu0 0.0
    %2310 = vmatprep.mubr.f32.mxu0 0.0
    %2311 = vmatmul.mubr.f32.gmra.mxu0 %v2241
    %v2312 = vpop.f32.mrf.mxu0
    %v2313 = vadd.f32 0.0, %v2312
    %v2314 = vpop.f32.mrf.mxu0
    %2315 = vmatprep.mubr.f32.mxu0 0.0
    %2316 = vmatmul.mubr.f32.gmra.mxu0 %v2244
    %v2317 = vpop.f32.mrf.mxu0
    %v2318 = vadd.f32 0.0, %v2317
    %v2319 = vpop.f32.mrf.mxu0
    %2320 = vdwg.mxu0
    %v2321 = vld [vmem:[#allocation3 + $0x2b8] sm:$0xff]
    %v2322 = vld [vmem:[#allocation3 + $0x2c0] sm:$0xff]
    %v2324 = vsel %vm336, %v2313, 0
    %v2327 = vsel %vm336, %v2318, 0
    %2329 = vmatprep.subr.mxu0 0.0
    %2330 = vmatpush1.msra.mxu0 0.0
    %2331 = vmatprep.subr.mxu0 0.0
    %2332 = vmatpush1.msra.mxu0 0.0
    %2333 = vmatprep.subr.mxu0 0.0
    %2334 = vmatpush1.msra.mxu0 0.0
    %2335 = vmatprep.subr.mxu0 0.0
    %2336 = vmatpush1.msra.mxu0 0.0
    %2337 = vmatprep.subr.mxu0 0.0
    %2338 = vmatpush1.msra.mxu0 0.0
    %2339 = vmatprep.subr.mxu0 0.0
    %2340 = vmatpush1.msra.mxu0 0.0
    %2341 = vmatprep.subr.mxu0 0.0
    %2342 = vmatpush1.msra.mxu0 0.0
    %2343 = vmatprep.subr.mxu0 0.0
    %2344 = vmatpush1.msra.mxu0 0.0
    %2345 = vmatprep.subr.mxu0 0.0
    %2346 = vmatpush1.msra.mxu0 0.0
    %2347 = vmatprep.subr.mxu0 0.0
    %2348 = vmatpush1.msra.mxu0 0.0
    %2349 = vmatprep.subr.mxu0 0.0
    %2350 = vmatpush1.msra.mxu0 0.0
    %2351 = vmatprep.subr.mxu0 0.0
    %2352 = vmatpush1.msra.mxu0 0.0
    %2353 = vmatprep.subr.mxu0 0.0
    %2354 = vmatpush1.msra.mxu0 0.0
    %2355 = vmatprep.subr.mxu0 0.0
    %2356 = vmatpush1.msra.mxu0 0.0
    %2357 = vmatprep.subr.mxu0 0.0
    %2358 = vmatpush1.msra.mxu0 %v2322
    %2359 = vmatprep.subr.mxu0 0.0
    %2360 = vmatpush1.msra.mxu0 %v2321
    %2361 = vmatprep.subr.mxu0 0.0
    %2362 = vmatpush2.msra.mxu0 0.0
    %2363 = vmatprep.subr.mxu0 0.0
    %2364 = vmatpush2.msra.mxu0 0.0
    %2365 = vmatprep.subr.mxu0 0.0
    %2366 = vmatpush2.msra.mxu0 0.0
    %2367 = vmatprep.subr.mxu0 0.0
    %2368 = vmatpush2.msra.mxu0 0.0
    %2369 = vmatprep.subr.mxu0 0.0
    %2370 = vmatpush2.msra.mxu0 0.0
    %2371 = vmatprep.subr.mxu0 0.0
    %2372 = vmatpush2.msra.mxu0 0.0
    %2373 = vmatprep.subr.mxu0 0.0
    %2374 = vmatpush2.msra.mxu0 0.0
    %2375 = vmatprep.subr.mxu0 0.0
    %2376 = vmatpush2.msra.mxu0 0.0
    %2377 = vmatprep.subr.mxu0 0.0
    %2378 = vmatpush2.msra.mxu0 0.0
    %2379 = vmatprep.subr.mxu0 0.0
    %2380 = vmatpush2.msra.mxu0 0.0
    %2381 = vmatprep.subr.mxu0 0.0
    %2382 = vmatpush2.msra.mxu0 0.0
    %2383 = vmatprep.subr.mxu0 0.0
    %2384 = vmatpush2.msra.mxu0 0.0
    %2385 = vmatprep.subr.mxu0 0.0
    %2386 = vmatpush2.msra.mxu0 0.0
    %2387 = vmatprep.subr.mxu0 0.0
    %2388 = vmatpush2.msra.mxu0 0.0
    %2389 = vmatprep.subr.mxu0 0.0
    %2390 = vmatpush2.msra.mxu0 0.0
    %2391 = vmatprep.subr.mxu0 0.0
    %2392 = vmatpush2.msra.mxu0 0.0
    %2393 = vmatprep.mubr.f32.mxu0 0.0
    %2394 = vmatmul.mubr.f32.gmra.mxu0 %v2324
    %v2395 = vpop.f32.mrf.mxu0
    %v2396 = vadd.f32 0.0, %v2395
    %v2397 = vpop.f32.mrf.mxu0
    %2398 = vmatprep.mubr.f32.mxu0 0.0
    %2399 = vmatmul.mubr.f32.gmra.mxu0 %v2327
    %v2400 = vpop.f32.mrf.mxu0
    %v2401 = vadd.f32 0.0, %v2400
    %v2402 = vpop.f32.mrf.mxu0
    %2403 = vdwg.mxu0
    %v2405 = vsel %vm336, %v1869, 0
    %v2408 = vsel %vm336, %v1874, 0
    %2410 = vmatprep.subr.mxu0 0.0
    %2411 = vmatpush1.msra.mxu0 0.0
    %2412 = vmatprep.subr.mxu0 0.0
    %2413 = vmatpush1.msra.mxu0 0.0
    %2414 = vmatprep.subr.mxu0 0.0
    %2415 = vmatpush1.msra.mxu0 0.0
    %2416 = vmatprep.subr.mxu0 0.0
    %2417 = vmatpush1.msra.mxu0 0.0
    %2418 = vmatprep.subr.mxu0 0.0
    %2419 = vmatpush1.msra.mxu0 0.0
    %2420 = vmatprep.subr.mxu0 0.0
    %2421 = vmatpush1.msra.mxu0 0.0
    %2422 = vmatprep.subr.mxu0 0.0
    %2423 = vmatpush1.msra.mxu0 0.0
    %2424 = vmatprep.subr.mxu0 0.0
    %2425 = vmatpush1.msra.mxu0 0.0
    %2426 = vmatprep.subr.mxu0 0.0
    %2427 = vmatpush1.msra.mxu0 0.0
    %2428 = vmatprep.subr.mxu0 0.0
    %2429 = vmatpush1.msra.mxu0 0.0
    %2430 = vmatprep.subr.mxu0 0.0
    %2431 = vmatpush1.msra.mxu0 0.0
    %2432 = vmatprep.subr.mxu0 0.0
    %2433 = vmatpush1.msra.mxu0 0.0
    %2434 = vmatprep.subr.mxu0 0.0
    %2435 = vmatpush1.msra.mxu0 0.0
    %2436 = vmatprep.subr.mxu0 0.0
    %2437 = vmatpush1.msra.mxu0 0.0
    %2438 = vmatprep.subr.mxu0 0.0
    %2439 = vmatpush1.msra.mxu0 %v1878
    %2440 = vmatprep.subr.mxu0 0.0
    %2441 = vmatpush1.msra.mxu0 %v1877
    %2442 = vmatprep.subr.mxu0 0.0
    %2443 = vmatpush2.msra.mxu0 0.0
    %2444 = vmatprep.subr.mxu0 0.0
    %2445 = vmatpush2.msra.mxu0 0.0
    %2446 = vmatprep.subr.mxu0 0.0
    %2447 = vmatpush2.msra.mxu0 0.0
    %2448 = vmatprep.subr.mxu0 0.0
    %2449 = vmatpush2.msra.mxu0 0.0
    %2450 = vmatprep.subr.mxu0 0.0
    %2451 = vmatpush2.msra.mxu0 0.0
    %2452 = vmatprep.subr.mxu0 0.0
    %2453 = vmatpush2.msra.mxu0 0.0
    %2454 = vmatprep.subr.mxu0 0.0
    %2455 = vmatpush2.msra.mxu0 0.0
    %2456 = vmatprep.subr.mxu0 0.0
    %2457 = vmatpush2.msra.mxu0 0.0
    %2458 = vmatprep.subr.mxu0 0.0
    %2459 = vmatpush2.msra.mxu0 0.0
    %2460 = vmatprep.subr.mxu0 0.0
    %2461 = vmatpush2.msra.mxu0 0.0
    %2462 = vmatprep.subr.mxu0 0.0
    %2463 = vmatpush2.msra.mxu0 0.0
    %2464 = vmatprep.subr.mxu0 0.0
    %2465 = vmatpush2.msra.mxu0 0.0
    %2466 = vmatprep.subr.mxu0 0.0
    %2467 = vmatpush2.msra.mxu0 0.0
    %2468 = vmatprep.subr.mxu0 0.0
    %2469 = vmatpush2.msra.mxu0 0.0
    %2470 = vmatprep.subr.mxu0 0.0
    %2471 = vmatpush2.msra.mxu0 0.0
    %2472 = vmatprep.subr.mxu0 0.0
    %2473 = vmatpush2.msra.mxu0 0.0
    %2474 = vmatprep.mubr.f32.mxu0 0.0
    %2475 = vmatmul.mubr.f32.gmra.mxu0 %v2405
    %v2476 = vpop.f32.mrf.mxu0
    %v2477 = vadd.f32 %v2396, %v2476
    %v2478 = vpop.f32.mrf.mxu0
    %2479 = vmatprep.mubr.f32.mxu0 0.0
    %2480 = vmatmul.mubr.f32.gmra.mxu0 %v2408
    %v2481 = vpop.f32.mrf.mxu0
    %v2482 = vadd.f32 %v2401, %v2481
    %v2483 = vpop.f32.mrf.mxu0
    %2484 = vdwg.mxu0
    %v2485 = vld [vmem:[#allocation3 + $0x2c8] sm:$0x1]
    %v2486 = vlaneseq
    %v2487 = vshrl.u32 %v2486, 7
    %v2488 = vsub.s32 0, %v2487
    %v2489 = vrot.slane %v2485, %v2488
    %v2490 = vadd.f32 %v2477, %v2489
    %v2491 = vadd.f32 %v2482, %v2489
    %v2492 = vadd.f32 %v1427, %v2490
    %v2493 = vadd.f32 %v1428, %v2491
    %v2494 = vld [vmem:[#allocation3 + $0x2d0] sm:$0x1]
    %v2495 = vld [vmem:[#allocation3 + $0x2d8] sm:$0x1]
    %v2496 = vsel %vm38, %v2492, 0.0
    %2497 = vadd.xlane.f32.xlu0 %v2496
    %v2498 = vpop.xlane.xlu0 %2497
    %v2499 = vsel %vm38, %v2493, 0.0
    %2500 = vadd.xlane.f32.xlu0 %v2499
    %v2501 = vpop.xlane.xlu0 %2500
    %v2502 = vmul.f32 %v2498, %v45
    %v2503 = vmul.f32 %v2501, %v45
    %v2504 = vsub.f32 %v2492, %v2502
    %v2505 = vsub.f32 %v2493, %v2503
    %v2506 = vmul.f32 %v2504, %v2504
    %v2507 = vmul.f32 %v2505, %v2505
    %v2508 = vsel %vm38, %v2506, 0.0
    %2509 = vadd.xlane.f32.xlu0 %v2508
    %v2510 = vpop.xlane.xlu0 %2509
    %v2511 = vsel %vm38, %v2507, 0.0
    %2512 = vadd.xlane.f32.xlu0 %v2511
    %v2513 = vpop.xlane.xlu0 %2512
    %v2514 = vmul.f32 %v2510, %v45
    %v2515 = vmul.f32 %v2513, %v45
    %v2516 = vadd.f32 %v2514, 1e-05
    %v2517 = vadd.f32 %v2515, 1e-05
    %v2518 = vrsqrt.pop %v2516
    %v2519 = vrsqrt.pop %v2517
    %v2520 = vmul.f32 %v2504, %v2518
    %v2521 = vmul.f32 %v2505, %v2519
    %v2522 = vlaneseq
    %v2523 = vshrl.u32 %v2522, 7
    %v2524 = vsub.s32 0, %v2523
    %v2525 = vrot.slane %v2494, %v2524
    %v2526 = vmul.f32 %v2520, %v2525
    %v2527 = vmul.f32 %v2521, %v2525
    %v2528 = vlaneseq
    %v2529 = vshrl.u32 %v2528, 7
    %v2530 = vsub.s32 0, %v2529
    %v2531 = vrot.slane %v2495, %v2530
    %v2532 = vadd.f32 %v2526, %v2531
    %v2533 = vadd.f32 %v2527, %v2531
    %v2534 = vld [vmem:[#allocation3 + $0x2e0] sm:$0xff]
    %v2535 = vld [vmem:[#allocation3 + $0x2e8] sm:$0xff]
    %v2536 = vld [vmem:[#allocation3 + $0x2f0] sm:$0xff]
    %v2537 = vld [vmem:[#allocation3 + $0x2f8] sm:$0xff]
    %v2538 = vld [vmem:[#allocation3 + $0x300] sm:$0x1]
    %v2539 = vlaneseq
    %v2540 = vshrl.u32 %v2539, 7
    %v2541 = vsub.s32 0, %v2540
    %v2542 = vrot.slane %v2538, %v2541
    %v2544 = vsel %vm38, %v2532, 0
    %v2547 = vsel %vm38, %v2533, 0
    %2549 = vmatprep.subr.mxu0 0.0
    %2550 = vmatpush1.msra.mxu0 0.0
    %2551 = vmatprep.subr.mxu0 0.0
    %2552 = vmatpush1.msra.mxu0 0.0
    %2553 = vmatprep.subr.mxu0 0.0
    %2554 = vmatpush1.msra.mxu0 0.0
    %2555 = vmatprep.subr.mxu0 0.0
    %2556 = vmatpush1.msra.mxu0 0.0
    %2557 = vmatprep.subr.mxu0 0.0
    %2558 = vmatpush1.msra.mxu0 0.0
    %2559 = vmatprep.subr.mxu0 0.0
    %2560 = vmatpush1.msra.mxu0 0.0
    %2561 = vmatprep.subr.mxu0 0.0
    %2562 = vmatpush1.msra.mxu0 0.0
    %2563 = vmatprep.subr.mxu0 0.0
    %2564 = vmatpush1.msra.mxu0 0.0
    %2565 = vmatprep.subr.mxu0 0.0
    %2566 = vmatpush1.msra.mxu0 0.0
    %2567 = vmatprep.subr.mxu0 0.0
    %2568 = vmatpush1.msra.mxu0 0.0
    %2569 = vmatprep.subr.mxu0 0.0
    %2570 = vmatpush1.msra.mxu0 0.0
    %2571 = vmatprep.subr.mxu0 0.0
    %2572 = vmatpush1.msra.mxu0 0.0
    %2573 = vmatprep.subr.mxu0 0.0
    %2574 = vmatpush1.msra.mxu0 %v2537
    %2575 = vmatprep.subr.mxu0 0.0
    %2576 = vmatpush1.msra.mxu0 %v2536
    %2577 = vmatprep.subr.mxu0 0.0
    %2578 = vmatpush1.msra.mxu0 %v2535
    %2579 = vmatprep.subr.mxu0 0.0
    %2580 = vmatpush1.msra.mxu0 %v2534
    %2581 = vmatprep.subr.mxu0 0.0
    %2582 = vmatpush2.msra.mxu0 0.0
    %2583 = vmatprep.subr.mxu0 0.0
    %2584 = vmatpush2.msra.mxu0 0.0
    %2585 = vmatprep.subr.mxu0 0.0
    %2586 = vmatpush2.msra.mxu0 0.0
    %2587 = vmatprep.subr.mxu0 0.0
    %2588 = vmatpush2.msra.mxu0 0.0
    %2589 = vmatprep.subr.mxu0 0.0
    %2590 = vmatpush2.msra.mxu0 0.0
    %2591 = vmatprep.subr.mxu0 0.0
    %2592 = vmatpush2.msra.mxu0 0.0
    %2593 = vmatprep.subr.mxu0 0.0
    %2594 = vmatpush2.msra.mxu0 0.0
    %2595 = vmatprep.subr.mxu0 0.0
    %2596 = vmatpush2.msra.mxu0 0.0
    %2597 = vmatprep.subr.mxu0 0.0
    %2598 = vmatpush2.msra.mxu0 0.0
    %2599 = vmatprep.subr.mxu0 0.0
    %2600 = vmatpush2.msra.mxu0 0.0
    %2601 = vmatprep.subr.mxu0 0.0
    %2602 = vmatpush2.msra.mxu0 0.0
    %2603 = vmatprep.subr.mxu0 0.0
    %2604 = vmatpush2.msra.mxu0 0.0
    %2605 = vmatprep.subr.mxu0 0.0
    %2606 = vmatpush2.msra.mxu0 0.0
    %2607 = vmatprep.subr.mxu0 0.0
    %2608 = vmatpush2.msra.mxu0 0.0
    %2609 = vmatprep.subr.mxu0 0.0
    %2610 = vmatpush2.msra.mxu0 0.0
    %2611 = vmatprep.subr.mxu0 0.0
    %2612 = vmatpush2.msra.mxu0 0.0
    %2613 = vmatprep.mubr.f32.mxu0 0.0
    %2614 = vmatmul.mubr.f32.gmra.mxu0 %v2544
    %v2615 = vpop.f32.mrf.mxu0
    %v2616 = vadd.f32 %v2542, %v2615
    %v2617 = vpop.f32.mrf.mxu0
    %2618 = vmatprep.mubr.f32.mxu0 0.0
    %2619 = vmatmul.mubr.f32.gmra.mxu0 %v2547
    %v2620 = vpop.f32.mrf.mxu0
    %v2621 = vadd.f32 %v2542, %v2620
    %v2622 = vpop.f32.mrf.mxu0
    %2623 = vdwg.mxu0
    %v2624 = vmul.f32 %v2616, 0.5
    %v2625 = vmul.f32 %v2621, 0.5
    %v2626 = vmul.f32 %v2616, 0.044715
    %v2627 = vmul.f32 %v2621, 0.044715
    %v2628 = vmul.f32 %v2626, %v2616
    %v2629 = vmul.f32 %v2627, %v2621
    %v2630 = vmul.f32 %v2628, %v2616
    %v2631 = vmul.f32 %v2629, %v2621
    %v2632 = vadd.f32 %v2616, %v2630
    %v2633 = vadd.f32 %v2621, %v2631
    %v2634 = vmul.f32 %v2632, 0.7978846
    %v2635 = vmul.f32 %v2633, 0.7978846
    %v2636 = vtanh.pop %v2634
    %v2637 = vtanh.pop %v2635
    %v2638 = vadd.f32 %v2636, 1.0
    %v2639 = vadd.f32 %v2637, 1.0
    %v2640 = vmul.f32 %v2624, %v2638
    %v2641 = vmul.f32 %v2625, %v2639
    %v2642 = vld [vmem:[#allocation3 + $0x308] sm:$0xff]
    %v2643 = vld [vmem:[#allocation3 + $0x310] sm:$0xff]
    %v2644 = vld [vmem:[#allocation3 + $0x318] sm:$0xff]
    %v2645 = vld [vmem:[#allocation3 + $0x320] sm:$0xff]
    %v2646 = vld [vmem:[#allocation3 + $0x328] sm:$0xff]
    %v2647 = vld [vmem:[#allocation3 + $0x330] sm:$0xff]
    %v2648 = vld [vmem:[#allocation3 + $0x338] sm:$0xff]
    %v2649 = vld [vmem:[#allocation3 + $0x340] sm:$0xff]
    %v2650 = vld [vmem:[#allocation3 + $0x348] sm:$0x1]
    %v2651 = vlaneseq
    %v2652 = vshrl.u32 %v2651, 7
    %v2653 = vsub.s32 0, %v2652
    %v2654 = vrot.slane %v2650, %v2653
    %v2656 = vsel %vm1305, %v2640, 0
    %v2659 = vsel %vm1305, %v2641, 0
    %2661 = vmatprep.subr.mxu0 0.0
    %2662 = vmatpush1.msra.mxu0 0.0
    %2663 = vmatprep.subr.mxu0 0.0
    %2664 = vmatpush1.msra.mxu0 0.0
    %2665 = vmatprep.subr.mxu0 0.0
    %2666 = vmatpush1.msra.mxu0 0.0
    %2667 = vmatprep.subr.mxu0 0.0
    %2668 = vmatpush1.msra.mxu0 0.0
    %2669 = vmatprep.subr.mxu0 0.0
    %2670 = vmatpush1.msra.mxu0 0.0
    %2671 = vmatprep.subr.mxu0 0.0
    %2672 = vmatpush1.msra.mxu0 0.0
    %2673 = vmatprep.subr.mxu0 0.0
    %2674 = vmatpush1.msra.mxu0 0.0
    %2675 = vmatprep.subr.mxu0 0.0
    %2676 = vmatpush1.msra.mxu0 0.0
    %2677 = vmatprep.subr.mxu0 0.0
    %2678 = vmatpush1.msra.mxu0 %v2649
    %2679 = vmatprep.subr.mxu0 0.0
    %2680 = vmatpush1.msra.mxu0 %v2648
    %2681 = vmatprep.subr.mxu0 0.0
    %2682 = vmatpush1.msra.mxu0 %v2647
    %2683 = vmatprep.subr.mxu0 0.0
    %2684 = vmatpush1.msra.mxu0 %v2646
    %2685 = vmatprep.subr.mxu0 0.0
    %2686 = vmatpush1.msra.mxu0 %v2645
    %2687 = vmatprep.subr.mxu0 0.0
    %2688 = vmatpush1.msra.mxu0 %v2644
    %2689 = vmatprep.subr.mxu0 0.0
    %2690 = vmatpush1.msra.mxu0 %v2643
    %2691 = vmatprep.subr.mxu0 0.0
    %2692 = vmatpush1.msra.mxu0 %v2642
    %2693 = vmatprep.subr.mxu0 0.0
    %2694 = vmatpush2.msra.mxu0 0.0
    %2695 = vmatprep.subr.mxu0 0.0
    %2696 = vmatpush2.msra.mxu0 0.0
    %2697 = vmatprep.subr.mxu0 0.0
    %2698 = vmatpush2.msra.mxu0 0.0
    %2699 = vmatprep.subr.mxu0 0.0
    %2700 = vmatpush2.msra.mxu0 0.0
    %2701 = vmatprep.subr.mxu0 0.0
    %2702 = vmatpush2.msra.mxu0 0.0
    %2703 = vmatprep.subr.mxu0 0.0
    %2704 = vmatpush2.msra.mxu0 0.0
    %2705 = vmatprep.subr.mxu0 0.0
    %2706 = vmatpush2.msra.mxu0 0.0
    %2707 = vmatprep.subr.mxu0 0.0
    %2708 = vmatpush2.msra.mxu0 0.0
    %2709 = vmatprep.subr.mxu0 0.0
    %2710 = vmatpush2.msra.mxu0 0.0
    %2711 = vmatprep.subr.mxu0 0.0
    %2712 = vmatpush2.msra.mxu0 0.0
    %2713 = vmatprep.subr.mxu0 0.0
    %2714 = vmatpush2.msra.mxu0 0.0
    %2715 = vmatprep.subr.mxu0 0.0
    %2716 = vmatpush2.msra.mxu0 0.0
    %2717 = vmatprep.subr.mxu0 0.0
    %2718 = vmatpush2.msra.mxu0 0.0
    %2719 = vmatprep.subr.mxu0 0.0
    %2720 = vmatpush2.msra.mxu0 0.0
    %2721 = vmatprep.subr.mxu0 0.0
    %2722 = vmatpush2.msra.mxu0 0.0
    %2723 = vmatprep.subr.mxu0 0.0
    %2724 = vmatpush2.msra.mxu0 0.0
    %2725 = vmatprep.mubr.f32.mxu0 0.0
    %2726 = vmatmul.mubr.f32.gmra.mxu0 %v2656
    %v2727 = vpop.f32.mrf.mxu0
    %v2728 = vadd.f32 %v2654, %v2727
    %v2729 = vpop.f32.mrf.mxu0
    %2730 = vmatprep.mubr.f32.mxu0 0.0
    %2731 = vmatmul.mubr.f32.gmra.mxu0 %v2659
    %v2732 = vpop.f32.mrf.mxu0
    %v2733 = vadd.f32 %v2654, %v2732
    %v2734 = vpop.f32.mrf.mxu0
    %2735 = vdwg.mxu0
    %v2736 = vadd.f32 %v2532, %v2728
    %v2737 = vadd.f32 %v2533, %v2733
    %v2738 = vld [vmem:[#allocation3 + $0x350] sm:$0x1]
    %v2739 = vld [vmem:[#allocation3 + $0x358] sm:$0x1]
    %v2740 = vsel %vm38, %v2736, 0.0
    %2741 = vadd.xlane.f32.xlu0 %v2740
    %v2742 = vpop.xlane.xlu0 %2741
    %v2743 = vsel %vm38, %v2737, 0.0
    %2744 = vadd.xlane.f32.xlu0 %v2743
    %v2745 = vpop.xlane.xlu0 %2744
    %v2746 = vmul.f32 %v2742, %v45
    %v2747 = vmul.f32 %v2745, %v45
    %v2748 = vsub.f32 %v2736, %v2746
    %v2749 = vsub.f32 %v2737, %v2747
    %v2750 = vmul.f32 %v2748, %v2748
    %v2751 = vmul.f32 %v2749, %v2749
    %v2752 = vsel %vm38, %v2750, 0.0
    %2753 = vadd.xlane.f32.xlu0 %v2752
    %v2754 = vpop.xlane.xlu0 %2753
    %v2755 = vsel %vm38, %v2751, 0.0
    %2756 = vadd.xlane.f32.xlu0 %v2755
    %v2757 = vpop.xlane.xlu0 %2756
    %v2758 = vmul.f32 %v2754, %v45
    %v2759 = vmul.f32 %v2757, %v45
    %v2760 = vadd.f32 %v2758, 1e-05
    %v2761 = vadd.f32 %v2759, 1e-05
    %v2762 = vrsqrt.pop %v2760
    %v2763 = vrsqrt.pop %v2761
    %v2764 = vmul.f32 %v2748, %v2762
    %v2765 = vmul.f32 %v2749, %v2763
    %v2766 = vlaneseq
    %v2767 = vshrl.u32 %v2766, 7
    %v2768 = vsub.s32 0, %v2767
    %v2769 = vrot.slane %v2738, %v2768
    %v2770 = vmul.f32 %v2764, %v2769
    %v2771 = vmul.f32 %v2765, %v2769
    %v2772 = vlaneseq
    %v2773 = vshrl.u32 %v2772, 7
    %v2774 = vsub.s32 0, %v2773
    %v2775 = vrot.slane %v2739, %v2774
    %v2776 = vadd.f32 %v2770, %v2775
    %v2777 = vadd.f32 %v2771, %v2775
    %v2779 = vsel %vm336, %v33, 0
    %v2782 = vsel %vm336, %v34, 0
    %v2785 = vsel %vm336, %v35, 0
    %2787 = vmatprep.subr.mxu0 0.0
    %2788 = vmatpush1.msra.mxu0 0.0
    %2789 = vmatprep.subr.mxu0 0.0
    %2790 = vmatpush1.msra.mxu0 0.0
    %2791 = vmatprep.subr.mxu0 0.0
    %2792 = vmatpush1.msra.mxu0 0.0
    %2793 = vmatprep.subr.mxu0 0.0
    %2794 = vmatpush1.msra.mxu0 0.0
    %2795 = vmatprep.subr.mxu0 0.0
    %2796 = vmatpush1.msra.mxu0 0.0
    %2797 = vmatprep.subr.mxu0 0.0
    %2798 = vmatpush1.msra.mxu0 0.0
    %2799 = vmatprep.subr.mxu0 0.0
    %2800 = vmatpush1.msra.mxu0 0.0
    %2801 = vmatprep.subr.mxu0 0.0
    %2802 = vmatpush1.msra.mxu0 0.0
    %2803 = vmatprep.subr.mxu0 0.0
    %2804 = vmatpush1.msra.mxu0 0.0
    %2805 = vmatprep.subr.mxu0 0.0
    %2806 = vmatpush1.msra.mxu0 0.0
    %2807 = vmatprep.subr.mxu0 0.0
    %2808 = vmatpush1.msra.mxu0 0.0
    %2809 = vmatprep.subr.mxu0 0.0
    %2810 = vmatpush1.msra.mxu0 0.0
    %2811 = vmatprep.subr.mxu0 0.0
    %2812 = vmatpush1.msra.mxu0 0.0
    %2813 = vmatprep.subr.mxu0 0.0
    %2814 = vmatpush1.msra.mxu0 0.0
    %2815 = vmatprep.subr.mxu0 0.0
    %2816 = vmatpush1.msra.mxu0 %v2777
    %2817 = vmatprep.subr.mxu0 0.0
    %2818 = vmatpush1.msra.mxu0 %v2776
    %2819 = vmatprep.subr.mxu0 0.0
    %2820 = vmatpush2.msra.mxu0 0.0
    %2821 = vmatprep.subr.mxu0 0.0
    %2822 = vmatpush2.msra.mxu0 0.0
    %2823 = vmatprep.subr.mxu0 0.0
    %2824 = vmatpush2.msra.mxu0 0.0
    %2825 = vmatprep.subr.mxu0 0.0
    %2826 = vmatpush2.msra.mxu0 0.0
    %2827 = vmatprep.subr.mxu0 0.0
    %2828 = vmatpush2.msra.mxu0 0.0
    %2829 = vmatprep.subr.mxu0 0.0
    %2830 = vmatpush2.msra.mxu0 0.0
    %2831 = vmatprep.subr.mxu0 0.0
    %2832 = vmatpush2.msra.mxu0 0.0
    %2833 = vmatprep.subr.mxu0 0.0
    %2834 = vmatpush2.msra.mxu0 0.0
    %2835 = vmatprep.subr.mxu0 0.0
    %2836 = vmatpush2.msra.mxu0 0.0
    %2837 = vmatprep.subr.mxu0 0.0
    %2838 = vmatpush2.msra.mxu0 0.0
    %2839 = vmatprep.subr.mxu0 0.0
    %2840 = vmatpush2.msra.mxu0 0.0
    %2841 = vmatprep.subr.mxu0 0.0
    %2842 = vmatpush2.msra.mxu0 0.0
    %2843 = vmatprep.subr.mxu0 0.0
    %2844 = vmatpush2.msra.mxu0 0.0
    %2845 = vmatprep.subr.mxu0 0.0
    %2846 = vmatpush2.msra.mxu0 0.0
    %2847 = vmatprep.subr.mxu0 0.0
    %2848 = vmatpush2.msra.mxu0 0.0
    %2849 = vmatprep.subr.mxu0 0.0
    %2850 = vmatpush2.msra.mxu0 0.0
    %2851 = vmatprep.mubr.f32.mxu0 0.0
    %2852 = vmatmul.mubr.f32.gmra.mxu0 %v2779
    %v2853 = vpop.f32.mrf.mxu0
    %v2854 = vadd.f32 0.0, %v2853
    %v2855 = vpop.f32.mrf.mxu0
    %2856 = vmatprep.mubr.f32.mxu0 0.0
    %2857 = vmatmul.mubr.f32.gmra.mxu0 %v2782
    %v2858 = vpop.f32.mrf.mxu0
    %v2859 = vadd.f32 0.0, %v2858
    %v2860 = vpop.f32.mrf.mxu0
    %2861 = vmatprep.mubr.f32.mxu0 0.0
    %2862 = vmatmul.mubr.f32.gmra.mxu0 %v2785
    %v2863 = vpop.f32.mrf.mxu0
    %v2864 = vadd.f32 0.0, %v2863
    %v2865 = vpop.f32.mrf.mxu0
    %2866 = vdwg.mxu0
    %v2867 = vld [vmem:[#allocation3 + $0x3a8] sm:$0xff]
    %v2868 = vld [vmem:[#allocation3 + $0x3b0] sm:$0xff]
    %v2869 = vld [vmem:[#allocation3 + $0x3b8] sm:$0xff]
    %v2870 = vld [vmem:[#allocation3 + $0x3c0] sm:$0xff]
    %v2871 = vld [vmem:[#allocation3 + $0x3c8] sm:$0x1]
    %s2872 = sld [smem:[#allocation2]]
    %p2873 = scmp.ne.s32.totalorder %s2872, 0
    // Predicated region
    $region18: #{bart_classifier_forward.1} parent=1 // pred_check
      %p2874 = pneg %p2873
    $region19: #{bart_classifier_forward.1} parent=1 // pred_check_branch
      %2876 = sbr.rel (%p2874) target = $region21
    $region20: #{bart_classifier_forward.1} parent=1 // pred_region
      %v2877 = vld [vmem:[#allocation3 + $0x360] sm:$0xff]
      %v2878 = vld [vmem:[#allocation3 + $0x368] sm:$0xff]
      %v2879 = vld [vmem:[#allocation3 + $0x370] sm:$0xff]
      %v2880 = vld [vmem:[#allocation3 + $0x378] sm:$0xff]
      %v2881 = vld [vmem:[#allocation3 + $0x380] sm:$0xff]
      %v2882 = vld [vmem:[#allocation3 + $0x388] sm:$0xff]
      %v2883 = vld [vmem:[#allocation3 + $0x390] sm:$0xff]
      %v2884 = vld [vmem:[#allocation3 + $0x398] sm:$0xff]
      %v2886 = vsel %vm38, %v2859, 0
      %2888 = vmatprep.subr.mxu0 0.0
      %2889 = vmatpush1.msra.mxu0 0.0
      %2890 = vmatprep.subr.mxu0 0.0
      %2891 = vmatpush1.msra.mxu0 0.0
      %2892 = vmatprep.subr.mxu0 0.0
      %2893 = vmatpush1.msra.mxu0 0.0
      %2894 = vmatprep.subr.mxu0 0.0
      %2895 = vmatpush1.msra.mxu0 0.0
      %2896 = vmatprep.subr.mxu0 0.0
      %2897 = vmatpush1.msra.mxu0 0.0
      %2898 = vmatprep.subr.mxu0 0.0
      %2899 = vmatpush1.msra.mxu0 0.0
      %2900 = vmatprep.subr.mxu0 0.0
      %2901 = vmatpush1.msra.mxu0 0.0
      %2902 = vmatprep.subr.mxu0 0.0
      %2903 = vmatpush1.msra.mxu0 0.0
      %2904 = vmatprep.subr.mxu0 0.0
      %2905 = vmatpush1.msra.mxu0 0.0
      %2906 = vmatprep.subr.mxu0 0.0
      %2907 = vmatpush1.msra.mxu0 0.0
      %2908 = vmatprep.subr.mxu0 0.0
      %2909 = vmatpush1.msra.mxu0 0.0
      %2910 = vmatprep.subr.mxu0 0.0
      %2911 = vmatpush1.msra.mxu0 0.0
      %2912 = vmatprep.subr.mxu0 0.0
      %2913 = vmatpush1.msra.mxu0 %v2884
      %2914 = vmatprep.subr.mxu0 0.0
      %2915 = vmatpush1.msra.mxu0 %v2883
      %2916 = vmatprep.subr.mxu0 0.0
      %2917 = vmatpush1.msra.mxu0 %v2882
      %2918 = vmatprep.subr.mxu0 0.0
      %2919 = vmatpush1.msra.mxu0 %v2881
      %2920 = vmatprep.subr.mxu0 0.0
      %2921 = vmatpush2.msra.mxu0 0.0
      %2922 = vmatprep.subr.mxu0 0.0
      %2923 = vmatpush2.msra.mxu0 0.0
      %2924 = vmatprep.subr.mxu0 0.0
      %2925 = vmatpush2.msra.mxu0 0.0
      %2926 = vmatprep.subr.mxu0 0.0
      %2927 = vmatpush2.msra.mxu0 0.0
      %2928 = vmatprep.subr.mxu0 0.0
      %2929 = vmatpush2.msra.mxu0 0.0
      %2930 = vmatprep.subr.mxu0 0.0
      %2931 = vmatpush2.msra.mxu0 0.0
      %2932 = vmatprep.subr.mxu0 0.0
      %2933 = vmatpush2.msra.mxu0 0.0
      %2934 = vmatprep.subr.mxu0 0.0
      %2935 = vmatpush2.msra.mxu0 0.0
      %2936 = vmatprep.subr.mxu0 0.0
      %2937 = vmatpush2.msra.mxu0 0.0
      %2938 = vmatprep.subr.mxu0 0.0
      %2939 = vmatpush2.msra.mxu0 0.0
      %2940 = vmatprep.subr.mxu0 0.0
      %2941 = vmatpush2.msra.mxu0 0.0
      %2942 = vmatprep.subr.mxu0 0.0
      %2943 = vmatpush2.msra.mxu0 0.0
      %2944 = vmatprep.subr.mxu0 0.0
      %2945 = vmatpush2.msra.mxu0 0.0
      %2946 = vmatprep.subr.mxu0 0.0
      %2947 = vmatpush2.msra.mxu0 0.0
      %2948 = vmatprep.subr.mxu0 0.0
      %2949 = vmatpush2.msra.mxu0 0.0
      %2950 = vmatprep.subr.mxu0 0.0
      %2951 = vmatpush2.msra.mxu0 0.0
      %2952 = vmatprep.mubr.f32.mxu0 0.0
      %2953 = vmatmul.mubr.f32.gmra.mxu0 %v2886
      %v2954 = vpop.f32.mrf.mxu0
      %v2955 = vadd.f32 0.0, %v2954
      %v2956 = vpop.f32.mrf.mxu0
      %2957 = vdwg.mxu0
      %v2959 = vsel %vm38, %v2854, 0
      %2961 = vmatprep.subr.mxu0 0.0
      %2962 = vmatpush1.msra.mxu0 0.0
      %2963 = vmatprep.subr.mxu0 0.0
      %2964 = vmatpush1.msra.mxu0 0.0
      %2965 = vmatprep.subr.mxu0 0.0
      %2966 = vmatpush1.msra.mxu0 0.0
      %2967 = vmatprep.subr.mxu0 0.0
      %2968 = vmatpush1.msra.mxu0 0.0
      %2969 = vmatprep.subr.mxu0 0.0
      %2970 = vmatpush1.msra.mxu0 0.0
      %2971 = vmatprep.subr.mxu0 0.0
      %2972 = vmatpush1.msra.mxu0 0.0
      %2973 = vmatprep.subr.mxu0 0.0
      %2974 = vmatpush1.msra.mxu0 0.0
      %2975 = vmatprep.subr.mxu0 0.0
      %2976 = vmatpush1.msra.mxu0 0.0
      %2977 = vmatprep.subr.mxu0 0.0
      %2978 = vmatpush1.msra.mxu0 0.0
      %2979 = vmatprep.subr.mxu0 0.0
      %2980 = vmatpush1.msra.mxu0 0.0
      %2981 = vmatprep.subr.mxu0 0.0
      %2982 = vmatpush1.msra.mxu0 0.0
      %2983 = vmatprep.subr.mxu0 0.0
      %2984 = vmatpush1.msra.mxu0 0.0
      %2985 = vmatprep.subr.mxu0 0.0
      %2986 = vmatpush1.msra.mxu0 %v2880
      %2987 = vmatprep.subr.mxu0 0.0
      %2988 = vmatpush1.msra.mxu0 %v2879
      %2989 = vmatprep.subr.mxu0 0.0
      %2990 = vmatpush1.msra.mxu0 %v2878
      %2991 = vmatprep.subr.mxu0 0.0
      %2992 = vmatpush1.msra.mxu0 %v2877
      %2993 = vmatprep.subr.mxu0 0.0
      %2994 = vmatpush2.msra.mxu0 0.0
      %2995 = vmatprep.subr.mxu0 0.0
      %2996 = vmatpush2.msra.mxu0 0.0
      %2997 = vmatprep.subr.mxu0 0.0
      %2998 = vmatpush2.msra.mxu0 0.0
      %2999 = vmatprep.subr.mxu0 0.0
      %3000 = vmatpush2.msra.mxu0 0.0
      %3001 = vmatprep.subr.mxu0 0.0
      %3002 = vmatpush2.msra.mxu0 0.0
      %3003 = vmatprep.subr.mxu0 0.0
      %3004 = vmatpush2.msra.mxu0 0.0
      %3005 = vmatprep.subr.mxu0 0.0
      %3006 = vmatpush2.msra.mxu0 0.0
      %3007 = vmatprep.subr.mxu0 0.0
      %3008 = vmatpush2.msra.mxu0 0.0
      %3009 = vmatprep.subr.mxu0 0.0
      %3010 = vmatpush2.msra.mxu0 0.0
      %3011 = vmatprep.subr.mxu0 0.0
      %3012 = vmatpush2.msra.mxu0 0.0
      %3013 = vmatprep.subr.mxu0 0.0
      %3014 = vmatpush2.msra.mxu0 0.0
      %3015 = vmatprep.subr.mxu0 0.0
      %3016 = vmatpush2.msra.mxu0 0.0
      %3017 = vmatprep.subr.mxu0 0.0
      %3018 = vmatpush2.msra.mxu0 0.0
      %3019 = vmatprep.subr.mxu0 0.0
      %3020 = vmatpush2.msra.mxu0 0.0
      %3021 = vmatprep.subr.mxu0 0.0
      %3022 = vmatpush2.msra.mxu0 0.0
      %3023 = vmatprep.subr.mxu0 0.0
      %3024 = vmatpush2.msra.mxu0 0.0
      %3025 = vmatprep.mubr.f32.mxu0 0.0
      %3026 = vmatmul.mubr.f32.gmra.mxu0 %v2959
      %v3027 = vpop.f32.mrf.mxu0
      %v3028 = vadd.f32 %v2955, %v3027
      %v3029 = vpop.f32.mrf.mxu0
      %3030 = vdwg.mxu0
      %v3031 = vld [vmem:[#allocation3 + $0x3a0] sm:$0x1]
      %v3032 = vlaneseq
      %v3033 = vshrl.u32 %v3032, 7
      %v3034 = vsub.s32 0, %v3033
      %v3035 = vrot.slane %v3031, %v3034
      %v3036 = vadd.f32 %v3028, %v3035
      %v3037 = vmul.f32 %v3036, 0.5
      %v3038 = vmul.f32 %v3036, 0.044715
      %v3039 = vmul.f32 %v3038, %v3036
      %v3040 = vmul.f32 %v3039, %v3036
      %v3041 = vadd.f32 %v3036, %v3040
      %v3042 = vmul.f32 %v3041, 0.7978846
      %v3043 = vtanh.pop %v3042
      %v3044 = vadd.f32 %v3043, 1.0
      %v3045 = vmul.f32 %v3037, %v3044
      %v3046 = vlaneseq
      %v3047 = vshrl.u32 %v3046, 7
      %v3048 = vsub.s32 0, %v3047
      %v3049 = vrot.slane %v2871, %v3048
      %v3051 = vsel %vm38, %v3045, 0
      %3053 = vmatprep.subr.mxu0 0.0
      %3054 = vmatpush1.msra.mxu0 0.0
      %3055 = vmatprep.subr.mxu0 0.0
      %3056 = vmatpush1.msra.mxu0 0.0
      %3057 = vmatprep.subr.mxu0 0.0
      %3058 = vmatpush1.msra.mxu0 0.0
      %3059 = vmatprep.subr.mxu0 0.0
      %3060 = vmatpush1.msra.mxu0 0.0
      %3061 = vmatprep.subr.mxu0 0.0
      %3062 = vmatpush1.msra.mxu0 0.0
      %3063 = vmatprep.subr.mxu0 0.0
      %3064 = vmatpush1.msra.mxu0 0.0
      %3065 = vmatprep.subr.mxu0 0.0
      %3066 = vmatpush1.msra.mxu0 0.0
      %3067 = vmatprep.subr.mxu0 0.0
      %3068 = vmatpush1.msra.mxu0 0.0
      %3069 = vmatprep.subr.mxu0 0.0
      %3070 = vmatpush1.msra.mxu0 0.0
      %3071 = vmatprep.subr.mxu0 0.0
      %3072 = vmatpush1.msra.mxu0 0.0
      %3073 = vmatprep.subr.mxu0 0.0
      %3074 = vmatpush1.msra.mxu0 0.0
      %3075 = vmatprep.subr.mxu0 0.0
      %3076 = vmatpush1.msra.mxu0 0.0
      %3077 = vmatprep.subr.mxu0 0.0
      %3078 = vmatpush1.msra.mxu0 %v2870
      %3079 = vmatprep.subr.mxu0 0.0
      %3080 = vmatpush1.msra.mxu0 %v2869
      %3081 = vmatprep.subr.mxu0 0.0
      %3082 = vmatpush1.msra.mxu0 %v2868
      %3083 = vmatprep.subr.mxu0 0.0
      %3084 = vmatpush1.msra.mxu0 %v2867
      %3085 = vmatprep.subr.mxu0 0.0
      %3086 = vmatpush2.msra.mxu0 0.0
      %3087 = vmatprep.subr.mxu0 0.0
      %3088 = vmatpush2.msra.mxu0 0.0
      %3089 = vmatprep.subr.mxu0 0.0
      %3090 = vmatpush2.msra.mxu0 0.0
      %3091 = vmatprep.subr.mxu0 0.0
      %3092 = vmatpush2.msra.mxu0 0.0
      %3093 = vmatprep.subr.mxu0 0.0
      %3094 = vmatpush2.msra.mxu0 0.0
      %3095 = vmatprep.subr.mxu0 0.0
      %3096 = vmatpush2.msra.mxu0 0.0
      %3097 = vmatprep.subr.mxu0 0.0
      %3098 = vmatpush2.msra.mxu0 0.0
      %3099 = vmatprep.subr.mxu0 0.0
      %3100 = vmatpush2.msra.mxu0 0.0
      %3101 = vmatprep.subr.mxu0 0.0
      %3102 = vmatpush2.msra.mxu0 0.0
      %3103 = vmatprep.subr.mxu0 0.0
      %3104 = vmatpush2.msra.mxu0 0.0
      %3105 = vmatprep.subr.mxu0 0.0
      %3106 = vmatpush2.msra.mxu0 0.0
      %3107 = vmatprep.subr.mxu0 0.0
      %3108 = vmatpush2.msra.mxu0 0.0
      %3109 = vmatprep.subr.mxu0 0.0
      %3110 = vmatpush2.msra.mxu0 0.0
      %3111 = vmatprep.subr.mxu0 0.0
      %3112 = vmatpush2.msra.mxu0 0.0
      %3113 = vmatprep.subr.mxu0 0.0
      %3114 = vmatpush2.msra.mxu0 0.0
      %3115 = vmatprep.subr.mxu0 0.0
      %3116 = vmatpush2.msra.mxu0 0.0
      %3117 = vmatprep.mubr.f32.mxu0 0.0
      %3118 = vmatmul.mubr.f32.gmra.mxu0 %v3051
      %v3119 = vpop.f32.mrf.mxu0
      %v3120 = vadd.f32 %v3049, %v3119
      %v3121 = vpop.f32.mrf.mxu0
      %3122 = vdwg.mxu0
      %3123 = vst [vmem:[%s3] sm:$0xff] %v3120
    $region21: #{bart_classifier_forward.1} parent=1 // pred_fallthru
      _
    %s3124 = sld [smem:[#allocation2]]
    %p3125 = scmp.eq.s32.totalorder %s3124, 0
    // Predicated region
    $region22: #{bart_classifier_forward.1} parent=1 // pred_check
      %p3126 = pneg %p3125
    $region23: #{bart_classifier_forward.1} parent=1 // pred_check_branch
      %3128 = sbr.rel (%p3126) target = $region25
    $region24: #{bart_classifier_forward.1} parent=1 // pred_region
      %v3129 = vlaneseq
      %v3130 = vshrl.u32 %v3129, 7
      %v3131 = vsub.s32 0, %v3130
      %v3132 = vrot.slane %v2871, %v3131
      %v3134 = vsel %vm38, %v2864, 0
      %3136 = vmatprep.subr.mxu0 0.0
      %3137 = vmatpush1.msra.mxu0 0.0
      %3138 = vmatprep.subr.mxu0 0.0
      %3139 = vmatpush1.msra.mxu0 0.0
      %3140 = vmatprep.subr.mxu0 0.0
      %3141 = vmatpush1.msra.mxu0 0.0
      %3142 = vmatprep.subr.mxu0 0.0
      %3143 = vmatpush1.msra.mxu0 0.0
      %3144 = vmatprep.subr.mxu0 0.0
      %3145 = vmatpush1.msra.mxu0 0.0
      %3146 = vmatprep.subr.mxu0 0.0
      %3147 = vmatpush1.msra.mxu0 0.0
      %3148 = vmatprep.subr.mxu0 0.0
      %3149 = vmatpush1.msra.mxu0 0.0
      %3150 = vmatprep.subr.mxu0 0.0
      %3151 = vmatpush1.msra.mxu0 0.0
      %3152 = vmatprep.subr.mxu0 0.0
      %3153 = vmatpush1.msra.mxu0 0.0
      %3154 = vmatprep.subr.mxu0 0.0
      %3155 = vmatpush1.msra.mxu0 0.0
      %3156 = vmatprep.subr.mxu0 0.0
      %3157 = vmatpush1.msra.mxu0 0.0
      %3158 = vmatprep.subr.mxu0 0.0
      %3159 = vmatpush1.msra.mxu0 0.0
      %3160 = vmatprep.subr.mxu0 0.0
      %3161 = vmatpush1.msra.mxu0 %v2870
      %3162 = vmatprep.subr.mxu0 0.0
      %3163 = vmatpush1.msra.mxu0 %v2869
      %3164 = vmatprep.subr.mxu0 0.0
      %3165 = vmatpush1.msra.mxu0 %v2868
      %3166 = vmatprep.subr.mxu0 0.0
      %3167 = vmatpush1.msra.mxu0 %v2867
      %3168 = vmatprep.subr.mxu0 0.0
      %3169 = vmatpush2.msra.mxu0 0.0
      %3170 = vmatprep.subr.mxu0 0.0
      %3171 = vmatpush2.msra.mxu0 0.0
      %3172 = vmatprep.subr.mxu0 0.0
      %3173 = vmatpush2.msra.mxu0 0.0
      %3174 = vmatprep.subr.mxu0 0.0
      %3175 = vmatpush2.msra.mxu0 0.0
      %3176 = vmatprep.subr.mxu0 0.0
      %3177 = vmatpush2.msra.mxu0 0.0
      %3178 = vmatprep.subr.mxu0 0.0
      %3179 = vmatpush2.msra.mxu0 0.0
      %3180 = vmatprep.subr.mxu0 0.0
      %3181 = vmatpush2.msra.mxu0 0.0
      %3182 = vmatprep.subr.mxu0 0.0
      %3183 = vmatpush2.msra.mxu0 0.0
      %3184 = vmatprep.subr.mxu0 0.0
      %3185 = vmatpush2.msra.mxu0 0.0
      %3186 = vmatprep.subr.mxu0 0.0
      %3187 = vmatpush2.msra.mxu0 0.0
      %3188 = vmatprep.subr.mxu0 0.0
      %3189 = vmatpush2.msra.mxu0 0.0
      %3190 = vmatprep.subr.mxu0 0.0
      %3191 = vmatpush2.msra.mxu0 0.0
      %3192 = vmatprep.subr.mxu0 0.0
      %3193 = vmatpush2.msra.mxu0 0.0
      %3194 = vmatprep.subr.mxu0 0.0
      %3195 = vmatpush2.msra.mxu0 0.0
      %3196 = vmatprep.subr.mxu0 0.0
      %3197 = vmatpush2.msra.mxu0 0.0
      %3198 = vmatprep.subr.mxu0 0.0
      %3199 = vmatpush2.msra.mxu0 0.0
      %3200 = vmatprep.mubr.f32.mxu0 0.0
      %3201 = vmatmul.mubr.f32.gmra.mxu0 %v3134
      %v3202 = vpop.f32.mrf.mxu0
      %v3203 = vadd.f32 %v3132, %v3202
      %v3204 = vpop.f32.mrf.mxu0
      %3205 = vdwg.mxu0
      %3206 = vst [vmem:[%s3] sm:$0xff] %v3203
    $region25: #{bart_classifier_forward.1} parent=1 // pred_fallthru
      _
    // Predicated region
    $region26: #{bart_classifier_forward.1} parent=1 // pred_check
      _
    $region27: #{bart_classifier_forward.1} parent=1 // pred_check_branch
      %3208 = sbr.rel (0) target = $region29
    $region28: #{bart_classifier_forward.1} parent=1 // pred_region
      _
    $region29: #{bart_classifier_forward.1} parent=1 // pred_fallthru
      _
    // Predicated region
    $region30: #{bart_classifier_forward.1} parent=1 // pred_check
      _
    $region31: #{bart_classifier_forward.1} parent=1 // pred_check_branch
      %3210 = sbr.rel (0) target = $region33
    $region32: #{bart_classifier_forward.1} parent=1 // pred_region
      _
    $region33: #{bart_classifier_forward.1} parent=1 // pred_fallthru
      _
    %3211 = vsyncpa [#allocation4], 1

</llo_original>
